<compile_context>
chip_gen: v7x
topology: tpu7x:2x2x1
jax: 0.10.0
libtpu: 0.0.40
codegen_flags: <defaults>
</compile_context>

<pallas_src>
import functools

import jax
import jax.numpy as jnp
from jax.experimental import pallas as pl
from jax.experimental.pallas import tpu as pltpu

SL_WEIGHT = 1.0     # sl_weight in the PyTorch module
L1_WEIGHT = 0.01    # l1_weight > 0 so the L1 path is exercised

LANE = 128
ACC_ROWS = 64                 # 8 accumulator vregs per split -> 8-way ILP
MIN_PALLAS_ELEMS = 256 * 1024 # below this, XLA fused abs+sum is competitive


def _l1_partial_kernel(p_ref, out_ref, *, total_rows, tile_rows, acc_rows):
    """Streaming L1 partial-sum reduction.

    grid = (n_splits, steps): axis 0 is 'parallel' (shards across TensorCores on
    multi-core chips such as v7x), axis 1 is the 'arbitrary' reduction axis.
    The (acc_rows, 128) output block for split s stays resident in VMEM across
    the whole reduction axis and is used directly as an 8-vreg accumulator, so
    the hot loop is pure VPU abs+add with 8-way ILP; the cross-lane reduce to a
    scalar happens once, outside the kernel.

    The last block may be partial in the row dimension (Pallas does NOT zero the
    out-of-bounds part of an input block), so it is masked with an iota row mask
    under pl.when.
    """
    s = pl.program_id(0)
    k = pl.program_id(1)
    steps = pl.num_programs(1)

    @pl.when(k == 0)
    def _init():
        out_ref[...] = jnp.zeros_like(out_ref)

    start_row = (s * steps + k) * tile_rows

    # Fast path: block fully inside the array (the common case).
    @pl.when(start_row + tile_rows <= total_rows)
    def _full():
        x = jnp.abs(p_ref[...].astype(jnp.float32))
        out_ref[...] += jnp.sum(x.reshape(-1, acc_rows, LANE), axis=0)

    # Cold path: ragged last block -> zero out rows beyond the valid range.
    @pl.when(start_row + tile_rows > total_rows)
    def _partial():
        x = jnp.abs(p_ref[...].astype(jnp.float32))
        row = jax.lax.broadcasted_iota(jnp.int32, (tile_rows, LANE), 0)
        valid = total_rows - start_row
        x = jnp.where(row < valid, x, 0.0)
        out_ref[...] += jnp.sum(x.reshape(-1, acc_rows, LANE), axis=0)


def _l1_sum(params_flat, *, base_tile_bytes=2 * 1024 * 1024, n_splits=1):
    """sum(|params_flat|) as float32, using a Pallas streaming reduction."""
    params_flat = params_flat.reshape(-1)
    p = params_flat.shape[0]
    itemsize = params_flat.dtype.itemsize

    # ~base_tile_bytes per block at the native dtype (f32: 4096 rows, bf16: 8192).
    tile_rows = (base_tile_bytes // (LANE * itemsize)) // ACC_ROWS * ACC_ROWS
    tile_rows = max(tile_rows, ACC_ROWS)

    # Small-parameter fast path: launch cost would dominate; XLA abs+sum wins.
    if p < max(MIN_PALLAS_ELEMS, tile_rows * LANE):
        return jnp.sum(jnp.abs(params_flat.astype(jnp.float32)))

    # Lane tail (P mod 128 elements): tiny XLA sum.  If P is a multiple of 128
    # (recommended: pad the flattened params once at setup), the 2-D view below
    # is a pure reshape and the kernel is the only HBM reader (zero extra copies).
    p128 = (p // LANE) * LANE
    tail = 0.0
    if p128 < p:
        tail = jnp.sum(jnp.abs(params_flat[p128:].astype(jnp.float32)))
        params_main = params_flat[:p128]   # one prefix copy only in the ragged case
    else:
        params_main = params_flat          # free reshape, zero-copy path

    total_rows = p128 // LANE
    params2d = params_main.reshape(total_rows, LANE)   # native dtype, lane-dense

    blocks_total = pl.cdiv(total_rows, tile_rows)
    # Only split when blocks divide evenly (avoids fully-OOB blocks); n_splits=1
    # on single-TC chips (v5e/v6e), 2 on v7x to use both TensorCores.
    n_splits_eff = n_splits if (n_splits > 1 and blocks_total % n_splits == 0) else 1
    steps = blocks_total // n_splits_eff

    kernel = functools.partial(_l1_partial_kernel, total_rows=total_rows,
                               tile_rows=tile_rows, acc_rows=ACC_ROWS)

    partials = pl.pallas_call(
        kernel,
        out_shape=jax.ShapeDtypeStruct((n_splits_eff * ACC_ROWS, LANE), jnp.float32),
        grid_spec=pltpu.PrefetchScalarGridSpec(
            num_scalar_prefetch=0,
            grid=(n_splits_eff, steps),
            in_specs=[pl.BlockSpec((tile_rows, LANE),
                                   lambda s, k: (s * steps + k, 0))],
            out_specs=pl.BlockSpec((ACC_ROWS, LANE), lambda s, k: (s, 0)),
        ),
        compiler_params=pltpu.CompilerParams(
            dimension_semantics=("parallel", "arbitrary"),
            vmem_limit_bytes=32 * 1024 * 1024,
        ),
        cost_estimate=pl.CostEstimate(
            flops=2 * p128,
            transcendentals=0,
            bytes_accessed=p128 * itemsize + n_splits_eff * ACC_ROWS * LANE * 4,
        ),
    )(params2d)

    return jnp.sum(partials) + tail


def structured_loss_with_turner(pred, ref, ref2, lengths, params_flat, *,
                                sl_weight=SL_WEIGHT, l1_weight=L1_WEIGHT,
                                base_tile_bytes=2 * 1024 * 1024, n_splits=1):
    """Forward pass of StructuredLossWithTurner.

    pred / ref / ref2: [B] folding scores (outputs of the external Zuker DPs)
    lengths:           [B] sequence lengths
    params_flat:       [P] all model parameters, flattened & concatenated
                       (any float dtype; streamed at native dtype).
    """
    pred = pred.astype(jnp.float32)
    ref = ref.astype(jnp.float32)
    ref2 = ref2.astype(jnp.float32)
    l = lengths.astype(jnp.float32)

    diff = ref - ref2
    # Single division: (pred - ref)/l + sl*(ref-ref2)^2/l == (pred-ref+sl*d^2)/l
    loss = (pred - ref + sl_weight * diff * diff) / l

    if l1_weight > 0.0:
        loss = loss + l1_weight * _l1_sum(params_flat,
                                          base_tile_bytes=base_tile_bytes,
                                          n_splits=n_splits)
    return loss


def _reference_loss(pred, ref, ref2, lengths, params_flat,
                    sl_weight=SL_WEIGHT, l1_weight=L1_WEIGHT):
    """Plain-JAX mirror of the PyTorch module's forward."""
    l = lengths.astype(jnp.float32)
    pred = pred.astype(jnp.float32)
    ref = ref.astype(jnp.float32)
    ref2 = ref2.astype(jnp.float32)
    loss = (pred - ref) / l + sl_weight * (ref - ref2) ** 2 / l
    if l1_weight > 0.0:
        loss = loss + l1_weight * jnp.sum(jnp.abs(params_flat.astype(jnp.float32)))
    return loss


if __name__ == "__main__":
    key = jax.random.PRNGKey(0)
    k1, k2, k3, k4 = jax.random.split(key, 4)

    B = 2   # batch of sequences

    # Stand-ins for the scalar folding scores produced by self.model / turner.
    pred = jax.random.normal(k1, (B,), dtype=jnp.float32) * 10.0
    ref = pred - jnp.abs(jax.random.normal(k2, (B,), dtype=jnp.float32)) * 5.0
    ref2 = ref + jax.random.normal(k3, (B,), dtype=jnp.float32) * 2.0
    lengths = jnp.array([16.0, 12.0], dtype=jnp.float32)   # len(s) per sequence

    # --- f32 parameters: multiple of 128 (zero-copy reshape) but ragged rows ---
    # (exercises in-kernel last-block row masking + the 2-way split path)
    P1 = 3 * 4096 * 128 + 9 * 128
    params_f32 = jax.random.normal(k4, (P1,), dtype=jnp.float32) * 0.05

    loss = structured_loss_with_turner(pred, ref, ref2, lengths, params_f32,
                                       n_splits=2)
    loss = jax.block_until_ready(loss)
    expected = _reference_loss(pred, ref, ref2, lengths, params_f32)
    assert jnp.allclose(loss, expected, rtol=1e-4, atol=1e-3), (loss, expected)

    # --- bf16 parameters, fully ragged P (row tail + lane tail), n_splits=1 ---
    P2 = 2 * 8192 * 128 + 12345
    params_bf16 = (jax.random.normal(jax.random.PRNGKey(1), (P2,),
                                     dtype=jnp.float32) * 0.05).astype(jnp.bfloat16)
    loss_bf = structured_loss_with_turner(pred, ref, ref2, lengths, params_bf16)
    loss_bf = jax.block_until_ready(loss_bf)
    expected_bf = _reference_loss(pred, ref, ref2, lengths, params_bf16)
    assert jnp.allclose(loss_bf, expected_bf, rtol=1e-4, atol=1e-3), (loss_bf, expected_bf)

    # --- small-P fast path (skips the Pallas kernel entirely) ---
    params_small = params_f32[:1000]
    loss_sm = structured_loss_with_turner(pred, ref, ref2, lengths, params_small)
    loss_sm = jax.block_until_ready(loss_sm)
    expected_sm = _reference_loss(pred, ref, ref2, lengths, params_small)
    assert jnp.allclose(loss_sm, expected_sm, rtol=1e-4, atol=1e-3), (loss_sm, expected_sm)

    print("KERNEL_OK")
</pallas_src>

<mosaic_0001>
module attributes {stable_mosaic.version = 11 : i64} {
  func.func @_l1_partial_kernel(%arg0: i32, %arg1: i32, %arg2: memref<4096x128xf32, #tpu.memory_space<vmem>>, %arg3: memref<64x128xf32, #tpu.memory_space<vmem>>) attributes {dimension_semantics = [#tpu.dimension_semantics<parallel>, #tpu.dimension_semantics<arbitrary>], iteration_bounds = array<i64: 2, 2>, scalar_prefetch = 0 : i64, scratch_operands = 0 : i64, tpu.core_type = #tpu.core_type<tc>, window_params = [{transform_indices = @transform_0, window_bounds = array<i64: 4096, 128>}, {transform_indices = @transform_1, window_bounds = array<i64: 64, 128>}]} {
    %c0_i32 = arith.constant 0 : i32
    %0 = arith.cmpi eq, %arg1, %c0_i32 : i32
    %1 = arith.extui %0 : i1 to i32
    %c0_i32_0 = arith.constant 0 : i32
    %2 = arith.cmpi ne, %1, %c0_i32_0 : i32
    scf.if %2 {
      %cst = arith.constant 0.000000e+00 : f32
      %14 = vector.broadcast %cst : f32 to vector<64x128xf32>
      %c0 = arith.constant 0 : index
      %c0_6 = arith.constant 0 : index
      %15 = vector.load %arg3[%c0, %c0_6] : memref<64x128xf32, #tpu.memory_space<vmem>>, vector<64x128xf32>
      tpu.vector_store %arg3[%c0, %c0_6], %14 {strides = array<i32>} : memref<64x128xf32, #tpu.memory_space<vmem>>, vector<64x128xf32>,
    } else {
    }
    %c2_i32 = arith.constant 2 : i32
    %3 = arith.muli %arg0, %c2_i32 : i32
    %4 = arith.addi %3, %arg1 : i32
    %c4096_i32 = arith.constant 4096 : i32
    %5 = arith.muli %4, %c4096_i32 : i32
    %c4096_i32_1 = arith.constant 4096 : i32
    %6 = arith.addi %5, %c4096_i32_1 : i32
    %c12297_i32 = arith.constant 12297 : i32
    %7 = arith.cmpi sle, %6, %c12297_i32 : i32
    %8 = arith.extui %7 : i1 to i32
    %c0_i32_2 = arith.constant 0 : i32
    %9 = arith.cmpi ne, %8, %c0_i32_2 : i32
    scf.if %9 {
      %c0 = arith.constant 0 : index
      %c0_6 = arith.constant 0 : index
      %14 = vector.load %arg2[%c0, %c0_6] : memref<4096x128xf32, #tpu.memory_space<vmem>>, vector<4096x128xf32>
      %15 = math.absf %14 : vector<4096x128xf32>
      %c0_7 = arith.constant 0 : index
      %c0_8 = arith.constant 0 : index
      %16 = vector.load %arg3[%c0_7, %c0_8] : memref<64x128xf32, #tpu.memory_space<vmem>>, vector<64x128xf32>
      %17 = vector.shape_cast %15 : vector<4096x128xf32> to vector<64x64x128xf32>
      %cst = arith.constant dense<0.000000e+00> : vector<64x128xf32>
      %18 = vector.multi_reduction <add>, %17, %cst [0] : vector<64x64x128xf32> to vector<64x128xf32>
      %19 = arith.addf %16, %18 : vector<64x128xf32>
      %c0_9 = arith.constant 0 : index
      %c0_10 = arith.constant 0 : index
      %20 = vector.load %arg3[%c0_9, %c0_10] : memref<64x128xf32, #tpu.memory_space<vmem>>, vector<64x128xf32>
      tpu.vector_store %arg3[%c0_9, %c0_10], %19 {strides = array<i32>} : memref<64x128xf32, #tpu.memory_space<vmem>>, vector<64x128xf32>,
    } else {
    }
    %c4096_i32_3 = arith.constant 4096 : i32
    %10 = arith.addi %5, %c4096_i32_3 : i32
    %c12297_i32_4 = arith.constant 12297 : i32
    %11 = arith.cmpi sgt, %10, %c12297_i32_4 : i32
    %12 = arith.extui %11 : i1 to i32
    %c0_i32_5 = arith.constant 0 : i32
    %13 = arith.cmpi ne, %12, %c0_i32_5 : i32
    scf.if %13 {
      %c0 = arith.constant 0 : index
      %c0_6 = arith.constant 0 : index
      %14 = vector.load %arg2[%c0, %c0_6] : memref<4096x128xf32, #tpu.memory_space<vmem>>, vector<4096x128xf32>
      %15 = math.absf %14 : vector<4096x128xf32>
      %16 = tpu.iota {dimensions = array<i32: 0>} : vector<4096x128xi32>
      %c12297_i32_7 = arith.constant 12297 : i32
      %17 = arith.subi %c12297_i32_7, %5 : i32
      %18 = vector.broadcast %17 : i32 to vector<4096x128xi32>
      %19 = arith.cmpi slt, %16, %18 : vector<4096x128xi32>
      %cst = arith.constant 0.000000e+00 : f32
      %20 = vector.broadcast %cst : f32 to vector<4096x128xf32>
      %21 = arith.select %19, %15, %20 : vector<4096x128xi1>, vector<4096x128xf32>
      %c0_8 = arith.constant 0 : index
      %c0_9 = arith.constant 0 : index
      %22 = vector.load %arg3[%c0_8, %c0_9] : memref<64x128xf32, #tpu.memory_space<vmem>>, vector<64x128xf32>
      %23 = vector.shape_cast %21 : vector<4096x128xf32> to vector<64x64x128xf32>
      %cst_10 = arith.constant dense<0.000000e+00> : vector<64x128xf32>
      %24 = vector.multi_reduction <add>, %23, %cst_10 [0] : vector<64x64x128xf32> to vector<64x128xf32>
      %25 = arith.addf %22, %24 : vector<64x128xf32>
      %c0_11 = arith.constant 0 : index
      %c0_12 = arith.constant 0 : index
      %26 = vector.load %arg3[%c0_11, %c0_12] : memref<64x128xf32, #tpu.memory_space<vmem>>, vector<64x128xf32>
      tpu.vector_store %arg3[%c0_11, %c0_12], %25 {strides = array<i32>} : memref<64x128xf32, #tpu.memory_space<vmem>>, vector<64x128xf32>,
    } else {
    }
    return
  }
  func.func @transform_0(%arg0: i32, %arg1: i32) -> (i32, i32) {
    %c2_i32 = arith.constant 2 : i32
    %0 = arith.muli %arg0, %c2_i32 : i32
    %1 = arith.addi %0, %arg1 : i32
    %c0_i32 = arith.constant 0 : i32
    %c0_i32_0 = arith.constant 0 : i32
    return %1, %c0_i32 : i32, i32
  }
  func.func @transform_1(%arg0: i32, %arg1: i32) -> (i32, i32) {
    %c0_i32 = arith.constant 0 : i32
    %c0_i32_0 = arith.constant 0 : i32
    return %arg0, %c0_i32 : i32, i32
  }
}

</mosaic_0001>

<llo_original>
// kernel: tpu_custom_call.1
$region0: #{tpu_custom_call.1}
  #allocation0 [shape = 'u32[]', space=smem, size = 0x4, offset = 0x4, fixed_abs, tag = 'smem constant byte address 0x4 - core index']
  #allocation1 [shape = 'u32[144,128]{1,0:T(1,128)}', space=vmem, size = 0x12000, scoped, tag = 'internal scratch']
  %s0 = inlined_call_operand.hbm [shape: f32[12297,128], index: 0, kind: input, shape index: {}]
  %s1 = inlined_call_operand.hbm [shape: f32[128,128], index: 1, kind: output, shape index: {}]
  %s2 = sld [smem:[#allocation0]]
  $region53: #{tpu_custom_call.1} parent=0
    _
  %s4 = ssub.s32 1, %s2
  %s5 = scalar_select 0, %s4, %s2
  $region1: #{tpu_custom_call.1} parent=0
    #allocation2 [shape = 'u8[4194304]{0}', space=vmem, size = 0x400000, scoped, tag = 'input window, operand 0']
    #allocation3 [shape = 's32[2]{0}', space=sflag, size = 0x8, scoped, tag = 'scoped memory for tpu_custom_call.1']
    #allocation4 [shape = 's32[2]{0}', space=sflag, size = 0x8, scoped, tag = 'scoped memory for tpu_custom_call.1']
    #allocation5 [shape = 'u8[65536]{0}', space=vmem, size = 0x10000, scoped, tag = 'output window, operand 0']
    %6 = vsyncpa [#allocation3], 0
    %s7 = scalar_lea.sflag [#allocation3], 1
    %8 = vsyncpa %s7, 0
    %9 = vsyncpa [#allocation4], 0
    %s10 = scalar_lea.sflag [#allocation4], 1
    %11 = vsyncpa %s10, 0
    loop: start=0, step=1, limit=6
    $region2: #{tpu_custom_call.1} parent=1 // loop_pre_header
      _
    $region3: #{tpu_custom_call.1} parent=1 // loop_header
      %s13 = sphi 0, %s17
      %p14 = scmp.ge.s32.totalorder %s13, 6
      %s20 = sphi 0, %s32
      %s21 = sphi 0, %s28
      %s22 = sphi 0, %s20
      %s23 = sphi 0, %s21
      %s24 = sphi 0, %s22
      %s25 = sphi 0, %s23
      %s39 = sphi 0, %s41
      %s42 = sphi 0, %s39
      %s43 = sphi 0, %s42
      %s59 = sphi 0, %s43
      %s65 = sphi 0, %s67
      %s68 = sphi 0, %s65
      %s69 = sphi 0, %s68
      %s85 = sphi 0, %s69
    $region4: #{tpu_custom_call.1} parent=1 // loop_header_branch
      %16 = sbr.rel (%p14) target = $region8
    $region5: #{tpu_custom_call.1} parent=1 // loop_body
      %s18 = ssub.s32 %s13, 1
      %s19 = ssub.s32 %s13, 2
      %s26 = sadd.s32 1, %s21
      %p27 = scmp.ge.s32.totalorder %s26, 2
      %s28 = scalar_select %p27, 0, %s26
      %s29 = sadd.s32 1, %s20
      %s30 = scalar_select %p27, %s29, %s20
      %p31 = scmp.ge.s32.totalorder %s30, 2
      %s32 = scalar_select %p31, 0, %s30
      %s33 = smul.u32 %s20, 2
      %s34 = sadd.s32 %s33, %s21
      %s35 = smul.u32 %s32, 2
      %s36 = sadd.s32 %s35, %s28
      %s37 = ssub.s32 %s34, %s36
      %p38 = scmp.eq.s32.totalorder %s37, 0
      %s40 = sadd.s32 %s39, 1
      %s41 = scalar_select %p38, %s39, %s40
      %p44 = pneg %p38
      %p45 = scmp.eq.s32.totalorder %s13, 3
      %p46 = por %p44, %p45
      %p47 = scmp.ne.s32.totalorder %s39, %s42
      %p48 = scmp.eq.s32.totalorder %s13, 0
      %p49 = por %p47, %p48
      %p50 = scmp.ne.s32.totalorder %s39, %s42
      %p51 = scmp.eq.s32.totalorder %s18, 3
      %p52 = por %p50, %p51
      %p53 = scmp.ne.s32.totalorder %s42, %s43
      %p54 = scmp.eq.s32.totalorder %s18, 0
      %p55 = por %p53, %p54
      %p56 = scmp.ne.s32.totalorder %s42, %s43
      %p57 = scmp.eq.s32.totalorder %s19, 3
      %p58 = por %p56, %p57
      %p60 = scmp.ne.s32.totalorder %s43, %s59
      %p61 = scmp.eq.s32.totalorder %s19, 0
      %p62 = por %p60, %p61
      %s63 = ssub.s32 %s20, %s32
      %p64 = scmp.eq.s32.totalorder %s63, 0
      %s66 = sadd.s32 %s65, 1
      %s67 = scalar_select %p64, %s65, %s66
      %p70 = pneg %p64
      %p71 = scmp.eq.s32.totalorder %s13, 3
      %p72 = por %p70, %p71
      %p73 = scmp.ne.s32.totalorder %s65, %s68
      %p74 = scmp.eq.s32.totalorder %s13, 0
      %p75 = por %p73, %p74
      %p76 = scmp.ne.s32.totalorder %s65, %s68
      %p77 = scmp.eq.s32.totalorder %s18, 3
      %p78 = por %p76, %p77
      %p79 = scmp.ne.s32.totalorder %s68, %s69
      %p80 = scmp.eq.s32.totalorder %s18, 0
      %p81 = por %p79, %p80
      %p82 = scmp.ne.s32.totalorder %s68, %s69
      %p83 = scmp.eq.s32.totalorder %s19, 3
      %p84 = por %p82, %p83
      %p86 = scmp.ne.s32.totalorder %s69, %s85
      %p87 = scmp.eq.s32.totalorder %s19, 0
      %p88 = por %p86, %p87
      %p89 = scmp.le.s32.totalorder 1, %s13
      %p90 = scmp.lt.s32.totalorder %s13, 5
      %p91 = pnand %p89, %p90
      %p92 = pneg %p91
      // Predicated region
      $region9: #{tpu_custom_call.1} parent=5 // pred_check
        _
      $region10: #{tpu_custom_call.1} parent=5 // pred_check_branch
        %94 = sbr.rel (%p91) target = $region12
      $region11: #{tpu_custom_call.1} parent=5 // pred_region
        %s95 = ssub.s32 %s13, 1
      $region12: #{tpu_custom_call.1} parent=5 // pred_fallthru
        _
      %p96 = scmp.lt.s32.totalorder %s13, 4
      // Predicated region
      $region13: #{tpu_custom_call.1} parent=5 // pred_check
        %p97 = pneg %p96
      $region14: #{tpu_custom_call.1} parent=5 // pred_check_branch
        %99 = sbr.rel (%p97) target = $region16
      $region15: #{tpu_custom_call.1} parent=5 // pred_region
        // Predicated region
        $region17: #{tpu_custom_call.1} parent=15 // pred_check
          %p100 = pneg %p49
        $region18: #{tpu_custom_call.1} parent=15 // pred_check_branch
          %102 = sbr.rel (%p100) target = $region20
        $region19: #{tpu_custom_call.1} parent=15 // pred_region
          %s103 = sand.u32 %s39, 1
          %s104 = scalar_lea.sflag [#allocation3], %s103
          %s105 = sand.u32 %s39, 1
          %s106 = smul.addr %s105, 4096
          %s107 = scalar_lea.vmem [#allocation2], %s106
          %s108 = smul.u32 %s20, 2
          %s109 = sadd.s32 %s108, %s21
          %s110 = smul.u32 512, %s109
          %s111 = ssub.s32 1538, %s110
          %p112 = scmp.lt.s32.totalorder %s111, 512
          %s113 = scalar_select %p112, %s111, 512
          %s114 = smul.u32 128, %s113
          %s116 = ssub.s32 65536, %s114
          %117 = vsyncadd %s104, %s116
          %p118 = scmp.ne.s32.totalorder 0, %s114
          %s119 = smul.addr %s110, 128
          %s120 = scalar_lea.hbm %s0, %s119
          %s121 = smul.u32 8, %s113
          %s122 = sshll.u32 %s107, 4
          %s123 = int_to_ptr.vmem [resolvable:$true] %s122
          %s124 = sshll.u32 %s121, 4
          %128 = dma.hbm_to_vmem [thread:$0]  (%p118), %s120, %s124, %s123, %s104, 128, 128, 8
        $region20: #{tpu_custom_call.1} parent=15 // pred_fallthru
          _
      $region16: #{tpu_custom_call.1} parent=5 // pred_fallthru
        _
      %p129 = scmp.le.s32.totalorder 1, %s13
      %p130 = scmp.lt.s32.totalorder %s13, 5
      %p131 = pnand %p129, %p130
      %p132 = pneg %p131
      // Predicated region
      $region21: #{tpu_custom_call.1} parent=5 // pred_check
        _
      $region22: #{tpu_custom_call.1} parent=5 // pred_check_branch
        %134 = sbr.rel (%p131) target = $region24
      $region23: #{tpu_custom_call.1} parent=5 // pred_region
        %s135 = ssub.s32 %s13, 1
        %s136 = sand.u32 %s42, 1
        %s137 = scalar_lea.sflag [#allocation3], %s136
        %s138 = sand.u32 %s42, 1
        %s139 = smul.addr %s138, 4096
        %s140 = scalar_lea.vmem [#allocation2], %s139
        // Predicated region
        $region25: #{tpu_custom_call.1} parent=23 // pred_check
          %p141 = pneg %p55
        $region26: #{tpu_custom_call.1} parent=23 // pred_check_branch
          %143 = sbr.rel (%p141) target = $region28
        $region27: #{tpu_custom_call.1} parent=23 // pred_region
          %144 = dma.done %s137, 65536
        $region28: #{tpu_custom_call.1} parent=23 // pred_fallthru
          _
        %s145 = sand.u32 %s42, 1
        %s146 = scalar_lea.sflag [#allocation3], %s145
        %s147 = sand.u32 %s42, 1
        %s148 = smul.addr %s147, 4096
        %s149 = scalar_lea.vmem [#allocation2], %s148
        %p150 = pneg %p55
        %p151 = pneg %p52
        %p152 = pneg %p81
        %p153 = pneg %p78
        %s154 = sand.u32 %s68, 1
        %s155 = scalar_lea.sflag [#allocation4], %s154
        %s156 = sand.u32 %s68, 1
        %s157 = smul.addr %s156, 64
        %s158 = scalar_lea.vmem [#allocation5], %s157
        %s159 = smul.u32 %s22, 2
        %s160 = sadd.s32 %s159, %s23
        %s161 = smul.u32 512, %s160
        %s162 = ssub.s32 1538, %s161
        %p163 = scmp.lt.s32.totalorder %s162, 512
        %s164 = scalar_select %p163, %s162, 512
        %s165 = smul.u32 128, %s164
        %s166 = smul.u32 8, %s22
        %p167 = scmp.eq.s32.totalorder %s23, 0
        // Predicated region
        $region29: #{tpu_custom_call.1} parent=23 // pred_check
          %p168 = pneg %p167
        $region30: #{tpu_custom_call.1} parent=23 // pred_check_branch
          %170 = sbr.rel (%p168) target = $region32
        $region31: #{tpu_custom_call.1} parent=23 // pred_region
          %171 = vst [vmem:[%s158] sm:$0xff] 0.0
          %172 = vst [vmem:[%s158 + $0x8] sm:$0xff] 0.0
          %173 = vst [vmem:[%s158 + $0x10] sm:$0xff] 0.0
          %174 = vst [vmem:[%s158 + $0x18] sm:$0xff] 0.0
          %175 = vst [vmem:[%s158 + $0x20] sm:$0xff] 0.0
          %176 = vst [vmem:[%s158 + $0x28] sm:$0xff] 0.0
          %177 = vst [vmem:[%s158 + $0x30] sm:$0xff] 0.0
          %178 = vst [vmem:[%s158 + $0x38] sm:$0xff] 0.0
        $region32: #{tpu_custom_call.1} parent=23 // pred_fallthru
          _
        %s179 = smul.u32 %s22, 2
        %s180 = sadd.s32 %s179, %s23
        %s181 = smul.u32 %s180, 4096
        %s182 = sadd.s32 %s181, 4096
        %p183 = scmp.le.s32.totalorder %s182, 12297
        // Predicated region
        $region33: #{tpu_custom_call.1} parent=23 // pred_check
          %p184 = pneg %p183
        $region34: #{tpu_custom_call.1} parent=23 // pred_check_branch
          %186 = sbr.rel (%p184) target = $region36
        $region35: #{tpu_custom_call.1} parent=23 // pred_region
          %v187 = vld [vmem:[%s140] sm:$0xff]
          %v188 = vld [vmem:[%s140 + $0x8] sm:$0xff]
          %v189 = vld [vmem:[%s140 + $0x10] sm:$0xff]
          %v190 = vld [vmem:[%s140 + $0x18] sm:$0xff]
          %v191 = vld [vmem:[%s140 + $0x20] sm:$0xff]
          %v192 = vld [vmem:[%s140 + $0x28] sm:$0xff]
          %v193 = vld [vmem:[%s140 + $0x30] sm:$0xff]
          %v194 = vld [vmem:[%s140 + $0x38] sm:$0xff]
          %v195 = vld [vmem:[%s140 + $0x40] sm:$0xff]
          %v196 = vld [vmem:[%s140 + $0x48] sm:$0xff]
          %v197 = vld [vmem:[%s140 + $0x50] sm:$0xff]
          %v198 = vld [vmem:[%s140 + $0x58] sm:$0xff]
          %v199 = vld [vmem:[%s140 + $0x60] sm:$0xff]
          %v200 = vld [vmem:[%s140 + $0x68] sm:$0xff]
          %v201 = vld [vmem:[%s140 + $0x70] sm:$0xff]
          %v202 = vld [vmem:[%s140 + $0x78] sm:$0xff]
          %v203 = vld [vmem:[%s140 + $0x80] sm:$0xff]
          %v204 = vld [vmem:[%s140 + $0x88] sm:$0xff]
          %v205 = vld [vmem:[%s140 + $0x90] sm:$0xff]
          %v206 = vld [vmem:[%s140 + $0x98] sm:$0xff]
          %v207 = vld [vmem:[%s140 + $0xa0] sm:$0xff]
          %v208 = vld [vmem:[%s140 + $0xa8] sm:$0xff]
          %v209 = vld [vmem:[%s140 + $0xb0] sm:$0xff]
          %v210 = vld [vmem:[%s140 + $0xb8] sm:$0xff]
          %v211 = vld [vmem:[%s140 + $0xc0] sm:$0xff]
          %v212 = vld [vmem:[%s140 + $0xc8] sm:$0xff]
          %v213 = vld [vmem:[%s140 + $0xd0] sm:$0xff]
          %v214 = vld [vmem:[%s140 + $0xd8] sm:$0xff]
          %v215 = vld [vmem:[%s140 + $0xe0] sm:$0xff]
          %v216 = vld [vmem:[%s140 + $0xe8] sm:$0xff]
          %v217 = vld [vmem:[%s140 + $0xf0] sm:$0xff]
          %v218 = vld [vmem:[%s140 + $0xf8] sm:$0xff]
          %v219 = vld [vmem:[%s140 + $0x100] sm:$0xff]
          %v220 = vld [vmem:[%s140 + $0x108] sm:$0xff]
          %v221 = vld [vmem:[%s140 + $0x110] sm:$0xff]
          %v222 = vld [vmem:[%s140 + $0x118] sm:$0xff]
          %v223 = vld [vmem:[%s140 + $0x120] sm:$0xff]
          %v224 = vld [vmem:[%s140 + $0x128] sm:$0xff]
          %v225 = vld [vmem:[%s140 + $0x130] sm:$0xff]
          %v226 = vld [vmem:[%s140 + $0x138] sm:$0xff]
          %v227 = vld [vmem:[%s140 + $0x140] sm:$0xff]
          %v228 = vld [vmem:[%s140 + $0x148] sm:$0xff]
          %v229 = vld [vmem:[%s140 + $0x150] sm:$0xff]
          %v230 = vld [vmem:[%s140 + $0x158] sm:$0xff]
          %v231 = vld [vmem:[%s140 + $0x160] sm:$0xff]
          %v232 = vld [vmem:[%s140 + $0x168] sm:$0xff]
          %v233 = vld [vmem:[%s140 + $0x170] sm:$0xff]
          %v234 = vld [vmem:[%s140 + $0x178] sm:$0xff]
          %v235 = vld [vmem:[%s140 + $0x180] sm:$0xff]
          %v236 = vld [vmem:[%s140 + $0x188] sm:$0xff]
          %v237 = vld [vmem:[%s140 + $0x190] sm:$0xff]
          %v238 = vld [vmem:[%s140 + $0x198] sm:$0xff]
          %v239 = vld [vmem:[%s140 + $0x1a0] sm:$0xff]
          %v240 = vld [vmem:[%s140 + $0x1a8] sm:$0xff]
          %v241 = vld [vmem:[%s140 + $0x1b0] sm:$0xff]
          %v242 = vld [vmem:[%s140 + $0x1b8] sm:$0xff]
          %v243 = vld [vmem:[%s140 + $0x1c0] sm:$0xff]
          %v244 = vld [vmem:[%s140 + $0x1c8] sm:$0xff]
          %v245 = vld [vmem:[%s140 + $0x1d0] sm:$0xff]
          %v246 = vld [vmem:[%s140 + $0x1d8] sm:$0xff]
          %v247 = vld [vmem:[%s140 + $0x1e0] sm:$0xff]
          %v248 = vld [vmem:[%s140 + $0x1e8] sm:$0xff]
          %v249 = vld [vmem:[%s140 + $0x1f0] sm:$0xff]
          %v250 = vld [vmem:[%s140 + $0x1f8] sm:$0xff]
          %v251 = vld [vmem:[%s140 + $0x200] sm:$0xff]
          %v252 = vld [vmem:[%s140 + $0x208] sm:$0xff]
          %v253 = vld [vmem:[%s140 + $0x210] sm:$0xff]
          %v254 = vld [vmem:[%s140 + $0x218] sm:$0xff]
          %v255 = vld [vmem:[%s140 + $0x220] sm:$0xff]
          %v256 = vld [vmem:[%s140 + $0x228] sm:$0xff]
          %v257 = vld [vmem:[%s140 + $0x230] sm:$0xff]
          %v258 = vld [vmem:[%s140 + $0x238] sm:$0xff]
          %v259 = vld [vmem:[%s140 + $0x240] sm:$0xff]
          %v260 = vld [vmem:[%s140 + $0x248] sm:$0xff]
          %v261 = vld [vmem:[%s140 + $0x250] sm:$0xff]
          %v262 = vld [vmem:[%s140 + $0x258] sm:$0xff]
          %v263 = vld [vmem:[%s140 + $0x260] sm:$0xff]
          %v264 = vld [vmem:[%s140 + $0x268] sm:$0xff]
          %v265 = vld [vmem:[%s140 + $0x270] sm:$0xff]
          %v266 = vld [vmem:[%s140 + $0x278] sm:$0xff]
          %v267 = vld [vmem:[%s140 + $0x280] sm:$0xff]
          %v268 = vld [vmem:[%s140 + $0x288] sm:$0xff]
          %v269 = vld [vmem:[%s140 + $0x290] sm:$0xff]
          %v270 = vld [vmem:[%s140 + $0x298] sm:$0xff]
          %v271 = vld [vmem:[%s140 + $0x2a0] sm:$0xff]
          %v272 = vld [vmem:[%s140 + $0x2a8] sm:$0xff]
          %v273 = vld [vmem:[%s140 + $0x2b0] sm:$0xff]
          %v274 = vld [vmem:[%s140 + $0x2b8] sm:$0xff]
          %v275 = vld [vmem:[%s140 + $0x2c0] sm:$0xff]
          %v276 = vld [vmem:[%s140 + $0x2c8] sm:$0xff]
          %v277 = vld [vmem:[%s140 + $0x2d0] sm:$0xff]
          %v278 = vld [vmem:[%s140 + $0x2d8] sm:$0xff]
          %v279 = vld [vmem:[%s140 + $0x2e0] sm:$0xff]
          %v280 = vld [vmem:[%s140 + $0x2e8] sm:$0xff]
          %v281 = vld [vmem:[%s140 + $0x2f0] sm:$0xff]
          %v282 = vld [vmem:[%s140 + $0x2f8] sm:$0xff]
          %v283 = vld [vmem:[%s140 + $0x300] sm:$0xff]
          %v284 = vld [vmem:[%s140 + $0x308] sm:$0xff]
          %v285 = vld [vmem:[%s140 + $0x310] sm:$0xff]
          %v286 = vld [vmem:[%s140 + $0x318] sm:$0xff]
          %v287 = vld [vmem:[%s140 + $0x320] sm:$0xff]
          %v288 = vld [vmem:[%s140 + $0x328] sm:$0xff]
          %v289 = vld [vmem:[%s140 + $0x330] sm:$0xff]
          %v290 = vld [vmem:[%s140 + $0x338] sm:$0xff]
          %v291 = vld [vmem:[%s140 + $0x340] sm:$0xff]
          %v292 = vld [vmem:[%s140 + $0x348] sm:$0xff]
          %v293 = vld [vmem:[%s140 + $0x350] sm:$0xff]
          %v294 = vld [vmem:[%s140 + $0x358] sm:$0xff]
          %v295 = vld [vmem:[%s140 + $0x360] sm:$0xff]
          %v296 = vld [vmem:[%s140 + $0x368] sm:$0xff]
          %v297 = vld [vmem:[%s140 + $0x370] sm:$0xff]
          %v298 = vld [vmem:[%s140 + $0x378] sm:$0xff]
          %v299 = vld [vmem:[%s140 + $0x380] sm:$0xff]
          %v300 = vld [vmem:[%s140 + $0x388] sm:$0xff]
          %v301 = vld [vmem:[%s140 + $0x390] sm:$0xff]
          %v302 = vld [vmem:[%s140 + $0x398] sm:$0xff]
          %v303 = vld [vmem:[%s140 + $0x3a0] sm:$0xff]
          %v304 = vld [vmem:[%s140 + $0x3a8] sm:$0xff]
          %v305 = vld [vmem:[%s140 + $0x3b0] sm:$0xff]
          %v306 = vld [vmem:[%s140 + $0x3b8] sm:$0xff]
          %v307 = vld [vmem:[%s140 + $0x3c0] sm:$0xff]
          %v308 = vld [vmem:[%s140 + $0x3c8] sm:$0xff]
          %v309 = vld [vmem:[%s140 + $0x3d0] sm:$0xff]
          %v310 = vld [vmem:[%s140 + $0x3d8] sm:$0xff]
          %v311 = vld [vmem:[%s140 + $0x3e0] sm:$0xff]
          %v312 = vld [vmem:[%s140 + $0x3e8] sm:$0xff]
          %v313 = vld [vmem:[%s140 + $0x3f0] sm:$0xff]
          %v314 = vld [vmem:[%s140 + $0x3f8] sm:$0xff]
          %v315 = vld [vmem:[%s140 + $0x400] sm:$0xff]
          %v316 = vld [vmem:[%s140 + $0x408] sm:$0xff]
          %v317 = vld [vmem:[%s140 + $0x410] sm:$0xff]
          %v318 = vld [vmem:[%s140 + $0x418] sm:$0xff]
          %v319 = vld [vmem:[%s140 + $0x420] sm:$0xff]
          %v320 = vld [vmem:[%s140 + $0x428] sm:$0xff]
          %v321 = vld [vmem:[%s140 + $0x430] sm:$0xff]
          %v322 = vld [vmem:[%s140 + $0x438] sm:$0xff]
          %v323 = vld [vmem:[%s140 + $0x440] sm:$0xff]
          %v324 = vld [vmem:[%s140 + $0x448] sm:$0xff]
          %v325 = vld [vmem:[%s140 + $0x450] sm:$0xff]
          %v326 = vld [vmem:[%s140 + $0x458] sm:$0xff]
          %v327 = vld [vmem:[%s140 + $0x460] sm:$0xff]
          %v328 = vld [vmem:[%s140 + $0x468] sm:$0xff]
          %v329 = vld [vmem:[%s140 + $0x470] sm:$0xff]
          %v330 = vld [vmem:[%s140 + $0x478] sm:$0xff]
          %v331 = vld [vmem:[%s140 + $0x480] sm:$0xff]
          %v332 = vld [vmem:[%s140 + $0x488] sm:$0xff]
          %v333 = vld [vmem:[%s140 + $0x490] sm:$0xff]
          %v334 = vld [vmem:[%s140 + $0x498] sm:$0xff]
          %v335 = vld [vmem:[%s140 + $0x4a0] sm:$0xff]
          %v336 = vld [vmem:[%s140 + $0x4a8] sm:$0xff]
          %v337 = vld [vmem:[%s140 + $0x4b0] sm:$0xff]
          %v338 = vld [vmem:[%s140 + $0x4b8] sm:$0xff]
          %v339 = vld [vmem:[%s140 + $0x4c0] sm:$0xff]
          %v340 = vld [vmem:[%s140 + $0x4c8] sm:$0xff]
          %v341 = vld [vmem:[%s140 + $0x4d0] sm:$0xff]
          %v342 = vld [vmem:[%s140 + $0x4d8] sm:$0xff]
          %v343 = vld [vmem:[%s140 + $0x4e0] sm:$0xff]
          %v344 = vld [vmem:[%s140 + $0x4e8] sm:$0xff]
          %v345 = vld [vmem:[%s140 + $0x4f0] sm:$0xff]
          %v346 = vld [vmem:[%s140 + $0x4f8] sm:$0xff]
          %v347 = vld [vmem:[%s140 + $0x500] sm:$0xff]
          %v348 = vld [vmem:[%s140 + $0x508] sm:$0xff]
          %v349 = vld [vmem:[%s140 + $0x510] sm:$0xff]
          %v350 = vld [vmem:[%s140 + $0x518] sm:$0xff]
          %v351 = vld [vmem:[%s140 + $0x520] sm:$0xff]
          %v352 = vld [vmem:[%s140 + $0x528] sm:$0xff]
          %v353 = vld [vmem:[%s140 + $0x530] sm:$0xff]
          %v354 = vld [vmem:[%s140 + $0x538] sm:$0xff]
          %v355 = vld [vmem:[%s140 + $0x540] sm:$0xff]
          %v356 = vld [vmem:[%s140 + $0x548] sm:$0xff]
          %v357 = vld [vmem:[%s140 + $0x550] sm:$0xff]
          %v358 = vld [vmem:[%s140 + $0x558] sm:$0xff]
          %v359 = vld [vmem:[%s140 + $0x560] sm:$0xff]
          %v360 = vld [vmem:[%s140 + $0x568] sm:$0xff]
          %v361 = vld [vmem:[%s140 + $0x570] sm:$0xff]
          %v362 = vld [vmem:[%s140 + $0x578] sm:$0xff]
          %v363 = vld [vmem:[%s140 + $0x580] sm:$0xff]
          %v364 = vld [vmem:[%s140 + $0x588] sm:$0xff]
          %v365 = vld [vmem:[%s140 + $0x590] sm:$0xff]
          %v366 = vld [vmem:[%s140 + $0x598] sm:$0xff]
          %v367 = vld [vmem:[%s140 + $0x5a0] sm:$0xff]
          %v368 = vld [vmem:[%s140 + $0x5a8] sm:$0xff]
          %v369 = vld [vmem:[%s140 + $0x5b0] sm:$0xff]
          %v370 = vld [vmem:[%s140 + $0x5b8] sm:$0xff]
          %v371 = vld [vmem:[%s140 + $0x5c0] sm:$0xff]
          %v372 = vld [vmem:[%s140 + $0x5c8] sm:$0xff]
          %v373 = vld [vmem:[%s140 + $0x5d0] sm:$0xff]
          %v374 = vld [vmem:[%s140 + $0x5d8] sm:$0xff]
          %v375 = vld [vmem:[%s140 + $0x5e0] sm:$0xff]
          %v376 = vld [vmem:[%s140 + $0x5e8] sm:$0xff]
          %v377 = vld [vmem:[%s140 + $0x5f0] sm:$0xff]
          %v378 = vld [vmem:[%s140 + $0x5f8] sm:$0xff]
          %v379 = vld [vmem:[%s140 + $0x600] sm:$0xff]
          %v380 = vld [vmem:[%s140 + $0x608] sm:$0xff]
          %v381 = vld [vmem:[%s140 + $0x610] sm:$0xff]
          %v382 = vld [vmem:[%s140 + $0x618] sm:$0xff]
          %v383 = vld [vmem:[%s140 + $0x620] sm:$0xff]
          %v384 = vld [vmem:[%s140 + $0x628] sm:$0xff]
          %v385 = vld [vmem:[%s140 + $0x630] sm:$0xff]
          %v386 = vld [vmem:[%s140 + $0x638] sm:$0xff]
          %v387 = vld [vmem:[%s140 + $0x640] sm:$0xff]
          %v388 = vld [vmem:[%s140 + $0x648] sm:$0xff]
          %v389 = vld [vmem:[%s140 + $0x650] sm:$0xff]
          %v390 = vld [vmem:[%s140 + $0x658] sm:$0xff]
          %v391 = vld [vmem:[%s140 + $0x660] sm:$0xff]
          %v392 = vld [vmem:[%s140 + $0x668] sm:$0xff]
          %v393 = vld [vmem:[%s140 + $0x670] sm:$0xff]
          %v394 = vld [vmem:[%s140 + $0x678] sm:$0xff]
          %v395 = vld [vmem:[%s140 + $0x680] sm:$0xff]
          %v396 = vld [vmem:[%s140 + $0x688] sm:$0xff]
          %v397 = vld [vmem:[%s140 + $0x690] sm:$0xff]
          %v398 = vld [vmem:[%s140 + $0x698] sm:$0xff]
          %v399 = vld [vmem:[%s140 + $0x6a0] sm:$0xff]
          %v400 = vld [vmem:[%s140 + $0x6a8] sm:$0xff]
          %v401 = vld [vmem:[%s140 + $0x6b0] sm:$0xff]
          %v402 = vld [vmem:[%s140 + $0x6b8] sm:$0xff]
          %v403 = vld [vmem:[%s140 + $0x6c0] sm:$0xff]
          %v404 = vld [vmem:[%s140 + $0x6c8] sm:$0xff]
          %v405 = vld [vmem:[%s140 + $0x6d0] sm:$0xff]
          %v406 = vld [vmem:[%s140 + $0x6d8] sm:$0xff]
          %v407 = vld [vmem:[%s140 + $0x6e0] sm:$0xff]
          %v408 = vld [vmem:[%s140 + $0x6e8] sm:$0xff]
          %v409 = vld [vmem:[%s140 + $0x6f0] sm:$0xff]
          %v410 = vld [vmem:[%s140 + $0x6f8] sm:$0xff]
          %v411 = vld [vmem:[%s140 + $0x700] sm:$0xff]
          %v412 = vld [vmem:[%s140 + $0x708] sm:$0xff]
          %v413 = vld [vmem:[%s140 + $0x710] sm:$0xff]
          %v414 = vld [vmem:[%s140 + $0x718] sm:$0xff]
          %v415 = vld [vmem:[%s140 + $0x720] sm:$0xff]
          %v416 = vld [vmem:[%s140 + $0x728] sm:$0xff]
          %v417 = vld [vmem:[%s140 + $0x730] sm:$0xff]
          %v418 = vld [vmem:[%s140 + $0x738] sm:$0xff]
          %v419 = vld [vmem:[%s140 + $0x740] sm:$0xff]
          %v420 = vld [vmem:[%s140 + $0x748] sm:$0xff]
          %v421 = vld [vmem:[%s140 + $0x750] sm:$0xff]
          %v422 = vld [vmem:[%s140 + $0x758] sm:$0xff]
          %v423 = vld [vmem:[%s140 + $0x760] sm:$0xff]
          %v424 = vld [vmem:[%s140 + $0x768] sm:$0xff]
          %v425 = vld [vmem:[%s140 + $0x770] sm:$0xff]
          %v426 = vld [vmem:[%s140 + $0x778] sm:$0xff]
          %v427 = vld [vmem:[%s140 + $0x780] sm:$0xff]
          %v428 = vld [vmem:[%s140 + $0x788] sm:$0xff]
          %v429 = vld [vmem:[%s140 + $0x790] sm:$0xff]
          %v430 = vld [vmem:[%s140 + $0x798] sm:$0xff]
          %v431 = vld [vmem:[%s140 + $0x7a0] sm:$0xff]
          %v432 = vld [vmem:[%s140 + $0x7a8] sm:$0xff]
          %v433 = vld [vmem:[%s140 + $0x7b0] sm:$0xff]
          %v434 = vld [vmem:[%s140 + $0x7b8] sm:$0xff]
          %v435 = vld [vmem:[%s140 + $0x7c0] sm:$0xff]
          %v436 = vld [vmem:[%s140 + $0x7c8] sm:$0xff]
          %v437 = vld [vmem:[%s140 + $0x7d0] sm:$0xff]
          %v438 = vld [vmem:[%s140 + $0x7d8] sm:$0xff]
          %v439 = vld [vmem:[%s140 + $0x7e0] sm:$0xff]
          %v440 = vld [vmem:[%s140 + $0x7e8] sm:$0xff]
          %v441 = vld [vmem:[%s140 + $0x7f0] sm:$0xff]
          %v442 = vld [vmem:[%s140 + $0x7f8] sm:$0xff]
          %v443 = vld [vmem:[%s140 + $0x800] sm:$0xff]
          %v444 = vld [vmem:[%s140 + $0x808] sm:$0xff]
          %v445 = vld [vmem:[%s140 + $0x810] sm:$0xff]
          %v446 = vld [vmem:[%s140 + $0x818] sm:$0xff]
          %v447 = vld [vmem:[%s140 + $0x820] sm:$0xff]
          %v448 = vld [vmem:[%s140 + $0x828] sm:$0xff]
          %v449 = vld [vmem:[%s140 + $0x830] sm:$0xff]
          %v450 = vld [vmem:[%s140 + $0x838] sm:$0xff]
          %v451 = vld [vmem:[%s140 + $0x840] sm:$0xff]
          %v452 = vld [vmem:[%s140 + $0x848] sm:$0xff]
          %v453 = vld [vmem:[%s140 + $0x850] sm:$0xff]
          %v454 = vld [vmem:[%s140 + $0x858] sm:$0xff]
          %v455 = vld [vmem:[%s140 + $0x860] sm:$0xff]
          %v456 = vld [vmem:[%s140 + $0x868] sm:$0xff]
          %v457 = vld [vmem:[%s140 + $0x870] sm:$0xff]
          %v458 = vld [vmem:[%s140 + $0x878] sm:$0xff]
          %v459 = vld [vmem:[%s140 + $0x880] sm:$0xff]
          %v460 = vld [vmem:[%s140 + $0x888] sm:$0xff]
          %v461 = vld [vmem:[%s140 + $0x890] sm:$0xff]
          %v462 = vld [vmem:[%s140 + $0x898] sm:$0xff]
          %v463 = vld [vmem:[%s140 + $0x8a0] sm:$0xff]
          %v464 = vld [vmem:[%s140 + $0x8a8] sm:$0xff]
          %v465 = vld [vmem:[%s140 + $0x8b0] sm:$0xff]
          %v466 = vld [vmem:[%s140 + $0x8b8] sm:$0xff]
          %v467 = vld [vmem:[%s140 + $0x8c0] sm:$0xff]
          %v468 = vld [vmem:[%s140 + $0x8c8] sm:$0xff]
          %v469 = vld [vmem:[%s140 + $0x8d0] sm:$0xff]
          %v470 = vld [vmem:[%s140 + $0x8d8] sm:$0xff]
          %v471 = vld [vmem:[%s140 + $0x8e0] sm:$0xff]
          %v472 = vld [vmem:[%s140 + $0x8e8] sm:$0xff]
          %v473 = vld [vmem:[%s140 + $0x8f0] sm:$0xff]
          %v474 = vld [vmem:[%s140 + $0x8f8] sm:$0xff]
          %v475 = vld [vmem:[%s140 + $0x900] sm:$0xff]
          %v476 = vld [vmem:[%s140 + $0x908] sm:$0xff]
          %v477 = vld [vmem:[%s140 + $0x910] sm:$0xff]
          %v478 = vld [vmem:[%s140 + $0x918] sm:$0xff]
          %v479 = vld [vmem:[%s140 + $0x920] sm:$0xff]
          %v480 = vld [vmem:[%s140 + $0x928] sm:$0xff]
          %v481 = vld [vmem:[%s140 + $0x930] sm:$0xff]
          %v482 = vld [vmem:[%s140 + $0x938] sm:$0xff]
          %v483 = vld [vmem:[%s140 + $0x940] sm:$0xff]
          %v484 = vld [vmem:[%s140 + $0x948] sm:$0xff]
          %v485 = vld [vmem:[%s140 + $0x950] sm:$0xff]
          %v486 = vld [vmem:[%s140 + $0x958] sm:$0xff]
          %v487 = vld [vmem:[%s140 + $0x960] sm:$0xff]
          %v488 = vld [vmem:[%s140 + $0x968] sm:$0xff]
          %v489 = vld [vmem:[%s140 + $0x970] sm:$0xff]
          %v490 = vld [vmem:[%s140 + $0x978] sm:$0xff]
          %v491 = vld [vmem:[%s140 + $0x980] sm:$0xff]
          %v492 = vld [vmem:[%s140 + $0x988] sm:$0xff]
          %v493 = vld [vmem:[%s140 + $0x990] sm:$0xff]
          %v494 = vld [vmem:[%s140 + $0x998] sm:$0xff]
          %v495 = vld [vmem:[%s140 + $0x9a0] sm:$0xff]
          %v496 = vld [vmem:[%s140 + $0x9a8] sm:$0xff]
          %v497 = vld [vmem:[%s140 + $0x9b0] sm:$0xff]
          %v498 = vld [vmem:[%s140 + $0x9b8] sm:$0xff]
          %v499 = vld [vmem:[%s140 + $0x9c0] sm:$0xff]
          %v500 = vld [vmem:[%s140 + $0x9c8] sm:$0xff]
          %v501 = vld [vmem:[%s140 + $0x9d0] sm:$0xff]
          %v502 = vld [vmem:[%s140 + $0x9d8] sm:$0xff]
          %v503 = vld [vmem:[%s140 + $0x9e0] sm:$0xff]
          %v504 = vld [vmem:[%s140 + $0x9e8] sm:$0xff]
          %v505 = vld [vmem:[%s140 + $0x9f0] sm:$0xff]
          %v506 = vld [vmem:[%s140 + $0x9f8] sm:$0xff]
          %v507 = vld [vmem:[%s140 + $0xa00] sm:$0xff]
          %v508 = vld [vmem:[%s140 + $0xa08] sm:$0xff]
          %v509 = vld [vmem:[%s140 + $0xa10] sm:$0xff]
          %v510 = vld [vmem:[%s140 + $0xa18] sm:$0xff]
          %v511 = vld [vmem:[%s140 + $0xa20] sm:$0xff]
          %v512 = vld [vmem:[%s140 + $0xa28] sm:$0xff]
          %v513 = vld [vmem:[%s140 + $0xa30] sm:$0xff]
          %v514 = vld [vmem:[%s140 + $0xa38] sm:$0xff]
          %v515 = vld [vmem:[%s140 + $0xa40] sm:$0xff]
          %v516 = vld [vmem:[%s140 + $0xa48] sm:$0xff]
          %v517 = vld [vmem:[%s140 + $0xa50] sm:$0xff]
          %v518 = vld [vmem:[%s140 + $0xa58] sm:$0xff]
          %v519 = vld [vmem:[%s140 + $0xa60] sm:$0xff]
          %v520 = vld [vmem:[%s140 + $0xa68] sm:$0xff]
          %v521 = vld [vmem:[%s140 + $0xa70] sm:$0xff]
          %v522 = vld [vmem:[%s140 + $0xa78] sm:$0xff]
          %v523 = vld [vmem:[%s140 + $0xa80] sm:$0xff]
          %v524 = vld [vmem:[%s140 + $0xa88] sm:$0xff]
          %v525 = vld [vmem:[%s140 + $0xa90] sm:$0xff]
          %v526 = vld [vmem:[%s140 + $0xa98] sm:$0xff]
          %v527 = vld [vmem:[%s140 + $0xaa0] sm:$0xff]
          %v528 = vld [vmem:[%s140 + $0xaa8] sm:$0xff]
          %v529 = vld [vmem:[%s140 + $0xab0] sm:$0xff]
          %v530 = vld [vmem:[%s140 + $0xab8] sm:$0xff]
          %v531 = vld [vmem:[%s140 + $0xac0] sm:$0xff]
          %v532 = vld [vmem:[%s140 + $0xac8] sm:$0xff]
          %v533 = vld [vmem:[%s140 + $0xad0] sm:$0xff]
          %v534 = vld [vmem:[%s140 + $0xad8] sm:$0xff]
          %v535 = vld [vmem:[%s140 + $0xae0] sm:$0xff]
          %v536 = vld [vmem:[%s140 + $0xae8] sm:$0xff]
          %v537 = vld [vmem:[%s140 + $0xaf0] sm:$0xff]
          %v538 = vld [vmem:[%s140 + $0xaf8] sm:$0xff]
          %v539 = vld [vmem:[%s140 + $0xb00] sm:$0xff]
          %v540 = vld [vmem:[%s140 + $0xb08] sm:$0xff]
          %v541 = vld [vmem:[%s140 + $0xb10] sm:$0xff]
          %v542 = vld [vmem:[%s140 + $0xb18] sm:$0xff]
          %v543 = vld [vmem:[%s140 + $0xb20] sm:$0xff]
          %v544 = vld [vmem:[%s140 + $0xb28] sm:$0xff]
          %v545 = vld [vmem:[%s140 + $0xb30] sm:$0xff]
          %v546 = vld [vmem:[%s140 + $0xb38] sm:$0xff]
          %v547 = vld [vmem:[%s140 + $0xb40] sm:$0xff]
          %v548 = vld [vmem:[%s140 + $0xb48] sm:$0xff]
          %v549 = vld [vmem:[%s140 + $0xb50] sm:$0xff]
          %v550 = vld [vmem:[%s140 + $0xb58] sm:$0xff]
          %v551 = vld [vmem:[%s140 + $0xb60] sm:$0xff]
          %v552 = vld [vmem:[%s140 + $0xb68] sm:$0xff]
          %v553 = vld [vmem:[%s140 + $0xb70] sm:$0xff]
          %v554 = vld [vmem:[%s140 + $0xb78] sm:$0xff]
          %v555 = vld [vmem:[%s140 + $0xb80] sm:$0xff]
          %v556 = vld [vmem:[%s140 + $0xb88] sm:$0xff]
          %v557 = vld [vmem:[%s140 + $0xb90] sm:$0xff]
          %v558 = vld [vmem:[%s140 + $0xb98] sm:$0xff]
          %v559 = vld [vmem:[%s140 + $0xba0] sm:$0xff]
          %v560 = vld [vmem:[%s140 + $0xba8] sm:$0xff]
          %v561 = vld [vmem:[%s140 + $0xbb0] sm:$0xff]
          %v562 = vld [vmem:[%s140 + $0xbb8] sm:$0xff]
          %v563 = vld [vmem:[%s140 + $0xbc0] sm:$0xff]
          %v564 = vld [vmem:[%s140 + $0xbc8] sm:$0xff]
          %v565 = vld [vmem:[%s140 + $0xbd0] sm:$0xff]
          %v566 = vld [vmem:[%s140 + $0xbd8] sm:$0xff]
          %v567 = vld [vmem:[%s140 + $0xbe0] sm:$0xff]
          %v568 = vld [vmem:[%s140 + $0xbe8] sm:$0xff]
          %v569 = vld [vmem:[%s140 + $0xbf0] sm:$0xff]
          %v570 = vld [vmem:[%s140 + $0xbf8] sm:$0xff]
          %v571 = vld [vmem:[%s140 + $0xc00] sm:$0xff]
          %v572 = vld [vmem:[%s140 + $0xc08] sm:$0xff]
          %v573 = vld [vmem:[%s140 + $0xc10] sm:$0xff]
          %v574 = vld [vmem:[%s140 + $0xc18] sm:$0xff]
          %v575 = vld [vmem:[%s140 + $0xc20] sm:$0xff]
          %v576 = vld [vmem:[%s140 + $0xc28] sm:$0xff]
          %v577 = vld [vmem:[%s140 + $0xc30] sm:$0xff]
          %v578 = vld [vmem:[%s140 + $0xc38] sm:$0xff]
          %v579 = vld [vmem:[%s140 + $0xc40] sm:$0xff]
          %v580 = vld [vmem:[%s140 + $0xc48] sm:$0xff]
          %v581 = vld [vmem:[%s140 + $0xc50] sm:$0xff]
          %v582 = vld [vmem:[%s140 + $0xc58] sm:$0xff]
          %v583 = vld [vmem:[%s140 + $0xc60] sm:$0xff]
          %v584 = vld [vmem:[%s140 + $0xc68] sm:$0xff]
          %v585 = vld [vmem:[%s140 + $0xc70] sm:$0xff]
          %v586 = vld [vmem:[%s140 + $0xc78] sm:$0xff]
          %v587 = vld [vmem:[%s140 + $0xc80] sm:$0xff]
          %v588 = vld [vmem:[%s140 + $0xc88] sm:$0xff]
          %v589 = vld [vmem:[%s140 + $0xc90] sm:$0xff]
          %v590 = vld [vmem:[%s140 + $0xc98] sm:$0xff]
          %v591 = vld [vmem:[%s140 + $0xca0] sm:$0xff]
          %v592 = vld [vmem:[%s140 + $0xca8] sm:$0xff]
          %v593 = vld [vmem:[%s140 + $0xcb0] sm:$0xff]
          %v594 = vld [vmem:[%s140 + $0xcb8] sm:$0xff]
          %v595 = vld [vmem:[%s140 + $0xcc0] sm:$0xff]
          %v596 = vld [vmem:[%s140 + $0xcc8] sm:$0xff]
          %v597 = vld [vmem:[%s140 + $0xcd0] sm:$0xff]
          %v598 = vld [vmem:[%s140 + $0xcd8] sm:$0xff]
          %v599 = vld [vmem:[%s140 + $0xce0] sm:$0xff]
          %v600 = vld [vmem:[%s140 + $0xce8] sm:$0xff]
          %v601 = vld [vmem:[%s140 + $0xcf0] sm:$0xff]
          %v602 = vld [vmem:[%s140 + $0xcf8] sm:$0xff]
          %v603 = vld [vmem:[%s140 + $0xd00] sm:$0xff]
          %v604 = vld [vmem:[%s140 + $0xd08] sm:$0xff]
          %v605 = vld [vmem:[%s140 + $0xd10] sm:$0xff]
          %v606 = vld [vmem:[%s140 + $0xd18] sm:$0xff]
          %v607 = vld [vmem:[%s140 + $0xd20] sm:$0xff]
          %v608 = vld [vmem:[%s140 + $0xd28] sm:$0xff]
          %v609 = vld [vmem:[%s140 + $0xd30] sm:$0xff]
          %v610 = vld [vmem:[%s140 + $0xd38] sm:$0xff]
          %v611 = vld [vmem:[%s140 + $0xd40] sm:$0xff]
          %v612 = vld [vmem:[%s140 + $0xd48] sm:$0xff]
          %v613 = vld [vmem:[%s140 + $0xd50] sm:$0xff]
          %v614 = vld [vmem:[%s140 + $0xd58] sm:$0xff]
          %v615 = vld [vmem:[%s140 + $0xd60] sm:$0xff]
          %v616 = vld [vmem:[%s140 + $0xd68] sm:$0xff]
          %v617 = vld [vmem:[%s140 + $0xd70] sm:$0xff]
          %v618 = vld [vmem:[%s140 + $0xd78] sm:$0xff]
          %v619 = vld [vmem:[%s140 + $0xd80] sm:$0xff]
          %v620 = vld [vmem:[%s140 + $0xd88] sm:$0xff]
          %v621 = vld [vmem:[%s140 + $0xd90] sm:$0xff]
          %v622 = vld [vmem:[%s140 + $0xd98] sm:$0xff]
          %v623 = vld [vmem:[%s140 + $0xda0] sm:$0xff]
          %v624 = vld [vmem:[%s140 + $0xda8] sm:$0xff]
          %v625 = vld [vmem:[%s140 + $0xdb0] sm:$0xff]
          %v626 = vld [vmem:[%s140 + $0xdb8] sm:$0xff]
          %v627 = vld [vmem:[%s140 + $0xdc0] sm:$0xff]
          %v628 = vld [vmem:[%s140 + $0xdc8] sm:$0xff]
          %v629 = vld [vmem:[%s140 + $0xdd0] sm:$0xff]
          %v630 = vld [vmem:[%s140 + $0xdd8] sm:$0xff]
          %v631 = vld [vmem:[%s140 + $0xde0] sm:$0xff]
          %v632 = vld [vmem:[%s140 + $0xde8] sm:$0xff]
          %v633 = vld [vmem:[%s140 + $0xdf0] sm:$0xff]
          %v634 = vld [vmem:[%s140 + $0xdf8] sm:$0xff]
          %v635 = vld [vmem:[%s140 + $0xe00] sm:$0xff]
          %v636 = vld [vmem:[%s140 + $0xe08] sm:$0xff]
          %v637 = vld [vmem:[%s140 + $0xe10] sm:$0xff]
          %v638 = vld [vmem:[%s140 + $0xe18] sm:$0xff]
          %v639 = vld [vmem:[%s140 + $0xe20] sm:$0xff]
          %v640 = vld [vmem:[%s140 + $0xe28] sm:$0xff]
          %v641 = vld [vmem:[%s140 + $0xe30] sm:$0xff]
          %v642 = vld [vmem:[%s140 + $0xe38] sm:$0xff]
          %v643 = vld [vmem:[%s140 + $0xe40] sm:$0xff]
          %v644 = vld [vmem:[%s140 + $0xe48] sm:$0xff]
          %v645 = vld [vmem:[%s140 + $0xe50] sm:$0xff]
          %v646 = vld [vmem:[%s140 + $0xe58] sm:$0xff]
          %v647 = vld [vmem:[%s140 + $0xe60] sm:$0xff]
          %v648 = vld [vmem:[%s140 + $0xe68] sm:$0xff]
          %v649 = vld [vmem:[%s140 + $0xe70] sm:$0xff]
          %v650 = vld [vmem:[%s140 + $0xe78] sm:$0xff]
          %v651 = vld [vmem:[%s140 + $0xe80] sm:$0xff]
          %v652 = vld [vmem:[%s140 + $0xe88] sm:$0xff]
          %v653 = vld [vmem:[%s140 + $0xe90] sm:$0xff]
          %v654 = vld [vmem:[%s140 + $0xe98] sm:$0xff]
          %v655 = vld [vmem:[%s140 + $0xea0] sm:$0xff]
          %v656 = vld [vmem:[%s140 + $0xea8] sm:$0xff]
          %v657 = vld [vmem:[%s140 + $0xeb0] sm:$0xff]
          %v658 = vld [vmem:[%s140 + $0xeb8] sm:$0xff]
          %v659 = vld [vmem:[%s140 + $0xec0] sm:$0xff]
          %v660 = vld [vmem:[%s140 + $0xec8] sm:$0xff]
          %v661 = vld [vmem:[%s140 + $0xed0] sm:$0xff]
          %v662 = vld [vmem:[%s140 + $0xed8] sm:$0xff]
          %v663 = vld [vmem:[%s140 + $0xee0] sm:$0xff]
          %v664 = vld [vmem:[%s140 + $0xee8] sm:$0xff]
          %v665 = vld [vmem:[%s140 + $0xef0] sm:$0xff]
          %v666 = vld [vmem:[%s140 + $0xef8] sm:$0xff]
          %v667 = vld [vmem:[%s140 + $0xf00] sm:$0xff]
          %v668 = vld [vmem:[%s140 + $0xf08] sm:$0xff]
          %v669 = vld [vmem:[%s140 + $0xf10] sm:$0xff]
          %v670 = vld [vmem:[%s140 + $0xf18] sm:$0xff]
          %v671 = vld [vmem:[%s140 + $0xf20] sm:$0xff]
          %v672 = vld [vmem:[%s140 + $0xf28] sm:$0xff]
          %v673 = vld [vmem:[%s140 + $0xf30] sm:$0xff]
          %v674 = vld [vmem:[%s140 + $0xf38] sm:$0xff]
          %v675 = vld [vmem:[%s140 + $0xf40] sm:$0xff]
          %v676 = vld [vmem:[%s140 + $0xf48] sm:$0xff]
          %v677 = vld [vmem:[%s140 + $0xf50] sm:$0xff]
          %v678 = vld [vmem:[%s140 + $0xf58] sm:$0xff]
          %v679 = vld [vmem:[%s140 + $0xf60] sm:$0xff]
          %v680 = vld [vmem:[%s140 + $0xf68] sm:$0xff]
          %v681 = vld [vmem:[%s140 + $0xf70] sm:$0xff]
          %v682 = vld [vmem:[%s140 + $0xf78] sm:$0xff]
          %v683 = vld [vmem:[%s140 + $0xf80] sm:$0xff]
          %v684 = vld [vmem:[%s140 + $0xf88] sm:$0xff]
          %v685 = vld [vmem:[%s140 + $0xf90] sm:$0xff]
          %v686 = vld [vmem:[%s140 + $0xf98] sm:$0xff]
          %v687 = vld [vmem:[%s140 + $0xfa0] sm:$0xff]
          %v688 = vld [vmem:[%s140 + $0xfa8] sm:$0xff]
          %v689 = vld [vmem:[%s140 + $0xfb0] sm:$0xff]
          %v690 = vld [vmem:[%s140 + $0xfb8] sm:$0xff]
          %v691 = vld [vmem:[%s140 + $0xfc0] sm:$0xff]
          %v692 = vld [vmem:[%s140 + $0xfc8] sm:$0xff]
          %v693 = vld [vmem:[%s140 + $0xfd0] sm:$0xff]
          %v694 = vld [vmem:[%s140 + $0xfd8] sm:$0xff]
          %v695 = vld [vmem:[%s140 + $0xfe0] sm:$0xff]
          %v696 = vld [vmem:[%s140 + $0xfe8] sm:$0xff]
          %v697 = vld [vmem:[%s140 + $0xff0] sm:$0xff]
          %v698 = vld [vmem:[%s140 + $0xff8] sm:$0xff]
          %v699 = vand.u32 2147483647, %v187
          %v700 = vand.u32 2147483647, %v188
          %v701 = vand.u32 2147483647, %v189
          %v702 = vand.u32 2147483647, %v190
          %v703 = vand.u32 2147483647, %v191
          %v704 = vand.u32 2147483647, %v192
          %v705 = vand.u32 2147483647, %v193
          %v706 = vand.u32 2147483647, %v194
          %v707 = vand.u32 2147483647, %v195
          %v708 = vand.u32 2147483647, %v196
          %v709 = vand.u32 2147483647, %v197
          %v710 = vand.u32 2147483647, %v198
          %v711 = vand.u32 2147483647, %v199
          %v712 = vand.u32 2147483647, %v200
          %v713 = vand.u32 2147483647, %v201
          %v714 = vand.u32 2147483647, %v202
          %v715 = vand.u32 2147483647, %v203
          %v716 = vand.u32 2147483647, %v204
          %v717 = vand.u32 2147483647, %v205
          %v718 = vand.u32 2147483647, %v206
          %v719 = vand.u32 2147483647, %v207
          %v720 = vand.u32 2147483647, %v208
          %v721 = vand.u32 2147483647, %v209
          %v722 = vand.u32 2147483647, %v210
          %v723 = vand.u32 2147483647, %v211
          %v724 = vand.u32 2147483647, %v212
          %v725 = vand.u32 2147483647, %v213
          %v726 = vand.u32 2147483647, %v214
          %v727 = vand.u32 2147483647, %v215
          %v728 = vand.u32 2147483647, %v216
          %v729 = vand.u32 2147483647, %v217
          %v730 = vand.u32 2147483647, %v218
          %v731 = vand.u32 2147483647, %v219
          %v732 = vand.u32 2147483647, %v220
          %v733 = vand.u32 2147483647, %v221
          %v734 = vand.u32 2147483647, %v222
          %v735 = vand.u32 2147483647, %v223
          %v736 = vand.u32 2147483647, %v224
          %v737 = vand.u32 2147483647, %v225
          %v738 = vand.u32 2147483647, %v226
          %v739 = vand.u32 2147483647, %v227
          %v740 = vand.u32 2147483647, %v228
          %v741 = vand.u32 2147483647, %v229
          %v742 = vand.u32 2147483647, %v230
          %v743 = vand.u32 2147483647, %v231
          %v744 = vand.u32 2147483647, %v232
          %v745 = vand.u32 2147483647, %v233
          %v746 = vand.u32 2147483647, %v234
          %v747 = vand.u32 2147483647, %v235
          %v748 = vand.u32 2147483647, %v236
          %v749 = vand.u32 2147483647, %v237
          %v750 = vand.u32 2147483647, %v238
          %v751 = vand.u32 2147483647, %v239
          %v752 = vand.u32 2147483647, %v240
          %v753 = vand.u32 2147483647, %v241
          %v754 = vand.u32 2147483647, %v242
          %v755 = vand.u32 2147483647, %v243
          %v756 = vand.u32 2147483647, %v244
          %v757 = vand.u32 2147483647, %v245
          %v758 = vand.u32 2147483647, %v246
          %v759 = vand.u32 2147483647, %v247
          %v760 = vand.u32 2147483647, %v248
          %v761 = vand.u32 2147483647, %v249
          %v762 = vand.u32 2147483647, %v250
          %v763 = vand.u32 2147483647, %v251
          %v764 = vand.u32 2147483647, %v252
          %v765 = vand.u32 2147483647, %v253
          %v766 = vand.u32 2147483647, %v254
          %v767 = vand.u32 2147483647, %v255
          %v768 = vand.u32 2147483647, %v256
          %v769 = vand.u32 2147483647, %v257
          %v770 = vand.u32 2147483647, %v258
          %v771 = vand.u32 2147483647, %v259
          %v772 = vand.u32 2147483647, %v260
          %v773 = vand.u32 2147483647, %v261
          %v774 = vand.u32 2147483647, %v262
          %v775 = vand.u32 2147483647, %v263
          %v776 = vand.u32 2147483647, %v264
          %v777 = vand.u32 2147483647, %v265
          %v778 = vand.u32 2147483647, %v266
          %v779 = vand.u32 2147483647, %v267
          %v780 = vand.u32 2147483647, %v268
          %v781 = vand.u32 2147483647, %v269
          %v782 = vand.u32 2147483647, %v270
          %v783 = vand.u32 2147483647, %v271
          %v784 = vand.u32 2147483647, %v272
          %v785 = vand.u32 2147483647, %v273
          %v786 = vand.u32 2147483647, %v274
          %v787 = vand.u32 2147483647, %v275
          %v788 = vand.u32 2147483647, %v276
          %v789 = vand.u32 2147483647, %v277
          %v790 = vand.u32 2147483647, %v278
          %v791 = vand.u32 2147483647, %v279
          %v792 = vand.u32 2147483647, %v280
          %v793 = vand.u32 2147483647, %v281
          %v794 = vand.u32 2147483647, %v282
          %v795 = vand.u32 2147483647, %v283
          %v796 = vand.u32 2147483647, %v284
          %v797 = vand.u32 2147483647, %v285
          %v798 = vand.u32 2147483647, %v286
          %v799 = vand.u32 2147483647, %v287
          %v800 = vand.u32 2147483647, %v288
          %v801 = vand.u32 2147483647, %v289
          %v802 = vand.u32 2147483647, %v290
          %v803 = vand.u32 2147483647, %v291
          %v804 = vand.u32 2147483647, %v292
          %v805 = vand.u32 2147483647, %v293
          %v806 = vand.u32 2147483647, %v294
          %v807 = vand.u32 2147483647, %v295
          %v808 = vand.u32 2147483647, %v296
          %v809 = vand.u32 2147483647, %v297
          %v810 = vand.u32 2147483647, %v298
          %v811 = vand.u32 2147483647, %v299
          %v812 = vand.u32 2147483647, %v300
          %v813 = vand.u32 2147483647, %v301
          %v814 = vand.u32 2147483647, %v302
          %v815 = vand.u32 2147483647, %v303
          %v816 = vand.u32 2147483647, %v304
          %v817 = vand.u32 2147483647, %v305
          %v818 = vand.u32 2147483647, %v306
          %v819 = vand.u32 2147483647, %v307
          %v820 = vand.u32 2147483647, %v308
          %v821 = vand.u32 2147483647, %v309
          %v822 = vand.u32 2147483647, %v310
          %v823 = vand.u32 2147483647, %v311
          %v824 = vand.u32 2147483647, %v312
          %v825 = vand.u32 2147483647, %v313
          %v826 = vand.u32 2147483647, %v314
          %v827 = vand.u32 2147483647, %v315
          %v828 = vand.u32 2147483647, %v316
          %v829 = vand.u32 2147483647, %v317
          %v830 = vand.u32 2147483647, %v318
          %v831 = vand.u32 2147483647, %v319
          %v832 = vand.u32 2147483647, %v320
          %v833 = vand.u32 2147483647, %v321
          %v834 = vand.u32 2147483647, %v322
          %v835 = vand.u32 2147483647, %v323
          %v836 = vand.u32 2147483647, %v324
          %v837 = vand.u32 2147483647, %v325
          %v838 = vand.u32 2147483647, %v326
          %v839 = vand.u32 2147483647, %v327
          %v840 = vand.u32 2147483647, %v328
          %v841 = vand.u32 2147483647, %v329
          %v842 = vand.u32 2147483647, %v330
          %v843 = vand.u32 2147483647, %v331
          %v844 = vand.u32 2147483647, %v332
          %v845 = vand.u32 2147483647, %v333
          %v846 = vand.u32 2147483647, %v334
          %v847 = vand.u32 2147483647, %v335
          %v848 = vand.u32 2147483647, %v336
          %v849 = vand.u32 2147483647, %v337
          %v850 = vand.u32 2147483647, %v338
          %v851 = vand.u32 2147483647, %v339
          %v852 = vand.u32 2147483647, %v340
          %v853 = vand.u32 2147483647, %v341
          %v854 = vand.u32 2147483647, %v342
          %v855 = vand.u32 2147483647, %v343
          %v856 = vand.u32 2147483647, %v344
          %v857 = vand.u32 2147483647, %v345
          %v858 = vand.u32 2147483647, %v346
          %v859 = vand.u32 2147483647, %v347
          %v860 = vand.u32 2147483647, %v348
          %v861 = vand.u32 2147483647, %v349
          %v862 = vand.u32 2147483647, %v350
          %v863 = vand.u32 2147483647, %v351
          %v864 = vand.u32 2147483647, %v352
          %v865 = vand.u32 2147483647, %v353
          %v866 = vand.u32 2147483647, %v354
          %v867 = vand.u32 2147483647, %v355
          %v868 = vand.u32 2147483647, %v356
          %v869 = vand.u32 2147483647, %v357
          %v870 = vand.u32 2147483647, %v358
          %v871 = vand.u32 2147483647, %v359
          %v872 = vand.u32 2147483647, %v360
          %v873 = vand.u32 2147483647, %v361
          %v874 = vand.u32 2147483647, %v362
          %v875 = vand.u32 2147483647, %v363
          %v876 = vand.u32 2147483647, %v364
          %v877 = vand.u32 2147483647, %v365
          %v878 = vand.u32 2147483647, %v366
          %v879 = vand.u32 2147483647, %v367
          %v880 = vand.u32 2147483647, %v368
          %v881 = vand.u32 2147483647, %v369
          %v882 = vand.u32 2147483647, %v370
          %v883 = vand.u32 2147483647, %v371
          %v884 = vand.u32 2147483647, %v372
          %v885 = vand.u32 2147483647, %v373
          %v886 = vand.u32 2147483647, %v374
          %v887 = vand.u32 2147483647, %v375
          %v888 = vand.u32 2147483647, %v376
          %v889 = vand.u32 2147483647, %v377
          %v890 = vand.u32 2147483647, %v378
          %v891 = vand.u32 2147483647, %v379
          %v892 = vand.u32 2147483647, %v380
          %v893 = vand.u32 2147483647, %v381
          %v894 = vand.u32 2147483647, %v382
          %v895 = vand.u32 2147483647, %v383
          %v896 = vand.u32 2147483647, %v384
          %v897 = vand.u32 2147483647, %v385
          %v898 = vand.u32 2147483647, %v386
          %v899 = vand.u32 2147483647, %v387
          %v900 = vand.u32 2147483647, %v388
          %v901 = vand.u32 2147483647, %v389
          %v902 = vand.u32 2147483647, %v390
          %v903 = vand.u32 2147483647, %v391
          %v904 = vand.u32 2147483647, %v392
          %v905 = vand.u32 2147483647, %v393
          %v906 = vand.u32 2147483647, %v394
          %v907 = vand.u32 2147483647, %v395
          %v908 = vand.u32 2147483647, %v396
          %v909 = vand.u32 2147483647, %v397
          %v910 = vand.u32 2147483647, %v398
          %v911 = vand.u32 2147483647, %v399
          %v912 = vand.u32 2147483647, %v400
          %v913 = vand.u32 2147483647, %v401
          %v914 = vand.u32 2147483647, %v402
          %v915 = vand.u32 2147483647, %v403
          %v916 = vand.u32 2147483647, %v404
          %v917 = vand.u32 2147483647, %v405
          %v918 = vand.u32 2147483647, %v406
          %v919 = vand.u32 2147483647, %v407
          %v920 = vand.u32 2147483647, %v408
          %v921 = vand.u32 2147483647, %v409
          %v922 = vand.u32 2147483647, %v410
          %v923 = vand.u32 2147483647, %v411
          %v924 = vand.u32 2147483647, %v412
          %v925 = vand.u32 2147483647, %v413
          %v926 = vand.u32 2147483647, %v414
          %v927 = vand.u32 2147483647, %v415
          %v928 = vand.u32 2147483647, %v416
          %v929 = vand.u32 2147483647, %v417
          %v930 = vand.u32 2147483647, %v418
          %v931 = vand.u32 2147483647, %v419
          %v932 = vand.u32 2147483647, %v420
          %v933 = vand.u32 2147483647, %v421
          %v934 = vand.u32 2147483647, %v422
          %v935 = vand.u32 2147483647, %v423
          %v936 = vand.u32 2147483647, %v424
          %v937 = vand.u32 2147483647, %v425
          %v938 = vand.u32 2147483647, %v426
          %v939 = vand.u32 2147483647, %v427
          %v940 = vand.u32 2147483647, %v428
          %v941 = vand.u32 2147483647, %v429
          %v942 = vand.u32 2147483647, %v430
          %v943 = vand.u32 2147483647, %v431
          %v944 = vand.u32 2147483647, %v432
          %v945 = vand.u32 2147483647, %v433
          %v946 = vand.u32 2147483647, %v434
          %v947 = vand.u32 2147483647, %v435
          %v948 = vand.u32 2147483647, %v436
          %v949 = vand.u32 2147483647, %v437
          %v950 = vand.u32 2147483647, %v438
          %v951 = vand.u32 2147483647, %v439
          %v952 = vand.u32 2147483647, %v440
          %v953 = vand.u32 2147483647, %v441
          %v954 = vand.u32 2147483647, %v442
          %v955 = vand.u32 2147483647, %v443
          %v956 = vand.u32 2147483647, %v444
          %v957 = vand.u32 2147483647, %v445
          %v958 = vand.u32 2147483647, %v446
          %v959 = vand.u32 2147483647, %v447
          %v960 = vand.u32 2147483647, %v448
          %v961 = vand.u32 2147483647, %v449
          %v962 = vand.u32 2147483647, %v450
          %v963 = vand.u32 2147483647, %v451
          %v964 = vand.u32 2147483647, %v452
          %v965 = vand.u32 2147483647, %v453
          %v966 = vand.u32 2147483647, %v454
          %v967 = vand.u32 2147483647, %v455
          %v968 = vand.u32 2147483647, %v456
          %v969 = vand.u32 2147483647, %v457
          %v970 = vand.u32 2147483647, %v458
          %v971 = vand.u32 2147483647, %v459
          %v972 = vand.u32 2147483647, %v460
          %v973 = vand.u32 2147483647, %v461
          %v974 = vand.u32 2147483647, %v462
          %v975 = vand.u32 2147483647, %v463
          %v976 = vand.u32 2147483647, %v464
          %v977 = vand.u32 2147483647, %v465
          %v978 = vand.u32 2147483647, %v466
          %v979 = vand.u32 2147483647, %v467
          %v980 = vand.u32 2147483647, %v468
          %v981 = vand.u32 2147483647, %v469
          %v982 = vand.u32 2147483647, %v470
          %v983 = vand.u32 2147483647, %v471
          %v984 = vand.u32 2147483647, %v472
          %v985 = vand.u32 2147483647, %v473
          %v986 = vand.u32 2147483647, %v474
          %v987 = vand.u32 2147483647, %v475
          %v988 = vand.u32 2147483647, %v476
          %v989 = vand.u32 2147483647, %v477
          %v990 = vand.u32 2147483647, %v478
          %v991 = vand.u32 2147483647, %v479
          %v992 = vand.u32 2147483647, %v480
          %v993 = vand.u32 2147483647, %v481
          %v994 = vand.u32 2147483647, %v482
          %v995 = vand.u32 2147483647, %v483
          %v996 = vand.u32 2147483647, %v484
          %v997 = vand.u32 2147483647, %v485
          %v998 = vand.u32 2147483647, %v486
          %v999 = vand.u32 2147483647, %v487
          %v1000 = vand.u32 2147483647, %v488
          %v1001 = vand.u32 2147483647, %v489
          %v1002 = vand.u32 2147483647, %v490
          %v1003 = vand.u32 2147483647, %v491
          %v1004 = vand.u32 2147483647, %v492
          %v1005 = vand.u32 2147483647, %v493
          %v1006 = vand.u32 2147483647, %v494
          %v1007 = vand.u32 2147483647, %v495
          %v1008 = vand.u32 2147483647, %v496
          %v1009 = vand.u32 2147483647, %v497
          %v1010 = vand.u32 2147483647, %v498
          %v1011 = vand.u32 2147483647, %v499
          %v1012 = vand.u32 2147483647, %v500
          %v1013 = vand.u32 2147483647, %v501
          %v1014 = vand.u32 2147483647, %v502
          %v1015 = vand.u32 2147483647, %v503
          %v1016 = vand.u32 2147483647, %v504
          %v1017 = vand.u32 2147483647, %v505
          %v1018 = vand.u32 2147483647, %v506
          %v1019 = vand.u32 2147483647, %v507
          %v1020 = vand.u32 2147483647, %v508
          %v1021 = vand.u32 2147483647, %v509
          %v1022 = vand.u32 2147483647, %v510
          %v1023 = vand.u32 2147483647, %v511
          %v1024 = vand.u32 2147483647, %v512
          %v1025 = vand.u32 2147483647, %v513
          %v1026 = vand.u32 2147483647, %v514
          %v1027 = vand.u32 2147483647, %v515
          %v1028 = vand.u32 2147483647, %v516
          %v1029 = vand.u32 2147483647, %v517
          %v1030 = vand.u32 2147483647, %v518
          %v1031 = vand.u32 2147483647, %v519
          %v1032 = vand.u32 2147483647, %v520
          %v1033 = vand.u32 2147483647, %v521
          %v1034 = vand.u32 2147483647, %v522
          %v1035 = vand.u32 2147483647, %v523
          %v1036 = vand.u32 2147483647, %v524
          %v1037 = vand.u32 2147483647, %v525
          %v1038 = vand.u32 2147483647, %v526
          %v1039 = vand.u32 2147483647, %v527
          %v1040 = vand.u32 2147483647, %v528
          %v1041 = vand.u32 2147483647, %v529
          %v1042 = vand.u32 2147483647, %v530
          %v1043 = vand.u32 2147483647, %v531
          %v1044 = vand.u32 2147483647, %v532
          %v1045 = vand.u32 2147483647, %v533
          %v1046 = vand.u32 2147483647, %v534
          %v1047 = vand.u32 2147483647, %v535
          %v1048 = vand.u32 2147483647, %v536
          %v1049 = vand.u32 2147483647, %v537
          %v1050 = vand.u32 2147483647, %v538
          %v1051 = vand.u32 2147483647, %v539
          %v1052 = vand.u32 2147483647, %v540
          %v1053 = vand.u32 2147483647, %v541
          %v1054 = vand.u32 2147483647, %v542
          %v1055 = vand.u32 2147483647, %v543
          %v1056 = vand.u32 2147483647, %v544
          %v1057 = vand.u32 2147483647, %v545
          %v1058 = vand.u32 2147483647, %v546
          %v1059 = vand.u32 2147483647, %v547
          %v1060 = vand.u32 2147483647, %v548
          %v1061 = vand.u32 2147483647, %v549
          %v1062 = vand.u32 2147483647, %v550
          %v1063 = vand.u32 2147483647, %v551
          %v1064 = vand.u32 2147483647, %v552
          %v1065 = vand.u32 2147483647, %v553
          %v1066 = vand.u32 2147483647, %v554
          %v1067 = vand.u32 2147483647, %v555
          %v1068 = vand.u32 2147483647, %v556
          %v1069 = vand.u32 2147483647, %v557
          %v1070 = vand.u32 2147483647, %v558
          %v1071 = vand.u32 2147483647, %v559
          %v1072 = vand.u32 2147483647, %v560
          %v1073 = vand.u32 2147483647, %v561
          %v1074 = vand.u32 2147483647, %v562
          %v1075 = vand.u32 2147483647, %v563
          %v1076 = vand.u32 2147483647, %v564
          %v1077 = vand.u32 2147483647, %v565
          %v1078 = vand.u32 2147483647, %v566
          %v1079 = vand.u32 2147483647, %v567
          %v1080 = vand.u32 2147483647, %v568
          %v1081 = vand.u32 2147483647, %v569
          %v1082 = vand.u32 2147483647, %v570
          %v1083 = vand.u32 2147483647, %v571
          %v1084 = vand.u32 2147483647, %v572
          %v1085 = vand.u32 2147483647, %v573
          %v1086 = vand.u32 2147483647, %v574
          %v1087 = vand.u32 2147483647, %v575
          %v1088 = vand.u32 2147483647, %v576
          %v1089 = vand.u32 2147483647, %v577
          %v1090 = vand.u32 2147483647, %v578
          %v1091 = vand.u32 2147483647, %v579
          %v1092 = vand.u32 2147483647, %v580
          %v1093 = vand.u32 2147483647, %v581
          %v1094 = vand.u32 2147483647, %v582
          %v1095 = vand.u32 2147483647, %v583
          %v1096 = vand.u32 2147483647, %v584
          %v1097 = vand.u32 2147483647, %v585
          %v1098 = vand.u32 2147483647, %v586
          %v1099 = vand.u32 2147483647, %v587
          %v1100 = vand.u32 2147483647, %v588
          %v1101 = vand.u32 2147483647, %v589
          %v1102 = vand.u32 2147483647, %v590
          %v1103 = vand.u32 2147483647, %v591
          %v1104 = vand.u32 2147483647, %v592
          %v1105 = vand.u32 2147483647, %v593
          %v1106 = vand.u32 2147483647, %v594
          %v1107 = vand.u32 2147483647, %v595
          %v1108 = vand.u32 2147483647, %v596
          %v1109 = vand.u32 2147483647, %v597
          %v1110 = vand.u32 2147483647, %v598
          %v1111 = vand.u32 2147483647, %v599
          %v1112 = vand.u32 2147483647, %v600
          %v1113 = vand.u32 2147483647, %v601
          %v1114 = vand.u32 2147483647, %v602
          %v1115 = vand.u32 2147483647, %v603
          %v1116 = vand.u32 2147483647, %v604
          %v1117 = vand.u32 2147483647, %v605
          %v1118 = vand.u32 2147483647, %v606
          %v1119 = vand.u32 2147483647, %v607
          %v1120 = vand.u32 2147483647, %v608
          %v1121 = vand.u32 2147483647, %v609
          %v1122 = vand.u32 2147483647, %v610
          %v1123 = vand.u32 2147483647, %v611
          %v1124 = vand.u32 2147483647, %v612
          %v1125 = vand.u32 2147483647, %v613
          %v1126 = vand.u32 2147483647, %v614
          %v1127 = vand.u32 2147483647, %v615
          %v1128 = vand.u32 2147483647, %v616
          %v1129 = vand.u32 2147483647, %v617
          %v1130 = vand.u32 2147483647, %v618
          %v1131 = vand.u32 2147483647, %v619
          %v1132 = vand.u32 2147483647, %v620
          %v1133 = vand.u32 2147483647, %v621
          %v1134 = vand.u32 2147483647, %v622
          %v1135 = vand.u32 2147483647, %v623
          %v1136 = vand.u32 2147483647, %v624
          %v1137 = vand.u32 2147483647, %v625
          %v1138 = vand.u32 2147483647, %v626
          %v1139 = vand.u32 2147483647, %v627
          %v1140 = vand.u32 2147483647, %v628
          %v1141 = vand.u32 2147483647, %v629
          %v1142 = vand.u32 2147483647, %v630
          %v1143 = vand.u32 2147483647, %v631
          %v1144 = vand.u32 2147483647, %v632
          %v1145 = vand.u32 2147483647, %v633
          %v1146 = vand.u32 2147483647, %v634
          %v1147 = vand.u32 2147483647, %v635
          %v1148 = vand.u32 2147483647, %v636
          %v1149 = vand.u32 2147483647, %v637
          %v1150 = vand.u32 2147483647, %v638
          %v1151 = vand.u32 2147483647, %v639
          %v1152 = vand.u32 2147483647, %v640
          %v1153 = vand.u32 2147483647, %v641
          %v1154 = vand.u32 2147483647, %v642
          %v1155 = vand.u32 2147483647, %v643
          %v1156 = vand.u32 2147483647, %v644
          %v1157 = vand.u32 2147483647, %v645
          %v1158 = vand.u32 2147483647, %v646
          %v1159 = vand.u32 2147483647, %v647
          %v1160 = vand.u32 2147483647, %v648
          %v1161 = vand.u32 2147483647, %v649
          %v1162 = vand.u32 2147483647, %v650
          %v1163 = vand.u32 2147483647, %v651
          %v1164 = vand.u32 2147483647, %v652
          %v1165 = vand.u32 2147483647, %v653
          %v1166 = vand.u32 2147483647, %v654
          %v1167 = vand.u32 2147483647, %v655
          %v1168 = vand.u32 2147483647, %v656
          %v1169 = vand.u32 2147483647, %v657
          %v1170 = vand.u32 2147483647, %v658
          %v1171 = vand.u32 2147483647, %v659
          %v1172 = vand.u32 2147483647, %v660
          %v1173 = vand.u32 2147483647, %v661
          %v1174 = vand.u32 2147483647, %v662
          %v1175 = vand.u32 2147483647, %v663
          %v1176 = vand.u32 2147483647, %v664
          %v1177 = vand.u32 2147483647, %v665
          %v1178 = vand.u32 2147483647, %v666
          %v1179 = vand.u32 2147483647, %v667
          %v1180 = vand.u32 2147483647, %v668
          %v1181 = vand.u32 2147483647, %v669
          %v1182 = vand.u32 2147483647, %v670
          %v1183 = vand.u32 2147483647, %v671
          %v1184 = vand.u32 2147483647, %v672
          %v1185 = vand.u32 2147483647, %v673
          %v1186 = vand.u32 2147483647, %v674
          %v1187 = vand.u32 2147483647, %v675
          %v1188 = vand.u32 2147483647, %v676
          %v1189 = vand.u32 2147483647, %v677
          %v1190 = vand.u32 2147483647, %v678
          %v1191 = vand.u32 2147483647, %v679
          %v1192 = vand.u32 2147483647, %v680
          %v1193 = vand.u32 2147483647, %v681
          %v1194 = vand.u32 2147483647, %v682
          %v1195 = vand.u32 2147483647, %v683
          %v1196 = vand.u32 2147483647, %v684
          %v1197 = vand.u32 2147483647, %v685
          %v1198 = vand.u32 2147483647, %v686
          %v1199 = vand.u32 2147483647, %v687
          %v1200 = vand.u32 2147483647, %v688
          %v1201 = vand.u32 2147483647, %v689
          %v1202 = vand.u32 2147483647, %v690
          %v1203 = vand.u32 2147483647, %v691
          %v1204 = vand.u32 2147483647, %v692
          %v1205 = vand.u32 2147483647, %v693
          %v1206 = vand.u32 2147483647, %v694
          %v1207 = vand.u32 2147483647, %v695
          %v1208 = vand.u32 2147483647, %v696
          %v1209 = vand.u32 2147483647, %v697
          %v1210 = vand.u32 2147483647, %v698
          %v1211 = vld [vmem:[%s158] sm:$0xff]
          %v1212 = vld [vmem:[%s158 + $0x8] sm:$0xff]
          %v1213 = vld [vmem:[%s158 + $0x10] sm:$0xff]
          %v1214 = vld [vmem:[%s158 + $0x18] sm:$0xff]
          %v1215 = vld [vmem:[%s158 + $0x20] sm:$0xff]
          %v1216 = vld [vmem:[%s158 + $0x28] sm:$0xff]
          %v1217 = vld [vmem:[%s158 + $0x30] sm:$0xff]
          %v1218 = vld [vmem:[%s158 + $0x38] sm:$0xff]
          %v1219 = vadd.f32 %v699, %v707
          %v1220 = vadd.f32 %v1219, %v715
          %v1221 = vadd.f32 %v1220, %v723
          %v1222 = vadd.f32 %v1221, %v731
          %v1223 = vadd.f32 %v1222, %v739
          %v1224 = vadd.f32 %v1223, %v747
          %v1225 = vadd.f32 %v1224, %v755
          %v1226 = vadd.f32 %v1225, %v763
          %v1227 = vadd.f32 %v1226, %v771
          %v1228 = vadd.f32 %v1227, %v779
          %v1229 = vadd.f32 %v1228, %v787
          %v1230 = vadd.f32 %v1229, %v795
          %v1231 = vadd.f32 %v1230, %v803
          %v1232 = vadd.f32 %v1231, %v811
          %v1233 = vadd.f32 %v1232, %v819
          %v1234 = vadd.f32 %v1233, %v827
          %v1235 = vadd.f32 %v1234, %v835
          %v1236 = vadd.f32 %v1235, %v843
          %v1237 = vadd.f32 %v1236, %v851
          %v1238 = vadd.f32 %v1237, %v859
          %v1239 = vadd.f32 %v1238, %v867
          %v1240 = vadd.f32 %v1239, %v875
          %v1241 = vadd.f32 %v1240, %v883
          %v1242 = vadd.f32 %v1241, %v891
          %v1243 = vadd.f32 %v1242, %v899
          %v1244 = vadd.f32 %v1243, %v907
          %v1245 = vadd.f32 %v1244, %v915
          %v1246 = vadd.f32 %v1245, %v923
          %v1247 = vadd.f32 %v1246, %v931
          %v1248 = vadd.f32 %v1247, %v939
          %v1249 = vadd.f32 %v1248, %v947
          %v1250 = vadd.f32 %v1249, %v955
          %v1251 = vadd.f32 %v1250, %v963
          %v1252 = vadd.f32 %v1251, %v971
          %v1253 = vadd.f32 %v1252, %v979
          %v1254 = vadd.f32 %v1253, %v987
          %v1255 = vadd.f32 %v1254, %v995
          %v1256 = vadd.f32 %v1255, %v1003
          %v1257 = vadd.f32 %v1256, %v1011
          %v1258 = vadd.f32 %v1257, %v1019
          %v1259 = vadd.f32 %v1258, %v1027
          %v1260 = vadd.f32 %v1259, %v1035
          %v1261 = vadd.f32 %v1260, %v1043
          %v1262 = vadd.f32 %v1261, %v1051
          %v1263 = vadd.f32 %v1262, %v1059
          %v1264 = vadd.f32 %v1263, %v1067
          %v1265 = vadd.f32 %v1264, %v1075
          %v1266 = vadd.f32 %v1265, %v1083
          %v1267 = vadd.f32 %v1266, %v1091
          %v1268 = vadd.f32 %v1267, %v1099
          %v1269 = vadd.f32 %v1268, %v1107
          %v1270 = vadd.f32 %v1269, %v1115
          %v1271 = vadd.f32 %v1270, %v1123
          %v1272 = vadd.f32 %v1271, %v1131
          %v1273 = vadd.f32 %v1272, %v1139
          %v1274 = vadd.f32 %v1273, %v1147
          %v1275 = vadd.f32 %v1274, %v1155
          %v1276 = vadd.f32 %v1275, %v1163
          %v1277 = vadd.f32 %v1276, %v1171
          %v1278 = vadd.f32 %v1277, %v1179
          %v1279 = vadd.f32 %v1278, %v1187
          %v1280 = vadd.f32 %v1279, %v1195
          %v1281 = vadd.f32 %v1280, %v1203
          %v1282 = vadd.f32 %v700, %v708
          %v1283 = vadd.f32 %v1282, %v716
          %v1284 = vadd.f32 %v1283, %v724
          %v1285 = vadd.f32 %v1284, %v732
          %v1286 = vadd.f32 %v1285, %v740
          %v1287 = vadd.f32 %v1286, %v748
          %v1288 = vadd.f32 %v1287, %v756
          %v1289 = vadd.f32 %v1288, %v764
          %v1290 = vadd.f32 %v1289, %v772
          %v1291 = vadd.f32 %v1290, %v780
          %v1292 = vadd.f32 %v1291, %v788
          %v1293 = vadd.f32 %v1292, %v796
          %v1294 = vadd.f32 %v1293, %v804
          %v1295 = vadd.f32 %v1294, %v812
          %v1296 = vadd.f32 %v1295, %v820
          %v1297 = vadd.f32 %v1296, %v828
          %v1298 = vadd.f32 %v1297, %v836
          %v1299 = vadd.f32 %v1298, %v844
          %v1300 = vadd.f32 %v1299, %v852
          %v1301 = vadd.f32 %v1300, %v860
          %v1302 = vadd.f32 %v1301, %v868
          %v1303 = vadd.f32 %v1302, %v876
          %v1304 = vadd.f32 %v1303, %v884
          %v1305 = vadd.f32 %v1304, %v892
          %v1306 = vadd.f32 %v1305, %v900
          %v1307 = vadd.f32 %v1306, %v908
          %v1308 = vadd.f32 %v1307, %v916
          %v1309 = vadd.f32 %v1308, %v924
          %v1310 = vadd.f32 %v1309, %v932
          %v1311 = vadd.f32 %v1310, %v940
          %v1312 = vadd.f32 %v1311, %v948
          %v1313 = vadd.f32 %v1312, %v956
          %v1314 = vadd.f32 %v1313, %v964
          %v1315 = vadd.f32 %v1314, %v972
          %v1316 = vadd.f32 %v1315, %v980
          %v1317 = vadd.f32 %v1316, %v988
          %v1318 = vadd.f32 %v1317, %v996
          %v1319 = vadd.f32 %v1318, %v1004
          %v1320 = vadd.f32 %v1319, %v1012
          %v1321 = vadd.f32 %v1320, %v1020
          %v1322 = vadd.f32 %v1321, %v1028
          %v1323 = vadd.f32 %v1322, %v1036
          %v1324 = vadd.f32 %v1323, %v1044
          %v1325 = vadd.f32 %v1324, %v1052
          %v1326 = vadd.f32 %v1325, %v1060
          %v1327 = vadd.f32 %v1326, %v1068
          %v1328 = vadd.f32 %v1327, %v1076
          %v1329 = vadd.f32 %v1328, %v1084
          %v1330 = vadd.f32 %v1329, %v1092
          %v1331 = vadd.f32 %v1330, %v1100
          %v1332 = vadd.f32 %v1331, %v1108
          %v1333 = vadd.f32 %v1332, %v1116
          %v1334 = vadd.f32 %v1333, %v1124
          %v1335 = vadd.f32 %v1334, %v1132
          %v1336 = vadd.f32 %v1335, %v1140
          %v1337 = vadd.f32 %v1336, %v1148
          %v1338 = vadd.f32 %v1337, %v1156
          %v1339 = vadd.f32 %v1338, %v1164
          %v1340 = vadd.f32 %v1339, %v1172
          %v1341 = vadd.f32 %v1340, %v1180
          %v1342 = vadd.f32 %v1341, %v1188
          %v1343 = vadd.f32 %v1342, %v1196
          %v1344 = vadd.f32 %v1343, %v1204
          %v1345 = vadd.f32 %v701, %v709
          %v1346 = vadd.f32 %v1345, %v717
          %v1347 = vadd.f32 %v1346, %v725
          %v1348 = vadd.f32 %v1347, %v733
          %v1349 = vadd.f32 %v1348, %v741
          %v1350 = vadd.f32 %v1349, %v749
          %v1351 = vadd.f32 %v1350, %v757
          %v1352 = vadd.f32 %v1351, %v765
          %v1353 = vadd.f32 %v1352, %v773
          %v1354 = vadd.f32 %v1353, %v781
          %v1355 = vadd.f32 %v1354, %v789
          %v1356 = vadd.f32 %v1355, %v797
          %v1357 = vadd.f32 %v1356, %v805
          %v1358 = vadd.f32 %v1357, %v813
          %v1359 = vadd.f32 %v1358, %v821
          %v1360 = vadd.f32 %v1359, %v829
          %v1361 = vadd.f32 %v1360, %v837
          %v1362 = vadd.f32 %v1361, %v845
          %v1363 = vadd.f32 %v1362, %v853
          %v1364 = vadd.f32 %v1363, %v861
          %v1365 = vadd.f32 %v1364, %v869
          %v1366 = vadd.f32 %v1365, %v877
          %v1367 = vadd.f32 %v1366, %v885
          %v1368 = vadd.f32 %v1367, %v893
          %v1369 = vadd.f32 %v1368, %v901
          %v1370 = vadd.f32 %v1369, %v909
          %v1371 = vadd.f32 %v1370, %v917
          %v1372 = vadd.f32 %v1371, %v925
          %v1373 = vadd.f32 %v1372, %v933
          %v1374 = vadd.f32 %v1373, %v941
          %v1375 = vadd.f32 %v1374, %v949
          %v1376 = vadd.f32 %v1375, %v957
          %v1377 = vadd.f32 %v1376, %v965
          %v1378 = vadd.f32 %v1377, %v973
          %v1379 = vadd.f32 %v1378, %v981
          %v1380 = vadd.f32 %v1379, %v989
          %v1381 = vadd.f32 %v1380, %v997
          %v1382 = vadd.f32 %v1381, %v1005
          %v1383 = vadd.f32 %v1382, %v1013
          %v1384 = vadd.f32 %v1383, %v1021
          %v1385 = vadd.f32 %v1384, %v1029
          %v1386 = vadd.f32 %v1385, %v1037
          %v1387 = vadd.f32 %v1386, %v1045
          %v1388 = vadd.f32 %v1387, %v1053
          %v1389 = vadd.f32 %v1388, %v1061
          %v1390 = vadd.f32 %v1389, %v1069
          %v1391 = vadd.f32 %v1390, %v1077
          %v1392 = vadd.f32 %v1391, %v1085
          %v1393 = vadd.f32 %v1392, %v1093
          %v1394 = vadd.f32 %v1393, %v1101
          %v1395 = vadd.f32 %v1394, %v1109
          %v1396 = vadd.f32 %v1395, %v1117
          %v1397 = vadd.f32 %v1396, %v1125
          %v1398 = vadd.f32 %v1397, %v1133
          %v1399 = vadd.f32 %v1398, %v1141
          %v1400 = vadd.f32 %v1399, %v1149
          %v1401 = vadd.f32 %v1400, %v1157
          %v1402 = vadd.f32 %v1401, %v1165
          %v1403 = vadd.f32 %v1402, %v1173
          %v1404 = vadd.f32 %v1403, %v1181
          %v1405 = vadd.f32 %v1404, %v1189
          %v1406 = vadd.f32 %v1405, %v1197
          %v1407 = vadd.f32 %v1406, %v1205
          %v1408 = vadd.f32 %v702, %v710
          %v1409 = vadd.f32 %v1408, %v718
          %v1410 = vadd.f32 %v1409, %v726
          %v1411 = vadd.f32 %v1410, %v734
          %v1412 = vadd.f32 %v1411, %v742
          %v1413 = vadd.f32 %v1412, %v750
          %v1414 = vadd.f32 %v1413, %v758
          %v1415 = vadd.f32 %v1414, %v766
          %v1416 = vadd.f32 %v1415, %v774
          %v1417 = vadd.f32 %v1416, %v782
          %v1418 = vadd.f32 %v1417, %v790
          %v1419 = vadd.f32 %v1418, %v798
          %v1420 = vadd.f32 %v1419, %v806
          %v1421 = vadd.f32 %v1420, %v814
          %v1422 = vadd.f32 %v1421, %v822
          %v1423 = vadd.f32 %v1422, %v830
          %v1424 = vadd.f32 %v1423, %v838
          %v1425 = vadd.f32 %v1424, %v846
          %v1426 = vadd.f32 %v1425, %v854
          %v1427 = vadd.f32 %v1426, %v862
          %v1428 = vadd.f32 %v1427, %v870
          %v1429 = vadd.f32 %v1428, %v878
          %v1430 = vadd.f32 %v1429, %v886
          %v1431 = vadd.f32 %v1430, %v894
          %v1432 = vadd.f32 %v1431, %v902
          %v1433 = vadd.f32 %v1432, %v910
          %v1434 = vadd.f32 %v1433, %v918
          %v1435 = vadd.f32 %v1434, %v926
          %v1436 = vadd.f32 %v1435, %v934
          %v1437 = vadd.f32 %v1436, %v942
          %v1438 = vadd.f32 %v1437, %v950
          %v1439 = vadd.f32 %v1438, %v958
          %v1440 = vadd.f32 %v1439, %v966
          %v1441 = vadd.f32 %v1440, %v974
          %v1442 = vadd.f32 %v1441, %v982
          %v1443 = vadd.f32 %v1442, %v990
          %v1444 = vadd.f32 %v1443, %v998
          %v1445 = vadd.f32 %v1444, %v1006
          %v1446 = vadd.f32 %v1445, %v1014
          %v1447 = vadd.f32 %v1446, %v1022
          %v1448 = vadd.f32 %v1447, %v1030
          %v1449 = vadd.f32 %v1448, %v1038
          %v1450 = vadd.f32 %v1449, %v1046
          %v1451 = vadd.f32 %v1450, %v1054
          %v1452 = vadd.f32 %v1451, %v1062
          %v1453 = vadd.f32 %v1452, %v1070
          %v1454 = vadd.f32 %v1453, %v1078
          %v1455 = vadd.f32 %v1454, %v1086
          %v1456 = vadd.f32 %v1455, %v1094
          %v1457 = vadd.f32 %v1456, %v1102
          %v1458 = vadd.f32 %v1457, %v1110
          %v1459 = vadd.f32 %v1458, %v1118
          %v1460 = vadd.f32 %v1459, %v1126
          %v1461 = vadd.f32 %v1460, %v1134
          %v1462 = vadd.f32 %v1461, %v1142
          %v1463 = vadd.f32 %v1462, %v1150
          %v1464 = vadd.f32 %v1463, %v1158
          %v1465 = vadd.f32 %v1464, %v1166
          %v1466 = vadd.f32 %v1465, %v1174
          %v1467 = vadd.f32 %v1466, %v1182
          %v1468 = vadd.f32 %v1467, %v1190
          %v1469 = vadd.f32 %v1468, %v1198
          %v1470 = vadd.f32 %v1469, %v1206
          %v1471 = vadd.f32 %v703, %v711
          %v1472 = vadd.f32 %v1471, %v719
          %v1473 = vadd.f32 %v1472, %v727
          %v1474 = vadd.f32 %v1473, %v735
          %v1475 = vadd.f32 %v1474, %v743
          %v1476 = vadd.f32 %v1475, %v751
          %v1477 = vadd.f32 %v1476, %v759
          %v1478 = vadd.f32 %v1477, %v767
          %v1479 = vadd.f32 %v1478, %v775
          %v1480 = vadd.f32 %v1479, %v783
          %v1481 = vadd.f32 %v1480, %v791
          %v1482 = vadd.f32 %v1481, %v799
          %v1483 = vadd.f32 %v1482, %v807
          %v1484 = vadd.f32 %v1483, %v815
          %v1485 = vadd.f32 %v1484, %v823
          %v1486 = vadd.f32 %v1485, %v831
          %v1487 = vadd.f32 %v1486, %v839
          %v1488 = vadd.f32 %v1487, %v847
          %v1489 = vadd.f32 %v1488, %v855
          %v1490 = vadd.f32 %v1489, %v863
          %v1491 = vadd.f32 %v1490, %v871
          %v1492 = vadd.f32 %v1491, %v879
          %v1493 = vadd.f32 %v1492, %v887
          %v1494 = vadd.f32 %v1493, %v895
          %v1495 = vadd.f32 %v1494, %v903
          %v1496 = vadd.f32 %v1495, %v911
          %v1497 = vadd.f32 %v1496, %v919
          %v1498 = vadd.f32 %v1497, %v927
          %v1499 = vadd.f32 %v1498, %v935
          %v1500 = vadd.f32 %v1499, %v943
          %v1501 = vadd.f32 %v1500, %v951
          %v1502 = vadd.f32 %v1501, %v959
          %v1503 = vadd.f32 %v1502, %v967
          %v1504 = vadd.f32 %v1503, %v975
          %v1505 = vadd.f32 %v1504, %v983
          %v1506 = vadd.f32 %v1505, %v991
          %v1507 = vadd.f32 %v1506, %v999
          %v1508 = vadd.f32 %v1507, %v1007
          %v1509 = vadd.f32 %v1508, %v1015
          %v1510 = vadd.f32 %v1509, %v1023
          %v1511 = vadd.f32 %v1510, %v1031
          %v1512 = vadd.f32 %v1511, %v1039
          %v1513 = vadd.f32 %v1512, %v1047
          %v1514 = vadd.f32 %v1513, %v1055
          %v1515 = vadd.f32 %v1514, %v1063
          %v1516 = vadd.f32 %v1515, %v1071
          %v1517 = vadd.f32 %v1516, %v1079
          %v1518 = vadd.f32 %v1517, %v1087
          %v1519 = vadd.f32 %v1518, %v1095
          %v1520 = vadd.f32 %v1519, %v1103
          %v1521 = vadd.f32 %v1520, %v1111
          %v1522 = vadd.f32 %v1521, %v1119
          %v1523 = vadd.f32 %v1522, %v1127
          %v1524 = vadd.f32 %v1523, %v1135
          %v1525 = vadd.f32 %v1524, %v1143
          %v1526 = vadd.f32 %v1525, %v1151
          %v1527 = vadd.f32 %v1526, %v1159
          %v1528 = vadd.f32 %v1527, %v1167
          %v1529 = vadd.f32 %v1528, %v1175
          %v1530 = vadd.f32 %v1529, %v1183
          %v1531 = vadd.f32 %v1530, %v1191
          %v1532 = vadd.f32 %v1531, %v1199
          %v1533 = vadd.f32 %v1532, %v1207
          %v1534 = vadd.f32 %v704, %v712
          %v1535 = vadd.f32 %v1534, %v720
          %v1536 = vadd.f32 %v1535, %v728
          %v1537 = vadd.f32 %v1536, %v736
          %v1538 = vadd.f32 %v1537, %v744
          %v1539 = vadd.f32 %v1538, %v752
          %v1540 = vadd.f32 %v1539, %v760
          %v1541 = vadd.f32 %v1540, %v768
          %v1542 = vadd.f32 %v1541, %v776
          %v1543 = vadd.f32 %v1542, %v784
          %v1544 = vadd.f32 %v1543, %v792
          %v1545 = vadd.f32 %v1544, %v800
          %v1546 = vadd.f32 %v1545, %v808
          %v1547 = vadd.f32 %v1546, %v816
          %v1548 = vadd.f32 %v1547, %v824
          %v1549 = vadd.f32 %v1548, %v832
          %v1550 = vadd.f32 %v1549, %v840
          %v1551 = vadd.f32 %v1550, %v848
          %v1552 = vadd.f32 %v1551, %v856
          %v1553 = vadd.f32 %v1552, %v864
          %v1554 = vadd.f32 %v1553, %v872
          %v1555 = vadd.f32 %v1554, %v880
          %v1556 = vadd.f32 %v1555, %v888
          %v1557 = vadd.f32 %v1556, %v896
          %v1558 = vadd.f32 %v1557, %v904
          %v1559 = vadd.f32 %v1558, %v912
          %v1560 = vadd.f32 %v1559, %v920
          %v1561 = vadd.f32 %v1560, %v928
          %v1562 = vadd.f32 %v1561, %v936
          %v1563 = vadd.f32 %v1562, %v944
          %v1564 = vadd.f32 %v1563, %v952
          %v1565 = vadd.f32 %v1564, %v960
          %v1566 = vadd.f32 %v1565, %v968
          %v1567 = vadd.f32 %v1566, %v976
          %v1568 = vadd.f32 %v1567, %v984
          %v1569 = vadd.f32 %v1568, %v992
          %v1570 = vadd.f32 %v1569, %v1000
          %v1571 = vadd.f32 %v1570, %v1008
          %v1572 = vadd.f32 %v1571, %v1016
          %v1573 = vadd.f32 %v1572, %v1024
          %v1574 = vadd.f32 %v1573, %v1032
          %v1575 = vadd.f32 %v1574, %v1040
          %v1576 = vadd.f32 %v1575, %v1048
          %v1577 = vadd.f32 %v1576, %v1056
          %v1578 = vadd.f32 %v1577, %v1064
          %v1579 = vadd.f32 %v1578, %v1072
          %v1580 = vadd.f32 %v1579, %v1080
          %v1581 = vadd.f32 %v1580, %v1088
          %v1582 = vadd.f32 %v1581, %v1096
          %v1583 = vadd.f32 %v1582, %v1104
          %v1584 = vadd.f32 %v1583, %v1112
          %v1585 = vadd.f32 %v1584, %v1120
          %v1586 = vadd.f32 %v1585, %v1128
          %v1587 = vadd.f32 %v1586, %v1136
          %v1588 = vadd.f32 %v1587, %v1144
          %v1589 = vadd.f32 %v1588, %v1152
          %v1590 = vadd.f32 %v1589, %v1160
          %v1591 = vadd.f32 %v1590, %v1168
          %v1592 = vadd.f32 %v1591, %v1176
          %v1593 = vadd.f32 %v1592, %v1184
          %v1594 = vadd.f32 %v1593, %v1192
          %v1595 = vadd.f32 %v1594, %v1200
          %v1596 = vadd.f32 %v1595, %v1208
          %v1597 = vadd.f32 %v705, %v713
          %v1598 = vadd.f32 %v1597, %v721
          %v1599 = vadd.f32 %v1598, %v729
          %v1600 = vadd.f32 %v1599, %v737
          %v1601 = vadd.f32 %v1600, %v745
          %v1602 = vadd.f32 %v1601, %v753
          %v1603 = vadd.f32 %v1602, %v761
          %v1604 = vadd.f32 %v1603, %v769
          %v1605 = vadd.f32 %v1604, %v777
          %v1606 = vadd.f32 %v1605, %v785
          %v1607 = vadd.f32 %v1606, %v793
          %v1608 = vadd.f32 %v1607, %v801
          %v1609 = vadd.f32 %v1608, %v809
          %v1610 = vadd.f32 %v1609, %v817
          %v1611 = vadd.f32 %v1610, %v825
          %v1612 = vadd.f32 %v1611, %v833
          %v1613 = vadd.f32 %v1612, %v841
          %v1614 = vadd.f32 %v1613, %v849
          %v1615 = vadd.f32 %v1614, %v857
          %v1616 = vadd.f32 %v1615, %v865
          %v1617 = vadd.f32 %v1616, %v873
          %v1618 = vadd.f32 %v1617, %v881
          %v1619 = vadd.f32 %v1618, %v889
          %v1620 = vadd.f32 %v1619, %v897
          %v1621 = vadd.f32 %v1620, %v905
          %v1622 = vadd.f32 %v1621, %v913
          %v1623 = vadd.f32 %v1622, %v921
          %v1624 = vadd.f32 %v1623, %v929
          %v1625 = vadd.f32 %v1624, %v937
          %v1626 = vadd.f32 %v1625, %v945
          %v1627 = vadd.f32 %v1626, %v953
          %v1628 = vadd.f32 %v1627, %v961
          %v1629 = vadd.f32 %v1628, %v969
          %v1630 = vadd.f32 %v1629, %v977
          %v1631 = vadd.f32 %v1630, %v985
          %v1632 = vadd.f32 %v1631, %v993
          %v1633 = vadd.f32 %v1632, %v1001
          %v1634 = vadd.f32 %v1633, %v1009
          %v1635 = vadd.f32 %v1634, %v1017
          %v1636 = vadd.f32 %v1635, %v1025
          %v1637 = vadd.f32 %v1636, %v1033
          %v1638 = vadd.f32 %v1637, %v1041
          %v1639 = vadd.f32 %v1638, %v1049
          %v1640 = vadd.f32 %v1639, %v1057
          %v1641 = vadd.f32 %v1640, %v1065
          %v1642 = vadd.f32 %v1641, %v1073
          %v1643 = vadd.f32 %v1642, %v1081
          %v1644 = vadd.f32 %v1643, %v1089
          %v1645 = vadd.f32 %v1644, %v1097
          %v1646 = vadd.f32 %v1645, %v1105
          %v1647 = vadd.f32 %v1646, %v1113
          %v1648 = vadd.f32 %v1647, %v1121
          %v1649 = vadd.f32 %v1648, %v1129
          %v1650 = vadd.f32 %v1649, %v1137
          %v1651 = vadd.f32 %v1650, %v1145
          %v1652 = vadd.f32 %v1651, %v1153
          %v1653 = vadd.f32 %v1652, %v1161
          %v1654 = vadd.f32 %v1653, %v1169
          %v1655 = vadd.f32 %v1654, %v1177
          %v1656 = vadd.f32 %v1655, %v1185
          %v1657 = vadd.f32 %v1656, %v1193
          %v1658 = vadd.f32 %v1657, %v1201
          %v1659 = vadd.f32 %v1658, %v1209
          %v1660 = vadd.f32 %v706, %v714
          %v1661 = vadd.f32 %v1660, %v722
          %v1662 = vadd.f32 %v1661, %v730
          %v1663 = vadd.f32 %v1662, %v738
          %v1664 = vadd.f32 %v1663, %v746
          %v1665 = vadd.f32 %v1664, %v754
          %v1666 = vadd.f32 %v1665, %v762
          %v1667 = vadd.f32 %v1666, %v770
          %v1668 = vadd.f32 %v1667, %v778
          %v1669 = vadd.f32 %v1668, %v786
          %v1670 = vadd.f32 %v1669, %v794
          %v1671 = vadd.f32 %v1670, %v802
          %v1672 = vadd.f32 %v1671, %v810
          %v1673 = vadd.f32 %v1672, %v818
          %v1674 = vadd.f32 %v1673, %v826
          %v1675 = vadd.f32 %v1674, %v834
          %v1676 = vadd.f32 %v1675, %v842
          %v1677 = vadd.f32 %v1676, %v850
          %v1678 = vadd.f32 %v1677, %v858
          %v1679 = vadd.f32 %v1678, %v866
          %v1680 = vadd.f32 %v1679, %v874
          %v1681 = vadd.f32 %v1680, %v882
          %v1682 = vadd.f32 %v1681, %v890
          %v1683 = vadd.f32 %v1682, %v898
          %v1684 = vadd.f32 %v1683, %v906
          %v1685 = vadd.f32 %v1684, %v914
          %v1686 = vadd.f32 %v1685, %v922
          %v1687 = vadd.f32 %v1686, %v930
          %v1688 = vadd.f32 %v1687, %v938
          %v1689 = vadd.f32 %v1688, %v946
          %v1690 = vadd.f32 %v1689, %v954
          %v1691 = vadd.f32 %v1690, %v962
          %v1692 = vadd.f32 %v1691, %v970
          %v1693 = vadd.f32 %v1692, %v978
          %v1694 = vadd.f32 %v1693, %v986
          %v1695 = vadd.f32 %v1694, %v994
          %v1696 = vadd.f32 %v1695, %v1002
          %v1697 = vadd.f32 %v1696, %v1010
          %v1698 = vadd.f32 %v1697, %v1018
          %v1699 = vadd.f32 %v1698, %v1026
          %v1700 = vadd.f32 %v1699, %v1034
          %v1701 = vadd.f32 %v1700, %v1042
          %v1702 = vadd.f32 %v1701, %v1050
          %v1703 = vadd.f32 %v1702, %v1058
          %v1704 = vadd.f32 %v1703, %v1066
          %v1705 = vadd.f32 %v1704, %v1074
          %v1706 = vadd.f32 %v1705, %v1082
          %v1707 = vadd.f32 %v1706, %v1090
          %v1708 = vadd.f32 %v1707, %v1098
          %v1709 = vadd.f32 %v1708, %v1106
          %v1710 = vadd.f32 %v1709, %v1114
          %v1711 = vadd.f32 %v1710, %v1122
          %v1712 = vadd.f32 %v1711, %v1130
          %v1713 = vadd.f32 %v1712, %v1138
          %v1714 = vadd.f32 %v1713, %v1146
          %v1715 = vadd.f32 %v1714, %v1154
          %v1716 = vadd.f32 %v1715, %v1162
          %v1717 = vadd.f32 %v1716, %v1170
          %v1718 = vadd.f32 %v1717, %v1178
          %v1719 = vadd.f32 %v1718, %v1186
          %v1720 = vadd.f32 %v1719, %v1194
          %v1721 = vadd.f32 %v1720, %v1202
          %v1722 = vadd.f32 %v1721, %v1210
          %v1723 = vadd.f32 %v1211, %v1281
          %v1724 = vadd.f32 %v1212, %v1344
          %v1725 = vadd.f32 %v1213, %v1407
          %v1726 = vadd.f32 %v1214, %v1470
          %v1727 = vadd.f32 %v1215, %v1533
          %v1728 = vadd.f32 %v1216, %v1596
          %v1729 = vadd.f32 %v1217, %v1659
          %v1730 = vadd.f32 %v1218, %v1722
          %1731 = vst [vmem:[%s158] sm:$0xff] %v1723
          %1732 = vst [vmem:[%s158 + $0x8] sm:$0xff] %v1724
          %1733 = vst [vmem:[%s158 + $0x10] sm:$0xff] %v1725
          %1734 = vst [vmem:[%s158 + $0x18] sm:$0xff] %v1726
          %1735 = vst [vmem:[%s158 + $0x20] sm:$0xff] %v1727
          %1736 = vst [vmem:[%s158 + $0x28] sm:$0xff] %v1728
          %1737 = vst [vmem:[%s158 + $0x30] sm:$0xff] %v1729
          %1738 = vst [vmem:[%s158 + $0x38] sm:$0xff] %v1730
        $region36: #{tpu_custom_call.1} parent=23 // pred_fallthru
          _
        %p1739 = scmp.gt.s32.totalorder %s182, 12297
        // Predicated region
        $region37: #{tpu_custom_call.1} parent=23 // pred_check
          %p1740 = pneg %p1739
        $region38: #{tpu_custom_call.1} parent=23 // pred_check_branch
          %1742 = sbr.rel (%p1740) target = $region40
        $region39: #{tpu_custom_call.1} parent=23 // pred_region
          %v1743 = vld [vmem:[%s140] sm:$0xff]
          %v1744 = vld [vmem:[%s140 + $0x8] sm:$0xff]
          %v1745 = vld [vmem:[%s140 + $0x10] sm:$0xff]
          %v1746 = vld [vmem:[%s140 + $0x18] sm:$0xff]
          %v1747 = vld [vmem:[%s140 + $0x20] sm:$0xff]
          %v1748 = vld [vmem:[%s140 + $0x28] sm:$0xff]
          %v1749 = vld [vmem:[%s140 + $0x30] sm:$0xff]
          %v1750 = vld [vmem:[%s140 + $0x38] sm:$0xff]
          %v1751 = vld [vmem:[%s140 + $0x40] sm:$0xff]
          %v1752 = vld [vmem:[%s140 + $0x48] sm:$0xff]
          %v1753 = vld [vmem:[%s140 + $0x50] sm:$0xff]
          %v1754 = vld [vmem:[%s140 + $0x58] sm:$0xff]
          %v1755 = vld [vmem:[%s140 + $0x60] sm:$0xff]
          %v1756 = vld [vmem:[%s140 + $0x68] sm:$0xff]
          %v1757 = vld [vmem:[%s140 + $0x70] sm:$0xff]
          %v1758 = vld [vmem:[%s140 + $0x78] sm:$0xff]
          %v1759 = vld [vmem:[%s140 + $0x80] sm:$0xff]
          %v1760 = vld [vmem:[%s140 + $0x88] sm:$0xff]
          %v1761 = vld [vmem:[%s140 + $0x90] sm:$0xff]
          %v1762 = vld [vmem:[%s140 + $0x98] sm:$0xff]
          %v1763 = vld [vmem:[%s140 + $0xa0] sm:$0xff]
          %v1764 = vld [vmem:[%s140 + $0xa8] sm:$0xff]
          %v1765 = vld [vmem:[%s140 + $0xb0] sm:$0xff]
          %v1766 = vld [vmem:[%s140 + $0xb8] sm:$0xff]
          %v1767 = vld [vmem:[%s140 + $0xc0] sm:$0xff]
          %v1768 = vld [vmem:[%s140 + $0xc8] sm:$0xff]
          %v1769 = vld [vmem:[%s140 + $0xd0] sm:$0xff]
          %v1770 = vld [vmem:[%s140 + $0xd8] sm:$0xff]
          %v1771 = vld [vmem:[%s140 + $0xe0] sm:$0xff]
          %v1772 = vld [vmem:[%s140 + $0xe8] sm:$0xff]
          %v1773 = vld [vmem:[%s140 + $0xf0] sm:$0xff]
          %v1774 = vld [vmem:[%s140 + $0xf8] sm:$0xff]
          %v1775 = vld [vmem:[%s140 + $0x100] sm:$0xff]
          %v1776 = vld [vmem:[%s140 + $0x108] sm:$0xff]
          %v1777 = vld [vmem:[%s140 + $0x110] sm:$0xff]
          %v1778 = vld [vmem:[%s140 + $0x118] sm:$0xff]
          %v1779 = vld [vmem:[%s140 + $0x120] sm:$0xff]
          %v1780 = vld [vmem:[%s140 + $0x128] sm:$0xff]
          %v1781 = vld [vmem:[%s140 + $0x130] sm:$0xff]
          %v1782 = vld [vmem:[%s140 + $0x138] sm:$0xff]
          %v1783 = vld [vmem:[%s140 + $0x140] sm:$0xff]
          %v1784 = vld [vmem:[%s140 + $0x148] sm:$0xff]
          %v1785 = vld [vmem:[%s140 + $0x150] sm:$0xff]
          %v1786 = vld [vmem:[%s140 + $0x158] sm:$0xff]
          %v1787 = vld [vmem:[%s140 + $0x160] sm:$0xff]
          %v1788 = vld [vmem:[%s140 + $0x168] sm:$0xff]
          %v1789 = vld [vmem:[%s140 + $0x170] sm:$0xff]
          %v1790 = vld [vmem:[%s140 + $0x178] sm:$0xff]
          %v1791 = vld [vmem:[%s140 + $0x180] sm:$0xff]
          %v1792 = vld [vmem:[%s140 + $0x188] sm:$0xff]
          %v1793 = vld [vmem:[%s140 + $0x190] sm:$0xff]
          %v1794 = vld [vmem:[%s140 + $0x198] sm:$0xff]
          %v1795 = vld [vmem:[%s140 + $0x1a0] sm:$0xff]
          %v1796 = vld [vmem:[%s140 + $0x1a8] sm:$0xff]
          %v1797 = vld [vmem:[%s140 + $0x1b0] sm:$0xff]
          %v1798 = vld [vmem:[%s140 + $0x1b8] sm:$0xff]
          %v1799 = vld [vmem:[%s140 + $0x1c0] sm:$0xff]
          %v1800 = vld [vmem:[%s140 + $0x1c8] sm:$0xff]
          %v1801 = vld [vmem:[%s140 + $0x1d0] sm:$0xff]
          %v1802 = vld [vmem:[%s140 + $0x1d8] sm:$0xff]
          %v1803 = vld [vmem:[%s140 + $0x1e0] sm:$0xff]
          %v1804 = vld [vmem:[%s140 + $0x1e8] sm:$0xff]
          %v1805 = vld [vmem:[%s140 + $0x1f0] sm:$0xff]
          %v1806 = vld [vmem:[%s140 + $0x1f8] sm:$0xff]
          %v1807 = vld [vmem:[%s140 + $0x200] sm:$0xff]
          %v1808 = vld [vmem:[%s140 + $0x208] sm:$0xff]
          %v1809 = vld [vmem:[%s140 + $0x210] sm:$0xff]
          %v1810 = vld [vmem:[%s140 + $0x218] sm:$0xff]
          %v1811 = vld [vmem:[%s140 + $0x220] sm:$0xff]
          %v1812 = vld [vmem:[%s140 + $0x228] sm:$0xff]
          %v1813 = vld [vmem:[%s140 + $0x230] sm:$0xff]
          %v1814 = vld [vmem:[%s140 + $0x238] sm:$0xff]
          %v1815 = vld [vmem:[%s140 + $0x240] sm:$0xff]
          %v1816 = vld [vmem:[%s140 + $0x248] sm:$0xff]
          %v1817 = vld [vmem:[%s140 + $0x250] sm:$0xff]
          %v1818 = vld [vmem:[%s140 + $0x258] sm:$0xff]
          %v1819 = vld [vmem:[%s140 + $0x260] sm:$0xff]
          %v1820 = vld [vmem:[%s140 + $0x268] sm:$0xff]
          %v1821 = vld [vmem:[%s140 + $0x270] sm:$0xff]
          %v1822 = vld [vmem:[%s140 + $0x278] sm:$0xff]
          %v1823 = vld [vmem:[%s140 + $0x280] sm:$0xff]
          %v1824 = vld [vmem:[%s140 + $0x288] sm:$0xff]
          %v1825 = vld [vmem:[%s140 + $0x290] sm:$0xff]
          %v1826 = vld [vmem:[%s140 + $0x298] sm:$0xff]
          %v1827 = vld [vmem:[%s140 + $0x2a0] sm:$0xff]
          %v1828 = vld [vmem:[%s140 + $0x2a8] sm:$0xff]
          %v1829 = vld [vmem:[%s140 + $0x2b0] sm:$0xff]
          %v1830 = vld [vmem:[%s140 + $0x2b8] sm:$0xff]
          %v1831 = vld [vmem:[%s140 + $0x2c0] sm:$0xff]
          %v1832 = vld [vmem:[%s140 + $0x2c8] sm:$0xff]
          %v1833 = vld [vmem:[%s140 + $0x2d0] sm:$0xff]
          %v1834 = vld [vmem:[%s140 + $0x2d8] sm:$0xff]
          %v1835 = vld [vmem:[%s140 + $0x2e0] sm:$0xff]
          %v1836 = vld [vmem:[%s140 + $0x2e8] sm:$0xff]
          %v1837 = vld [vmem:[%s140 + $0x2f0] sm:$0xff]
          %v1838 = vld [vmem:[%s140 + $0x2f8] sm:$0xff]
          %v1839 = vld [vmem:[%s140 + $0x300] sm:$0xff]
          %v1840 = vld [vmem:[%s140 + $0x308] sm:$0xff]
          %v1841 = vld [vmem:[%s140 + $0x310] sm:$0xff]
          %v1842 = vld [vmem:[%s140 + $0x318] sm:$0xff]
          %v1843 = vld [vmem:[%s140 + $0x320] sm:$0xff]
          %v1844 = vld [vmem:[%s140 + $0x328] sm:$0xff]
          %v1845 = vld [vmem:[%s140 + $0x330] sm:$0xff]
          %v1846 = vld [vmem:[%s140 + $0x338] sm:$0xff]
          %v1847 = vld [vmem:[%s140 + $0x340] sm:$0xff]
          %v1848 = vld [vmem:[%s140 + $0x348] sm:$0xff]
          %v1849 = vld [vmem:[%s140 + $0x350] sm:$0xff]
          %v1850 = vld [vmem:[%s140 + $0x358] sm:$0xff]
          %v1851 = vld [vmem:[%s140 + $0x360] sm:$0xff]
          %v1852 = vld [vmem:[%s140 + $0x368] sm:$0xff]
          %v1853 = vld [vmem:[%s140 + $0x370] sm:$0xff]
          %v1854 = vld [vmem:[%s140 + $0x378] sm:$0xff]
          %v1855 = vld [vmem:[%s140 + $0x380] sm:$0xff]
          %v1856 = vld [vmem:[%s140 + $0x388] sm:$0xff]
          %v1857 = vld [vmem:[%s140 + $0x390] sm:$0xff]
          %v1858 = vld [vmem:[%s140 + $0x398] sm:$0xff]
          %v1859 = vld [vmem:[%s140 + $0x3a0] sm:$0xff]
          %v1860 = vld [vmem:[%s140 + $0x3a8] sm:$0xff]
          %v1861 = vld [vmem:[%s140 + $0x3b0] sm:$0xff]
          %v1862 = vld [vmem:[%s140 + $0x3b8] sm:$0xff]
          %v1863 = vld [vmem:[%s140 + $0x3c0] sm:$0xff]
          %v1864 = vld [vmem:[%s140 + $0x3c8] sm:$0xff]
          %v1865 = vld [vmem:[%s140 + $0x3d0] sm:$0xff]
          %v1866 = vld [vmem:[%s140 + $0x3d8] sm:$0xff]
          %v1867 = vld [vmem:[%s140 + $0x3e0] sm:$0xff]
          %v1868 = vld [vmem:[%s140 + $0x3e8] sm:$0xff]
          %v1869 = vld [vmem:[%s140 + $0x3f0] sm:$0xff]
          %v1870 = vld [vmem:[%s140 + $0x3f8] sm:$0xff]
          %v1871 = vld [vmem:[%s140 + $0x400] sm:$0xff]
          %v1872 = vld [vmem:[%s140 + $0x408] sm:$0xff]
          %v1873 = vld [vmem:[%s140 + $0x410] sm:$0xff]
          %v1874 = vld [vmem:[%s140 + $0x418] sm:$0xff]
          %v1875 = vld [vmem:[%s140 + $0x420] sm:$0xff]
          %v1876 = vld [vmem:[%s140 + $0x428] sm:$0xff]
          %v1877 = vld [vmem:[%s140 + $0x430] sm:$0xff]
          %v1878 = vld [vmem:[%s140 + $0x438] sm:$0xff]
          %v1879 = vld [vmem:[%s140 + $0x440] sm:$0xff]
          %v1880 = vld [vmem:[%s140 + $0x448] sm:$0xff]
          %v1881 = vld [vmem:[%s140 + $0x450] sm:$0xff]
          %v1882 = vld [vmem:[%s140 + $0x458] sm:$0xff]
          %v1883 = vld [vmem:[%s140 + $0x460] sm:$0xff]
          %v1884 = vld [vmem:[%s140 + $0x468] sm:$0xff]
          %v1885 = vld [vmem:[%s140 + $0x470] sm:$0xff]
          %v1886 = vld [vmem:[%s140 + $0x478] sm:$0xff]
          %v1887 = vld [vmem:[%s140 + $0x480] sm:$0xff]
          %v1888 = vld [vmem:[%s140 + $0x488] sm:$0xff]
          %v1889 = vld [vmem:[%s140 + $0x490] sm:$0xff]
          %v1890 = vld [vmem:[%s140 + $0x498] sm:$0xff]
          %v1891 = vld [vmem:[%s140 + $0x4a0] sm:$0xff]
          %v1892 = vld [vmem:[%s140 + $0x4a8] sm:$0xff]
          %v1893 = vld [vmem:[%s140 + $0x4b0] sm:$0xff]
          %v1894 = vld [vmem:[%s140 + $0x4b8] sm:$0xff]
          %v1895 = vld [vmem:[%s140 + $0x4c0] sm:$0xff]
          %v1896 = vld [vmem:[%s140 + $0x4c8] sm:$0xff]
          %v1897 = vld [vmem:[%s140 + $0x4d0] sm:$0xff]
          %v1898 = vld [vmem:[%s140 + $0x4d8] sm:$0xff]
          %v1899 = vld [vmem:[%s140 + $0x4e0] sm:$0xff]
          %v1900 = vld [vmem:[%s140 + $0x4e8] sm:$0xff]
          %v1901 = vld [vmem:[%s140 + $0x4f0] sm:$0xff]
          %v1902 = vld [vmem:[%s140 + $0x4f8] sm:$0xff]
          %v1903 = vld [vmem:[%s140 + $0x500] sm:$0xff]
          %v1904 = vld [vmem:[%s140 + $0x508] sm:$0xff]
          %v1905 = vld [vmem:[%s140 + $0x510] sm:$0xff]
          %v1906 = vld [vmem:[%s140 + $0x518] sm:$0xff]
          %v1907 = vld [vmem:[%s140 + $0x520] sm:$0xff]
          %v1908 = vld [vmem:[%s140 + $0x528] sm:$0xff]
          %v1909 = vld [vmem:[%s140 + $0x530] sm:$0xff]
          %v1910 = vld [vmem:[%s140 + $0x538] sm:$0xff]
          %v1911 = vld [vmem:[%s140 + $0x540] sm:$0xff]
          %v1912 = vld [vmem:[%s140 + $0x548] sm:$0xff]
          %v1913 = vld [vmem:[%s140 + $0x550] sm:$0xff]
          %v1914 = vld [vmem:[%s140 + $0x558] sm:$0xff]
          %v1915 = vld [vmem:[%s140 + $0x560] sm:$0xff]
          %v1916 = vld [vmem:[%s140 + $0x568] sm:$0xff]
          %v1917 = vld [vmem:[%s140 + $0x570] sm:$0xff]
          %v1918 = vld [vmem:[%s140 + $0x578] sm:$0xff]
          %v1919 = vld [vmem:[%s140 + $0x580] sm:$0xff]
          %v1920 = vld [vmem:[%s140 + $0x588] sm:$0xff]
          %v1921 = vld [vmem:[%s140 + $0x590] sm:$0xff]
          %v1922 = vld [vmem:[%s140 + $0x598] sm:$0xff]
          %v1923 = vld [vmem:[%s140 + $0x5a0] sm:$0xff]
          %v1924 = vld [vmem:[%s140 + $0x5a8] sm:$0xff]
          %v1925 = vld [vmem:[%s140 + $0x5b0] sm:$0xff]
          %v1926 = vld [vmem:[%s140 + $0x5b8] sm:$0xff]
          %v1927 = vld [vmem:[%s140 + $0x5c0] sm:$0xff]
          %v1928 = vld [vmem:[%s140 + $0x5c8] sm:$0xff]
          %v1929 = vld [vmem:[%s140 + $0x5d0] sm:$0xff]
          %v1930 = vld [vmem:[%s140 + $0x5d8] sm:$0xff]
          %v1931 = vld [vmem:[%s140 + $0x5e0] sm:$0xff]
          %v1932 = vld [vmem:[%s140 + $0x5e8] sm:$0xff]
          %v1933 = vld [vmem:[%s140 + $0x5f0] sm:$0xff]
          %v1934 = vld [vmem:[%s140 + $0x5f8] sm:$0xff]
          %v1935 = vld [vmem:[%s140 + $0x600] sm:$0xff]
          %v1936 = vld [vmem:[%s140 + $0x608] sm:$0xff]
          %v1937 = vld [vmem:[%s140 + $0x610] sm:$0xff]
          %v1938 = vld [vmem:[%s140 + $0x618] sm:$0xff]
          %v1939 = vld [vmem:[%s140 + $0x620] sm:$0xff]
          %v1940 = vld [vmem:[%s140 + $0x628] sm:$0xff]
          %v1941 = vld [vmem:[%s140 + $0x630] sm:$0xff]
          %v1942 = vld [vmem:[%s140 + $0x638] sm:$0xff]
          %v1943 = vld [vmem:[%s140 + $0x640] sm:$0xff]
          %v1944 = vld [vmem:[%s140 + $0x648] sm:$0xff]
          %v1945 = vld [vmem:[%s140 + $0x650] sm:$0xff]
          %v1946 = vld [vmem:[%s140 + $0x658] sm:$0xff]
          %v1947 = vld [vmem:[%s140 + $0x660] sm:$0xff]
          %v1948 = vld [vmem:[%s140 + $0x668] sm:$0xff]
          %v1949 = vld [vmem:[%s140 + $0x670] sm:$0xff]
          %v1950 = vld [vmem:[%s140 + $0x678] sm:$0xff]
          %v1951 = vld [vmem:[%s140 + $0x680] sm:$0xff]
          %v1952 = vld [vmem:[%s140 + $0x688] sm:$0xff]
          %v1953 = vld [vmem:[%s140 + $0x690] sm:$0xff]
          %v1954 = vld [vmem:[%s140 + $0x698] sm:$0xff]
          %v1955 = vld [vmem:[%s140 + $0x6a0] sm:$0xff]
          %v1956 = vld [vmem:[%s140 + $0x6a8] sm:$0xff]
          %v1957 = vld [vmem:[%s140 + $0x6b0] sm:$0xff]
          %v1958 = vld [vmem:[%s140 + $0x6b8] sm:$0xff]
          %v1959 = vld [vmem:[%s140 + $0x6c0] sm:$0xff]
          %v1960 = vld [vmem:[%s140 + $0x6c8] sm:$0xff]
          %v1961 = vld [vmem:[%s140 + $0x6d0] sm:$0xff]
          %v1962 = vld [vmem:[%s140 + $0x6d8] sm:$0xff]
          %v1963 = vld [vmem:[%s140 + $0x6e0] sm:$0xff]
          %v1964 = vld [vmem:[%s140 + $0x6e8] sm:$0xff]
          %v1965 = vld [vmem:[%s140 + $0x6f0] sm:$0xff]
          %v1966 = vld [vmem:[%s140 + $0x6f8] sm:$0xff]
          %v1967 = vld [vmem:[%s140 + $0x700] sm:$0xff]
          %v1968 = vld [vmem:[%s140 + $0x708] sm:$0xff]
          %v1969 = vld [vmem:[%s140 + $0x710] sm:$0xff]
          %v1970 = vld [vmem:[%s140 + $0x718] sm:$0xff]
          %v1971 = vld [vmem:[%s140 + $0x720] sm:$0xff]
          %v1972 = vld [vmem:[%s140 + $0x728] sm:$0xff]
          %v1973 = vld [vmem:[%s140 + $0x730] sm:$0xff]
          %v1974 = vld [vmem:[%s140 + $0x738] sm:$0xff]
          %v1975 = vld [vmem:[%s140 + $0x740] sm:$0xff]
          %v1976 = vld [vmem:[%s140 + $0x748] sm:$0xff]
          %v1977 = vld [vmem:[%s140 + $0x750] sm:$0xff]
          %v1978 = vld [vmem:[%s140 + $0x758] sm:$0xff]
          %v1979 = vld [vmem:[%s140 + $0x760] sm:$0xff]
          %v1980 = vld [vmem:[%s140 + $0x768] sm:$0xff]
          %v1981 = vld [vmem:[%s140 + $0x770] sm:$0xff]
          %v1982 = vld [vmem:[%s140 + $0x778] sm:$0xff]
          %v1983 = vld [vmem:[%s140 + $0x780] sm:$0xff]
          %v1984 = vld [vmem:[%s140 + $0x788] sm:$0xff]
          %v1985 = vld [vmem:[%s140 + $0x790] sm:$0xff]
          %v1986 = vld [vmem:[%s140 + $0x798] sm:$0xff]
          %v1987 = vld [vmem:[%s140 + $0x7a0] sm:$0xff]
          %v1988 = vld [vmem:[%s140 + $0x7a8] sm:$0xff]
          %v1989 = vld [vmem:[%s140 + $0x7b0] sm:$0xff]
          %v1990 = vld [vmem:[%s140 + $0x7b8] sm:$0xff]
          %v1991 = vld [vmem:[%s140 + $0x7c0] sm:$0xff]
          %v1992 = vld [vmem:[%s140 + $0x7c8] sm:$0xff]
          %v1993 = vld [vmem:[%s140 + $0x7d0] sm:$0xff]
          %v1994 = vld [vmem:[%s140 + $0x7d8] sm:$0xff]
          %v1995 = vld [vmem:[%s140 + $0x7e0] sm:$0xff]
          %v1996 = vld [vmem:[%s140 + $0x7e8] sm:$0xff]
          %v1997 = vld [vmem:[%s140 + $0x7f0] sm:$0xff]
          %v1998 = vld [vmem:[%s140 + $0x7f8] sm:$0xff]
          %v1999 = vld [vmem:[%s140 + $0x800] sm:$0xff]
          %v2000 = vld [vmem:[%s140 + $0x808] sm:$0xff]
          %v2001 = vld [vmem:[%s140 + $0x810] sm:$0xff]
          %v2002 = vld [vmem:[%s140 + $0x818] sm:$0xff]
          %v2003 = vld [vmem:[%s140 + $0x820] sm:$0xff]
          %v2004 = vld [vmem:[%s140 + $0x828] sm:$0xff]
          %v2005 = vld [vmem:[%s140 + $0x830] sm:$0xff]
          %v2006 = vld [vmem:[%s140 + $0x838] sm:$0xff]
          %v2007 = vld [vmem:[%s140 + $0x840] sm:$0xff]
          %v2008 = vld [vmem:[%s140 + $0x848] sm:$0xff]
          %v2009 = vld [vmem:[%s140 + $0x850] sm:$0xff]
          %v2010 = vld [vmem:[%s140 + $0x858] sm:$0xff]
          %v2011 = vld [vmem:[%s140 + $0x860] sm:$0xff]
          %v2012 = vld [vmem:[%s140 + $0x868] sm:$0xff]
          %v2013 = vld [vmem:[%s140 + $0x870] sm:$0xff]
          %v2014 = vld [vmem:[%s140 + $0x878] sm:$0xff]
          %v2015 = vld [vmem:[%s140 + $0x880] sm:$0xff]
          %v2016 = vld [vmem:[%s140 + $0x888] sm:$0xff]
          %v2017 = vld [vmem:[%s140 + $0x890] sm:$0xff]
          %v2018 = vld [vmem:[%s140 + $0x898] sm:$0xff]
          %v2019 = vld [vmem:[%s140 + $0x8a0] sm:$0xff]
          %v2020 = vld [vmem:[%s140 + $0x8a8] sm:$0xff]
          %v2021 = vld [vmem:[%s140 + $0x8b0] sm:$0xff]
          %v2022 = vld [vmem:[%s140 + $0x8b8] sm:$0xff]
          %v2023 = vld [vmem:[%s140 + $0x8c0] sm:$0xff]
          %v2024 = vld [vmem:[%s140 + $0x8c8] sm:$0xff]
          %v2025 = vld [vmem:[%s140 + $0x8d0] sm:$0xff]
          %v2026 = vld [vmem:[%s140 + $0x8d8] sm:$0xff]
          %v2027 = vld [vmem:[%s140 + $0x8e0] sm:$0xff]
          %v2028 = vld [vmem:[%s140 + $0x8e8] sm:$0xff]
          %v2029 = vld [vmem:[%s140 + $0x8f0] sm:$0xff]
          %v2030 = vld [vmem:[%s140 + $0x8f8] sm:$0xff]
          %v2031 = vld [vmem:[%s140 + $0x900] sm:$0xff]
          %v2032 = vld [vmem:[%s140 + $0x908] sm:$0xff]
          %v2033 = vld [vmem:[%s140 + $0x910] sm:$0xff]
          %v2034 = vld [vmem:[%s140 + $0x918] sm:$0xff]
          %v2035 = vld [vmem:[%s140 + $0x920] sm:$0xff]
          %v2036 = vld [vmem:[%s140 + $0x928] sm:$0xff]
          %v2037 = vld [vmem:[%s140 + $0x930] sm:$0xff]
          %v2038 = vld [vmem:[%s140 + $0x938] sm:$0xff]
          %v2039 = vld [vmem:[%s140 + $0x940] sm:$0xff]
          %v2040 = vld [vmem:[%s140 + $0x948] sm:$0xff]
          %v2041 = vld [vmem:[%s140 + $0x950] sm:$0xff]
          %v2042 = vld [vmem:[%s140 + $0x958] sm:$0xff]
          %v2043 = vld [vmem:[%s140 + $0x960] sm:$0xff]
          %v2044 = vld [vmem:[%s140 + $0x968] sm:$0xff]
          %v2045 = vld [vmem:[%s140 + $0x970] sm:$0xff]
          %v2046 = vld [vmem:[%s140 + $0x978] sm:$0xff]
          %v2047 = vld [vmem:[%s140 + $0x980] sm:$0xff]
          %v2048 = vld [vmem:[%s140 + $0x988] sm:$0xff]
          %v2049 = vld [vmem:[%s140 + $0x990] sm:$0xff]
          %v2050 = vld [vmem:[%s140 + $0x998] sm:$0xff]
          %v2051 = vld [vmem:[%s140 + $0x9a0] sm:$0xff]
          %v2052 = vld [vmem:[%s140 + $0x9a8] sm:$0xff]
          %v2053 = vld [vmem:[%s140 + $0x9b0] sm:$0xff]
          %v2054 = vld [vmem:[%s140 + $0x9b8] sm:$0xff]
          %v2055 = vld [vmem:[%s140 + $0x9c0] sm:$0xff]
          %v2056 = vld [vmem:[%s140 + $0x9c8] sm:$0xff]
          %v2057 = vld [vmem:[%s140 + $0x9d0] sm:$0xff]
          %v2058 = vld [vmem:[%s140 + $0x9d8] sm:$0xff]
          %v2059 = vld [vmem:[%s140 + $0x9e0] sm:$0xff]
          %v2060 = vld [vmem:[%s140 + $0x9e8] sm:$0xff]
          %v2061 = vld [vmem:[%s140 + $0x9f0] sm:$0xff]
          %v2062 = vld [vmem:[%s140 + $0x9f8] sm:$0xff]
          %v2063 = vld [vmem:[%s140 + $0xa00] sm:$0xff]
          %v2064 = vld [vmem:[%s140 + $0xa08] sm:$0xff]
          %v2065 = vld [vmem:[%s140 + $0xa10] sm:$0xff]
          %v2066 = vld [vmem:[%s140 + $0xa18] sm:$0xff]
          %v2067 = vld [vmem:[%s140 + $0xa20] sm:$0xff]
          %v2068 = vld [vmem:[%s140 + $0xa28] sm:$0xff]
          %v2069 = vld [vmem:[%s140 + $0xa30] sm:$0xff]
          %v2070 = vld [vmem:[%s140 + $0xa38] sm:$0xff]
          %v2071 = vld [vmem:[%s140 + $0xa40] sm:$0xff]
          %v2072 = vld [vmem:[%s140 + $0xa48] sm:$0xff]
          %v2073 = vld [vmem:[%s140 + $0xa50] sm:$0xff]
          %v2074 = vld [vmem:[%s140 + $0xa58] sm:$0xff]
          %v2075 = vld [vmem:[%s140 + $0xa60] sm:$0xff]
          %v2076 = vld [vmem:[%s140 + $0xa68] sm:$0xff]
          %v2077 = vld [vmem:[%s140 + $0xa70] sm:$0xff]
          %v2078 = vld [vmem:[%s140 + $0xa78] sm:$0xff]
          %v2079 = vld [vmem:[%s140 + $0xa80] sm:$0xff]
          %v2080 = vld [vmem:[%s140 + $0xa88] sm:$0xff]
          %v2081 = vld [vmem:[%s140 + $0xa90] sm:$0xff]
          %v2082 = vld [vmem:[%s140 + $0xa98] sm:$0xff]
          %v2083 = vld [vmem:[%s140 + $0xaa0] sm:$0xff]
          %v2084 = vld [vmem:[%s140 + $0xaa8] sm:$0xff]
          %v2085 = vld [vmem:[%s140 + $0xab0] sm:$0xff]
          %v2086 = vld [vmem:[%s140 + $0xab8] sm:$0xff]
          %v2087 = vld [vmem:[%s140 + $0xac0] sm:$0xff]
          %v2088 = vld [vmem:[%s140 + $0xac8] sm:$0xff]
          %v2089 = vld [vmem:[%s140 + $0xad0] sm:$0xff]
          %v2090 = vld [vmem:[%s140 + $0xad8] sm:$0xff]
          %v2091 = vld [vmem:[%s140 + $0xae0] sm:$0xff]
          %v2092 = vld [vmem:[%s140 + $0xae8] sm:$0xff]
          %v2093 = vld [vmem:[%s140 + $0xaf0] sm:$0xff]
          %v2094 = vld [vmem:[%s140 + $0xaf8] sm:$0xff]
          %v2095 = vld [vmem:[%s140 + $0xb00] sm:$0xff]
          %v2096 = vld [vmem:[%s140 + $0xb08] sm:$0xff]
          %v2097 = vld [vmem:[%s140 + $0xb10] sm:$0xff]
          %v2098 = vld [vmem:[%s140 + $0xb18] sm:$0xff]
          %v2099 = vld [vmem:[%s140 + $0xb20] sm:$0xff]
          %v2100 = vld [vmem:[%s140 + $0xb28] sm:$0xff]
          %v2101 = vld [vmem:[%s140 + $0xb30] sm:$0xff]
          %v2102 = vld [vmem:[%s140 + $0xb38] sm:$0xff]
          %v2103 = vld [vmem:[%s140 + $0xb40] sm:$0xff]
          %v2104 = vld [vmem:[%s140 + $0xb48] sm:$0xff]
          %v2105 = vld [vmem:[%s140 + $0xb50] sm:$0xff]
          %v2106 = vld [vmem:[%s140 + $0xb58] sm:$0xff]
          %v2107 = vld [vmem:[%s140 + $0xb60] sm:$0xff]
          %v2108 = vld [vmem:[%s140 + $0xb68] sm:$0xff]
          %v2109 = vld [vmem:[%s140 + $0xb70] sm:$0xff]
          %v2110 = vld [vmem:[%s140 + $0xb78] sm:$0xff]
          %v2111 = vld [vmem:[%s140 + $0xb80] sm:$0xff]
          %v2112 = vld [vmem:[%s140 + $0xb88] sm:$0xff]
          %v2113 = vld [vmem:[%s140 + $0xb90] sm:$0xff]
          %v2114 = vld [vmem:[%s140 + $0xb98] sm:$0xff]
          %v2115 = vld [vmem:[%s140 + $0xba0] sm:$0xff]
          %v2116 = vld [vmem:[%s140 + $0xba8] sm:$0xff]
          %v2117 = vld [vmem:[%s140 + $0xbb0] sm:$0xff]
          %v2118 = vld [vmem:[%s140 + $0xbb8] sm:$0xff]
          %v2119 = vld [vmem:[%s140 + $0xbc0] sm:$0xff]
          %v2120 = vld [vmem:[%s140 + $0xbc8] sm:$0xff]
          %v2121 = vld [vmem:[%s140 + $0xbd0] sm:$0xff]
          %v2122 = vld [vmem:[%s140 + $0xbd8] sm:$0xff]
          %v2123 = vld [vmem:[%s140 + $0xbe0] sm:$0xff]
          %v2124 = vld [vmem:[%s140 + $0xbe8] sm:$0xff]
          %v2125 = vld [vmem:[%s140 + $0xbf0] sm:$0xff]
          %v2126 = vld [vmem:[%s140 + $0xbf8] sm:$0xff]
          %v2127 = vld [vmem:[%s140 + $0xc00] sm:$0xff]
          %v2128 = vld [vmem:[%s140 + $0xc08] sm:$0xff]
          %v2129 = vld [vmem:[%s140 + $0xc10] sm:$0xff]
          %v2130 = vld [vmem:[%s140 + $0xc18] sm:$0xff]
          %v2131 = vld [vmem:[%s140 + $0xc20] sm:$0xff]
          %v2132 = vld [vmem:[%s140 + $0xc28] sm:$0xff]
          %v2133 = vld [vmem:[%s140 + $0xc30] sm:$0xff]
          %v2134 = vld [vmem:[%s140 + $0xc38] sm:$0xff]
          %v2135 = vld [vmem:[%s140 + $0xc40] sm:$0xff]
          %v2136 = vld [vmem:[%s140 + $0xc48] sm:$0xff]
          %v2137 = vld [vmem:[%s140 + $0xc50] sm:$0xff]
          %v2138 = vld [vmem:[%s140 + $0xc58] sm:$0xff]
          %v2139 = vld [vmem:[%s140 + $0xc60] sm:$0xff]
          %v2140 = vld [vmem:[%s140 + $0xc68] sm:$0xff]
          %v2141 = vld [vmem:[%s140 + $0xc70] sm:$0xff]
          %v2142 = vld [vmem:[%s140 + $0xc78] sm:$0xff]
          %v2143 = vld [vmem:[%s140 + $0xc80] sm:$0xff]
          %v2144 = vld [vmem:[%s140 + $0xc88] sm:$0xff]
          %v2145 = vld [vmem:[%s140 + $0xc90] sm:$0xff]
          %v2146 = vld [vmem:[%s140 + $0xc98] sm:$0xff]
          %v2147 = vld [vmem:[%s140 + $0xca0] sm:$0xff]
          %v2148 = vld [vmem:[%s140 + $0xca8] sm:$0xff]
          %v2149 = vld [vmem:[%s140 + $0xcb0] sm:$0xff]
          %v2150 = vld [vmem:[%s140 + $0xcb8] sm:$0xff]
          %v2151 = vld [vmem:[%s140 + $0xcc0] sm:$0xff]
          %v2152 = vld [vmem:[%s140 + $0xcc8] sm:$0xff]
          %v2153 = vld [vmem:[%s140 + $0xcd0] sm:$0xff]
          %v2154 = vld [vmem:[%s140 + $0xcd8] sm:$0xff]
          %v2155 = vld [vmem:[%s140 + $0xce0] sm:$0xff]
          %v2156 = vld [vmem:[%s140 + $0xce8] sm:$0xff]
          %v2157 = vld [vmem:[%s140 + $0xcf0] sm:$0xff]
          %v2158 = vld [vmem:[%s140 + $0xcf8] sm:$0xff]
          %v2159 = vld [vmem:[%s140 + $0xd00] sm:$0xff]
          %v2160 = vld [vmem:[%s140 + $0xd08] sm:$0xff]
          %v2161 = vld [vmem:[%s140 + $0xd10] sm:$0xff]
          %v2162 = vld [vmem:[%s140 + $0xd18] sm:$0xff]
          %v2163 = vld [vmem:[%s140 + $0xd20] sm:$0xff]
          %v2164 = vld [vmem:[%s140 + $0xd28] sm:$0xff]
          %v2165 = vld [vmem:[%s140 + $0xd30] sm:$0xff]
          %v2166 = vld [vmem:[%s140 + $0xd38] sm:$0xff]
          %v2167 = vld [vmem:[%s140 + $0xd40] sm:$0xff]
          %v2168 = vld [vmem:[%s140 + $0xd48] sm:$0xff]
          %v2169 = vld [vmem:[%s140 + $0xd50] sm:$0xff]
          %v2170 = vld [vmem:[%s140 + $0xd58] sm:$0xff]
          %v2171 = vld [vmem:[%s140 + $0xd60] sm:$0xff]
          %v2172 = vld [vmem:[%s140 + $0xd68] sm:$0xff]
          %v2173 = vld [vmem:[%s140 + $0xd70] sm:$0xff]
          %v2174 = vld [vmem:[%s140 + $0xd78] sm:$0xff]
          %v2175 = vld [vmem:[%s140 + $0xd80] sm:$0xff]
          %v2176 = vld [vmem:[%s140 + $0xd88] sm:$0xff]
          %v2177 = vld [vmem:[%s140 + $0xd90] sm:$0xff]
          %v2178 = vld [vmem:[%s140 + $0xd98] sm:$0xff]
          %v2179 = vld [vmem:[%s140 + $0xda0] sm:$0xff]
          %v2180 = vld [vmem:[%s140 + $0xda8] sm:$0xff]
          %v2181 = vld [vmem:[%s140 + $0xdb0] sm:$0xff]
          %v2182 = vld [vmem:[%s140 + $0xdb8] sm:$0xff]
          %v2183 = vld [vmem:[%s140 + $0xdc0] sm:$0xff]
          %v2184 = vld [vmem:[%s140 + $0xdc8] sm:$0xff]
          %v2185 = vld [vmem:[%s140 + $0xdd0] sm:$0xff]
          %v2186 = vld [vmem:[%s140 + $0xdd8] sm:$0xff]
          %v2187 = vld [vmem:[%s140 + $0xde0] sm:$0xff]
          %v2188 = vld [vmem:[%s140 + $0xde8] sm:$0xff]
          %v2189 = vld [vmem:[%s140 + $0xdf0] sm:$0xff]
          %v2190 = vld [vmem:[%s140 + $0xdf8] sm:$0xff]
          %v2191 = vld [vmem:[%s140 + $0xe00] sm:$0xff]
          %v2192 = vld [vmem:[%s140 + $0xe08] sm:$0xff]
          %v2193 = vld [vmem:[%s140 + $0xe10] sm:$0xff]
          %v2194 = vld [vmem:[%s140 + $0xe18] sm:$0xff]
          %v2195 = vld [vmem:[%s140 + $0xe20] sm:$0xff]
          %v2196 = vld [vmem:[%s140 + $0xe28] sm:$0xff]
          %v2197 = vld [vmem:[%s140 + $0xe30] sm:$0xff]
          %v2198 = vld [vmem:[%s140 + $0xe38] sm:$0xff]
          %v2199 = vld [vmem:[%s140 + $0xe40] sm:$0xff]
          %v2200 = vld [vmem:[%s140 + $0xe48] sm:$0xff]
          %v2201 = vld [vmem:[%s140 + $0xe50] sm:$0xff]
          %v2202 = vld [vmem:[%s140 + $0xe58] sm:$0xff]
          %v2203 = vld [vmem:[%s140 + $0xe60] sm:$0xff]
          %v2204 = vld [vmem:[%s140 + $0xe68] sm:$0xff]
          %v2205 = vld [vmem:[%s140 + $0xe70] sm:$0xff]
          %v2206 = vld [vmem:[%s140 + $0xe78] sm:$0xff]
          %v2207 = vld [vmem:[%s140 + $0xe80] sm:$0xff]
          %v2208 = vld [vmem:[%s140 + $0xe88] sm:$0xff]
          %v2209 = vld [vmem:[%s140 + $0xe90] sm:$0xff]
          %v2210 = vld [vmem:[%s140 + $0xe98] sm:$0xff]
          %v2211 = vld [vmem:[%s140 + $0xea0] sm:$0xff]
          %v2212 = vld [vmem:[%s140 + $0xea8] sm:$0xff]
          %v2213 = vld [vmem:[%s140 + $0xeb0] sm:$0xff]
          %v2214 = vld [vmem:[%s140 + $0xeb8] sm:$0xff]
          %v2215 = vld [vmem:[%s140 + $0xec0] sm:$0xff]
          %v2216 = vld [vmem:[%s140 + $0xec8] sm:$0xff]
          %v2217 = vld [vmem:[%s140 + $0xed0] sm:$0xff]
          %v2218 = vld [vmem:[%s140 + $0xed8] sm:$0xff]
          %v2219 = vld [vmem:[%s140 + $0xee0] sm:$0xff]
          %v2220 = vld [vmem:[%s140 + $0xee8] sm:$0xff]
          %v2221 = vld [vmem:[%s140 + $0xef0] sm:$0xff]
          %v2222 = vld [vmem:[%s140 + $0xef8] sm:$0xff]
          %v2223 = vld [vmem:[%s140 + $0xf00] sm:$0xff]
          %v2224 = vld [vmem:[%s140 + $0xf08] sm:$0xff]
          %v2225 = vld [vmem:[%s140 + $0xf10] sm:$0xff]
          %v2226 = vld [vmem:[%s140 + $0xf18] sm:$0xff]
          %v2227 = vld [vmem:[%s140 + $0xf20] sm:$0xff]
          %v2228 = vld [vmem:[%s140 + $0xf28] sm:$0xff]
          %v2229 = vld [vmem:[%s140 + $0xf30] sm:$0xff]
          %v2230 = vld [vmem:[%s140 + $0xf38] sm:$0xff]
          %v2231 = vld [vmem:[%s140 + $0xf40] sm:$0xff]
          %v2232 = vld [vmem:[%s140 + $0xf48] sm:$0xff]
          %v2233 = vld [vmem:[%s140 + $0xf50] sm:$0xff]
          %v2234 = vld [vmem:[%s140 + $0xf58] sm:$0xff]
          %v2235 = vld [vmem:[%s140 + $0xf60] sm:$0xff]
          %v2236 = vld [vmem:[%s140 + $0xf68] sm:$0xff]
          %v2237 = vld [vmem:[%s140 + $0xf70] sm:$0xff]
          %v2238 = vld [vmem:[%s140 + $0xf78] sm:$0xff]
          %v2239 = vld [vmem:[%s140 + $0xf80] sm:$0xff]
          %v2240 = vld [vmem:[%s140 + $0xf88] sm:$0xff]
          %v2241 = vld [vmem:[%s140 + $0xf90] sm:$0xff]
          %v2242 = vld [vmem:[%s140 + $0xf98] sm:$0xff]
          %v2243 = vld [vmem:[%s140 + $0xfa0] sm:$0xff]
          %v2244 = vld [vmem:[%s140 + $0xfa8] sm:$0xff]
          %v2245 = vld [vmem:[%s140 + $0xfb0] sm:$0xff]
          %v2246 = vld [vmem:[%s140 + $0xfb8] sm:$0xff]
          %v2247 = vld [vmem:[%s140 + $0xfc0] sm:$0xff]
          %v2248 = vld [vmem:[%s140 + $0xfc8] sm:$0xff]
          %v2249 = vld [vmem:[%s140 + $0xfd0] sm:$0xff]
          %v2250 = vld [vmem:[%s140 + $0xfd8] sm:$0xff]
          %v2251 = vld [vmem:[%s140 + $0xfe0] sm:$0xff]
          %v2252 = vld [vmem:[%s140 + $0xfe8] sm:$0xff]
          %v2253 = vld [vmem:[%s140 + $0xff0] sm:$0xff]
          %v2254 = vld [vmem:[%s140 + $0xff8] sm:$0xff]
          %v2255 = vand.u32 2147483647, %v1743
          %v2256 = vand.u32 2147483647, %v1744
          %v2257 = vand.u32 2147483647, %v1745
          %v2258 = vand.u32 2147483647, %v1746
          %v2259 = vand.u32 2147483647, %v1747
          %v2260 = vand.u32 2147483647, %v1748
          %v2261 = vand.u32 2147483647, %v1749
          %v2262 = vand.u32 2147483647, %v1750
          %v2263 = vand.u32 2147483647, %v1751
          %v2264 = vand.u32 2147483647, %v1752
          %v2265 = vand.u32 2147483647, %v1753
          %v2266 = vand.u32 2147483647, %v1754
          %v2267 = vand.u32 2147483647, %v1755
          %v2268 = vand.u32 2147483647, %v1756
          %v2269 = vand.u32 2147483647, %v1757
          %v2270 = vand.u32 2147483647, %v1758
          %v2271 = vand.u32 2147483647, %v1759
          %v2272 = vand.u32 2147483647, %v1760
          %v2273 = vand.u32 2147483647, %v1761
          %v2274 = vand.u32 2147483647, %v1762
          %v2275 = vand.u32 2147483647, %v1763
          %v2276 = vand.u32 2147483647, %v1764
          %v2277 = vand.u32 2147483647, %v1765
          %v2278 = vand.u32 2147483647, %v1766
          %v2279 = vand.u32 2147483647, %v1767
          %v2280 = vand.u32 2147483647, %v1768
          %v2281 = vand.u32 2147483647, %v1769
          %v2282 = vand.u32 2147483647, %v1770
          %v2283 = vand.u32 2147483647, %v1771
          %v2284 = vand.u32 2147483647, %v1772
          %v2285 = vand.u32 2147483647, %v1773
          %v2286 = vand.u32 2147483647, %v1774
          %v2287 = vand.u32 2147483647, %v1775
          %v2288 = vand.u32 2147483647, %v1776
          %v2289 = vand.u32 2147483647, %v1777
          %v2290 = vand.u32 2147483647, %v1778
          %v2291 = vand.u32 2147483647, %v1779
          %v2292 = vand.u32 2147483647, %v1780
          %v2293 = vand.u32 2147483647, %v1781
          %v2294 = vand.u32 2147483647, %v1782
          %v2295 = vand.u32 2147483647, %v1783
          %v2296 = vand.u32 2147483647, %v1784
          %v2297 = vand.u32 2147483647, %v1785
          %v2298 = vand.u32 2147483647, %v1786
          %v2299 = vand.u32 2147483647, %v1787
          %v2300 = vand.u32 2147483647, %v1788
          %v2301 = vand.u32 2147483647, %v1789
          %v2302 = vand.u32 2147483647, %v1790
          %v2303 = vand.u32 2147483647, %v1791
          %v2304 = vand.u32 2147483647, %v1792
          %v2305 = vand.u32 2147483647, %v1793
          %v2306 = vand.u32 2147483647, %v1794
          %v2307 = vand.u32 2147483647, %v1795
          %v2308 = vand.u32 2147483647, %v1796
          %v2309 = vand.u32 2147483647, %v1797
          %v2310 = vand.u32 2147483647, %v1798
          %v2311 = vand.u32 2147483647, %v1799
          %v2312 = vand.u32 2147483647, %v1800
          %v2313 = vand.u32 2147483647, %v1801
          %v2314 = vand.u32 2147483647, %v1802
          %v2315 = vand.u32 2147483647, %v1803
          %v2316 = vand.u32 2147483647, %v1804
          %v2317 = vand.u32 2147483647, %v1805
          %v2318 = vand.u32 2147483647, %v1806
          %v2319 = vand.u32 2147483647, %v1807
          %v2320 = vand.u32 2147483647, %v1808
          %v2321 = vand.u32 2147483647, %v1809
          %v2322 = vand.u32 2147483647, %v1810
          %v2323 = vand.u32 2147483647, %v1811
          %v2324 = vand.u32 2147483647, %v1812
          %v2325 = vand.u32 2147483647, %v1813
          %v2326 = vand.u32 2147483647, %v1814
          %v2327 = vand.u32 2147483647, %v1815
          %v2328 = vand.u32 2147483647, %v1816
          %v2329 = vand.u32 2147483647, %v1817
          %v2330 = vand.u32 2147483647, %v1818
          %v2331 = vand.u32 2147483647, %v1819
          %v2332 = vand.u32 2147483647, %v1820
          %v2333 = vand.u32 2147483647, %v1821
          %v2334 = vand.u32 2147483647, %v1822
          %v2335 = vand.u32 2147483647, %v1823
          %v2336 = vand.u32 2147483647, %v1824
          %v2337 = vand.u32 2147483647, %v1825
          %v2338 = vand.u32 2147483647, %v1826
          %v2339 = vand.u32 2147483647, %v1827
          %v2340 = vand.u32 2147483647, %v1828
          %v2341 = vand.u32 2147483647, %v1829
          %v2342 = vand.u32 2147483647, %v1830
          %v2343 = vand.u32 2147483647, %v1831
          %v2344 = vand.u32 2147483647, %v1832
          %v2345 = vand.u32 2147483647, %v1833
          %v2346 = vand.u32 2147483647, %v1834
          %v2347 = vand.u32 2147483647, %v1835
          %v2348 = vand.u32 2147483647, %v1836
          %v2349 = vand.u32 2147483647, %v1837
          %v2350 = vand.u32 2147483647, %v1838
          %v2351 = vand.u32 2147483647, %v1839
          %v2352 = vand.u32 2147483647, %v1840
          %v2353 = vand.u32 2147483647, %v1841
          %v2354 = vand.u32 2147483647, %v1842
          %v2355 = vand.u32 2147483647, %v1843
          %v2356 = vand.u32 2147483647, %v1844
          %v2357 = vand.u32 2147483647, %v1845
          %v2358 = vand.u32 2147483647, %v1846
          %v2359 = vand.u32 2147483647, %v1847
          %v2360 = vand.u32 2147483647, %v1848
          %v2361 = vand.u32 2147483647, %v1849
          %v2362 = vand.u32 2147483647, %v1850
          %v2363 = vand.u32 2147483647, %v1851
          %v2364 = vand.u32 2147483647, %v1852
          %v2365 = vand.u32 2147483647, %v1853
          %v2366 = vand.u32 2147483647, %v1854
          %v2367 = vand.u32 2147483647, %v1855
          %v2368 = vand.u32 2147483647, %v1856
          %v2369 = vand.u32 2147483647, %v1857
          %v2370 = vand.u32 2147483647, %v1858
          %v2371 = vand.u32 2147483647, %v1859
          %v2372 = vand.u32 2147483647, %v1860
          %v2373 = vand.u32 2147483647, %v1861
          %v2374 = vand.u32 2147483647, %v1862
          %v2375 = vand.u32 2147483647, %v1863
          %v2376 = vand.u32 2147483647, %v1864
          %v2377 = vand.u32 2147483647, %v1865
          %v2378 = vand.u32 2147483647, %v1866
          %v2379 = vand.u32 2147483647, %v1867
          %v2380 = vand.u32 2147483647, %v1868
          %v2381 = vand.u32 2147483647, %v1869
          %v2382 = vand.u32 2147483647, %v1870
          %v2383 = vand.u32 2147483647, %v1871
          %v2384 = vand.u32 2147483647, %v1872
          %v2385 = vand.u32 2147483647, %v1873
          %v2386 = vand.u32 2147483647, %v1874
          %v2387 = vand.u32 2147483647, %v1875
          %v2388 = vand.u32 2147483647, %v1876
          %v2389 = vand.u32 2147483647, %v1877
          %v2390 = vand.u32 2147483647, %v1878
          %v2391 = vand.u32 2147483647, %v1879
          %v2392 = vand.u32 2147483647, %v1880
          %v2393 = vand.u32 2147483647, %v1881
          %v2394 = vand.u32 2147483647, %v1882
          %v2395 = vand.u32 2147483647, %v1883
          %v2396 = vand.u32 2147483647, %v1884
          %v2397 = vand.u32 2147483647, %v1885
          %v2398 = vand.u32 2147483647, %v1886
          %v2399 = vand.u32 2147483647, %v1887
          %v2400 = vand.u32 2147483647, %v1888
          %v2401 = vand.u32 2147483647, %v1889
          %v2402 = vand.u32 2147483647, %v1890
          %v2403 = vand.u32 2147483647, %v1891
          %v2404 = vand.u32 2147483647, %v1892
          %v2405 = vand.u32 2147483647, %v1893
          %v2406 = vand.u32 2147483647, %v1894
          %v2407 = vand.u32 2147483647, %v1895
          %v2408 = vand.u32 2147483647, %v1896
          %v2409 = vand.u32 2147483647, %v1897
          %v2410 = vand.u32 2147483647, %v1898
          %v2411 = vand.u32 2147483647, %v1899
          %v2412 = vand.u32 2147483647, %v1900
          %v2413 = vand.u32 2147483647, %v1901
          %v2414 = vand.u32 2147483647, %v1902
          %v2415 = vand.u32 2147483647, %v1903
          %v2416 = vand.u32 2147483647, %v1904
          %v2417 = vand.u32 2147483647, %v1905
          %v2418 = vand.u32 2147483647, %v1906
          %v2419 = vand.u32 2147483647, %v1907
          %v2420 = vand.u32 2147483647, %v1908
          %v2421 = vand.u32 2147483647, %v1909
          %v2422 = vand.u32 2147483647, %v1910
          %v2423 = vand.u32 2147483647, %v1911
          %v2424 = vand.u32 2147483647, %v1912
          %v2425 = vand.u32 2147483647, %v1913
          %v2426 = vand.u32 2147483647, %v1914
          %v2427 = vand.u32 2147483647, %v1915
          %v2428 = vand.u32 2147483647, %v1916
          %v2429 = vand.u32 2147483647, %v1917
          %v2430 = vand.u32 2147483647, %v1918
          %v2431 = vand.u32 2147483647, %v1919
          %v2432 = vand.u32 2147483647, %v1920
          %v2433 = vand.u32 2147483647, %v1921
          %v2434 = vand.u32 2147483647, %v1922
          %v2435 = vand.u32 2147483647, %v1923
          %v2436 = vand.u32 2147483647, %v1924
          %v2437 = vand.u32 2147483647, %v1925
          %v2438 = vand.u32 2147483647, %v1926
          %v2439 = vand.u32 2147483647, %v1927
          %v2440 = vand.u32 2147483647, %v1928
          %v2441 = vand.u32 2147483647, %v1929
          %v2442 = vand.u32 2147483647, %v1930
          %v2443 = vand.u32 2147483647, %v1931
          %v2444 = vand.u32 2147483647, %v1932
          %v2445 = vand.u32 2147483647, %v1933
          %v2446 = vand.u32 2147483647, %v1934
          %v2447 = vand.u32 2147483647, %v1935
          %v2448 = vand.u32 2147483647, %v1936
          %v2449 = vand.u32 2147483647, %v1937
          %v2450 = vand.u32 2147483647, %v1938
          %v2451 = vand.u32 2147483647, %v1939
          %v2452 = vand.u32 2147483647, %v1940
          %v2453 = vand.u32 2147483647, %v1941
          %v2454 = vand.u32 2147483647, %v1942
          %v2455 = vand.u32 2147483647, %v1943
          %v2456 = vand.u32 2147483647, %v1944
          %v2457 = vand.u32 2147483647, %v1945
          %v2458 = vand.u32 2147483647, %v1946
          %v2459 = vand.u32 2147483647, %v1947
          %v2460 = vand.u32 2147483647, %v1948
          %v2461 = vand.u32 2147483647, %v1949
          %v2462 = vand.u32 2147483647, %v1950
          %v2463 = vand.u32 2147483647, %v1951
          %v2464 = vand.u32 2147483647, %v1952
          %v2465 = vand.u32 2147483647, %v1953
          %v2466 = vand.u32 2147483647, %v1954
          %v2467 = vand.u32 2147483647, %v1955
          %v2468 = vand.u32 2147483647, %v1956
          %v2469 = vand.u32 2147483647, %v1957
          %v2470 = vand.u32 2147483647, %v1958
          %v2471 = vand.u32 2147483647, %v1959
          %v2472 = vand.u32 2147483647, %v1960
          %v2473 = vand.u32 2147483647, %v1961
          %v2474 = vand.u32 2147483647, %v1962
          %v2475 = vand.u32 2147483647, %v1963
          %v2476 = vand.u32 2147483647, %v1964
          %v2477 = vand.u32 2147483647, %v1965
          %v2478 = vand.u32 2147483647, %v1966
          %v2479 = vand.u32 2147483647, %v1967
          %v2480 = vand.u32 2147483647, %v1968
          %v2481 = vand.u32 2147483647, %v1969
          %v2482 = vand.u32 2147483647, %v1970
          %v2483 = vand.u32 2147483647, %v1971
          %v2484 = vand.u32 2147483647, %v1972
          %v2485 = vand.u32 2147483647, %v1973
          %v2486 = vand.u32 2147483647, %v1974
          %v2487 = vand.u32 2147483647, %v1975
          %v2488 = vand.u32 2147483647, %v1976
          %v2489 = vand.u32 2147483647, %v1977
          %v2490 = vand.u32 2147483647, %v1978
          %v2491 = vand.u32 2147483647, %v1979
          %v2492 = vand.u32 2147483647, %v1980
          %v2493 = vand.u32 2147483647, %v1981
          %v2494 = vand.u32 2147483647, %v1982
          %v2495 = vand.u32 2147483647, %v1983
          %v2496 = vand.u32 2147483647, %v1984
          %v2497 = vand.u32 2147483647, %v1985
          %v2498 = vand.u32 2147483647, %v1986
          %v2499 = vand.u32 2147483647, %v1987
          %v2500 = vand.u32 2147483647, %v1988
          %v2501 = vand.u32 2147483647, %v1989
          %v2502 = vand.u32 2147483647, %v1990
          %v2503 = vand.u32 2147483647, %v1991
          %v2504 = vand.u32 2147483647, %v1992
          %v2505 = vand.u32 2147483647, %v1993
          %v2506 = vand.u32 2147483647, %v1994
          %v2507 = vand.u32 2147483647, %v1995
          %v2508 = vand.u32 2147483647, %v1996
          %v2509 = vand.u32 2147483647, %v1997
          %v2510 = vand.u32 2147483647, %v1998
          %v2511 = vand.u32 2147483647, %v1999
          %v2512 = vand.u32 2147483647, %v2000
          %v2513 = vand.u32 2147483647, %v2001
          %v2514 = vand.u32 2147483647, %v2002
          %v2515 = vand.u32 2147483647, %v2003
          %v2516 = vand.u32 2147483647, %v2004
          %v2517 = vand.u32 2147483647, %v2005
          %v2518 = vand.u32 2147483647, %v2006
          %v2519 = vand.u32 2147483647, %v2007
          %v2520 = vand.u32 2147483647, %v2008
          %v2521 = vand.u32 2147483647, %v2009
          %v2522 = vand.u32 2147483647, %v2010
          %v2523 = vand.u32 2147483647, %v2011
          %v2524 = vand.u32 2147483647, %v2012
          %v2525 = vand.u32 2147483647, %v2013
          %v2526 = vand.u32 2147483647, %v2014
          %v2527 = vand.u32 2147483647, %v2015
          %v2528 = vand.u32 2147483647, %v2016
          %v2529 = vand.u32 2147483647, %v2017
          %v2530 = vand.u32 2147483647, %v2018
          %v2531 = vand.u32 2147483647, %v2019
          %v2532 = vand.u32 2147483647, %v2020
          %v2533 = vand.u32 2147483647, %v2021
          %v2534 = vand.u32 2147483647, %v2022
          %v2535 = vand.u32 2147483647, %v2023
          %v2536 = vand.u32 2147483647, %v2024
          %v2537 = vand.u32 2147483647, %v2025
          %v2538 = vand.u32 2147483647, %v2026
          %v2539 = vand.u32 2147483647, %v2027
          %v2540 = vand.u32 2147483647, %v2028
          %v2541 = vand.u32 2147483647, %v2029
          %v2542 = vand.u32 2147483647, %v2030
          %v2543 = vand.u32 2147483647, %v2031
          %v2544 = vand.u32 2147483647, %v2032
          %v2545 = vand.u32 2147483647, %v2033
          %v2546 = vand.u32 2147483647, %v2034
          %v2547 = vand.u32 2147483647, %v2035
          %v2548 = vand.u32 2147483647, %v2036
          %v2549 = vand.u32 2147483647, %v2037
          %v2550 = vand.u32 2147483647, %v2038
          %v2551 = vand.u32 2147483647, %v2039
          %v2552 = vand.u32 2147483647, %v2040
          %v2553 = vand.u32 2147483647, %v2041
          %v2554 = vand.u32 2147483647, %v2042
          %v2555 = vand.u32 2147483647, %v2043
          %v2556 = vand.u32 2147483647, %v2044
          %v2557 = vand.u32 2147483647, %v2045
          %v2558 = vand.u32 2147483647, %v2046
          %v2559 = vand.u32 2147483647, %v2047
          %v2560 = vand.u32 2147483647, %v2048
          %v2561 = vand.u32 2147483647, %v2049
          %v2562 = vand.u32 2147483647, %v2050
          %v2563 = vand.u32 2147483647, %v2051
          %v2564 = vand.u32 2147483647, %v2052
          %v2565 = vand.u32 2147483647, %v2053
          %v2566 = vand.u32 2147483647, %v2054
          %v2567 = vand.u32 2147483647, %v2055
          %v2568 = vand.u32 2147483647, %v2056
          %v2569 = vand.u32 2147483647, %v2057
          %v2570 = vand.u32 2147483647, %v2058
          %v2571 = vand.u32 2147483647, %v2059
          %v2572 = vand.u32 2147483647, %v2060
          %v2573 = vand.u32 2147483647, %v2061
          %v2574 = vand.u32 2147483647, %v2062
          %v2575 = vand.u32 2147483647, %v2063
          %v2576 = vand.u32 2147483647, %v2064
          %v2577 = vand.u32 2147483647, %v2065
          %v2578 = vand.u32 2147483647, %v2066
          %v2579 = vand.u32 2147483647, %v2067
          %v2580 = vand.u32 2147483647, %v2068
          %v2581 = vand.u32 2147483647, %v2069
          %v2582 = vand.u32 2147483647, %v2070
          %v2583 = vand.u32 2147483647, %v2071
          %v2584 = vand.u32 2147483647, %v2072
          %v2585 = vand.u32 2147483647, %v2073
          %v2586 = vand.u32 2147483647, %v2074
          %v2587 = vand.u32 2147483647, %v2075
          %v2588 = vand.u32 2147483647, %v2076
          %v2589 = vand.u32 2147483647, %v2077
          %v2590 = vand.u32 2147483647, %v2078
          %v2591 = vand.u32 2147483647, %v2079
          %v2592 = vand.u32 2147483647, %v2080
          %v2593 = vand.u32 2147483647, %v2081
          %v2594 = vand.u32 2147483647, %v2082
          %v2595 = vand.u32 2147483647, %v2083
          %v2596 = vand.u32 2147483647, %v2084
          %v2597 = vand.u32 2147483647, %v2085
          %v2598 = vand.u32 2147483647, %v2086
          %v2599 = vand.u32 2147483647, %v2087
          %v2600 = vand.u32 2147483647, %v2088
          %v2601 = vand.u32 2147483647, %v2089
          %v2602 = vand.u32 2147483647, %v2090
          %v2603 = vand.u32 2147483647, %v2091
          %v2604 = vand.u32 2147483647, %v2092
          %v2605 = vand.u32 2147483647, %v2093
          %v2606 = vand.u32 2147483647, %v2094
          %v2607 = vand.u32 2147483647, %v2095
          %v2608 = vand.u32 2147483647, %v2096
          %v2609 = vand.u32 2147483647, %v2097
          %v2610 = vand.u32 2147483647, %v2098
          %v2611 = vand.u32 2147483647, %v2099
          %v2612 = vand.u32 2147483647, %v2100
          %v2613 = vand.u32 2147483647, %v2101
          %v2614 = vand.u32 2147483647, %v2102
          %v2615 = vand.u32 2147483647, %v2103
          %v2616 = vand.u32 2147483647, %v2104
          %v2617 = vand.u32 2147483647, %v2105
          %v2618 = vand.u32 2147483647, %v2106
          %v2619 = vand.u32 2147483647, %v2107
          %v2620 = vand.u32 2147483647, %v2108
          %v2621 = vand.u32 2147483647, %v2109
          %v2622 = vand.u32 2147483647, %v2110
          %v2623 = vand.u32 2147483647, %v2111
          %v2624 = vand.u32 2147483647, %v2112
          %v2625 = vand.u32 2147483647, %v2113
          %v2626 = vand.u32 2147483647, %v2114
          %v2627 = vand.u32 2147483647, %v2115
          %v2628 = vand.u32 2147483647, %v2116
          %v2629 = vand.u32 2147483647, %v2117
          %v2630 = vand.u32 2147483647, %v2118
          %v2631 = vand.u32 2147483647, %v2119
          %v2632 = vand.u32 2147483647, %v2120
          %v2633 = vand.u32 2147483647, %v2121
          %v2634 = vand.u32 2147483647, %v2122
          %v2635 = vand.u32 2147483647, %v2123
          %v2636 = vand.u32 2147483647, %v2124
          %v2637 = vand.u32 2147483647, %v2125
          %v2638 = vand.u32 2147483647, %v2126
          %v2639 = vand.u32 2147483647, %v2127
          %v2640 = vand.u32 2147483647, %v2128
          %v2641 = vand.u32 2147483647, %v2129
          %v2642 = vand.u32 2147483647, %v2130
          %v2643 = vand.u32 2147483647, %v2131
          %v2644 = vand.u32 2147483647, %v2132
          %v2645 = vand.u32 2147483647, %v2133
          %v2646 = vand.u32 2147483647, %v2134
          %v2647 = vand.u32 2147483647, %v2135
          %v2648 = vand.u32 2147483647, %v2136
          %v2649 = vand.u32 2147483647, %v2137
          %v2650 = vand.u32 2147483647, %v2138
          %v2651 = vand.u32 2147483647, %v2139
          %v2652 = vand.u32 2147483647, %v2140
          %v2653 = vand.u32 2147483647, %v2141
          %v2654 = vand.u32 2147483647, %v2142
          %v2655 = vand.u32 2147483647, %v2143
          %v2656 = vand.u32 2147483647, %v2144
          %v2657 = vand.u32 2147483647, %v2145
          %v2658 = vand.u32 2147483647, %v2146
          %v2659 = vand.u32 2147483647, %v2147
          %v2660 = vand.u32 2147483647, %v2148
          %v2661 = vand.u32 2147483647, %v2149
          %v2662 = vand.u32 2147483647, %v2150
          %v2663 = vand.u32 2147483647, %v2151
          %v2664 = vand.u32 2147483647, %v2152
          %v2665 = vand.u32 2147483647, %v2153
          %v2666 = vand.u32 2147483647, %v2154
          %v2667 = vand.u32 2147483647, %v2155
          %v2668 = vand.u32 2147483647, %v2156
          %v2669 = vand.u32 2147483647, %v2157
          %v2670 = vand.u32 2147483647, %v2158
          %v2671 = vand.u32 2147483647, %v2159
          %v2672 = vand.u32 2147483647, %v2160
          %v2673 = vand.u32 2147483647, %v2161
          %v2674 = vand.u32 2147483647, %v2162
          %v2675 = vand.u32 2147483647, %v2163
          %v2676 = vand.u32 2147483647, %v2164
          %v2677 = vand.u32 2147483647, %v2165
          %v2678 = vand.u32 2147483647, %v2166
          %v2679 = vand.u32 2147483647, %v2167
          %v2680 = vand.u32 2147483647, %v2168
          %v2681 = vand.u32 2147483647, %v2169
          %v2682 = vand.u32 2147483647, %v2170
          %v2683 = vand.u32 2147483647, %v2171
          %v2684 = vand.u32 2147483647, %v2172
          %v2685 = vand.u32 2147483647, %v2173
          %v2686 = vand.u32 2147483647, %v2174
          %v2687 = vand.u32 2147483647, %v2175
          %v2688 = vand.u32 2147483647, %v2176
          %v2689 = vand.u32 2147483647, %v2177
          %v2690 = vand.u32 2147483647, %v2178
          %v2691 = vand.u32 2147483647, %v2179
          %v2692 = vand.u32 2147483647, %v2180
          %v2693 = vand.u32 2147483647, %v2181
          %v2694 = vand.u32 2147483647, %v2182
          %v2695 = vand.u32 2147483647, %v2183
          %v2696 = vand.u32 2147483647, %v2184
          %v2697 = vand.u32 2147483647, %v2185
          %v2698 = vand.u32 2147483647, %v2186
          %v2699 = vand.u32 2147483647, %v2187
          %v2700 = vand.u32 2147483647, %v2188
          %v2701 = vand.u32 2147483647, %v2189
          %v2702 = vand.u32 2147483647, %v2190
          %v2703 = vand.u32 2147483647, %v2191
          %v2704 = vand.u32 2147483647, %v2192
          %v2705 = vand.u32 2147483647, %v2193
          %v2706 = vand.u32 2147483647, %v2194
          %v2707 = vand.u32 2147483647, %v2195
          %v2708 = vand.u32 2147483647, %v2196
          %v2709 = vand.u32 2147483647, %v2197
          %v2710 = vand.u32 2147483647, %v2198
          %v2711 = vand.u32 2147483647, %v2199
          %v2712 = vand.u32 2147483647, %v2200
          %v2713 = vand.u32 2147483647, %v2201
          %v2714 = vand.u32 2147483647, %v2202
          %v2715 = vand.u32 2147483647, %v2203
          %v2716 = vand.u32 2147483647, %v2204
          %v2717 = vand.u32 2147483647, %v2205
          %v2718 = vand.u32 2147483647, %v2206
          %v2719 = vand.u32 2147483647, %v2207
          %v2720 = vand.u32 2147483647, %v2208
          %v2721 = vand.u32 2147483647, %v2209
          %v2722 = vand.u32 2147483647, %v2210
          %v2723 = vand.u32 2147483647, %v2211
          %v2724 = vand.u32 2147483647, %v2212
          %v2725 = vand.u32 2147483647, %v2213
          %v2726 = vand.u32 2147483647, %v2214
          %v2727 = vand.u32 2147483647, %v2215
          %v2728 = vand.u32 2147483647, %v2216
          %v2729 = vand.u32 2147483647, %v2217
          %v2730 = vand.u32 2147483647, %v2218
          %v2731 = vand.u32 2147483647, %v2219
          %v2732 = vand.u32 2147483647, %v2220
          %v2733 = vand.u32 2147483647, %v2221
          %v2734 = vand.u32 2147483647, %v2222
          %v2735 = vand.u32 2147483647, %v2223
          %v2736 = vand.u32 2147483647, %v2224
          %v2737 = vand.u32 2147483647, %v2225
          %v2738 = vand.u32 2147483647, %v2226
          %v2739 = vand.u32 2147483647, %v2227
          %v2740 = vand.u32 2147483647, %v2228
          %v2741 = vand.u32 2147483647, %v2229
          %v2742 = vand.u32 2147483647, %v2230
          %v2743 = vand.u32 2147483647, %v2231
          %v2744 = vand.u32 2147483647, %v2232
          %v2745 = vand.u32 2147483647, %v2233
          %v2746 = vand.u32 2147483647, %v2234
          %v2747 = vand.u32 2147483647, %v2235
          %v2748 = vand.u32 2147483647, %v2236
          %v2749 = vand.u32 2147483647, %v2237
          %v2750 = vand.u32 2147483647, %v2238
          %v2751 = vand.u32 2147483647, %v2239
          %v2752 = vand.u32 2147483647, %v2240
          %v2753 = vand.u32 2147483647, %v2241
          %v2754 = vand.u32 2147483647, %v2242
          %v2755 = vand.u32 2147483647, %v2243
          %v2756 = vand.u32 2147483647, %v2244
          %v2757 = vand.u32 2147483647, %v2245
          %v2758 = vand.u32 2147483647, %v2246
          %v2759 = vand.u32 2147483647, %v2247
          %v2760 = vand.u32 2147483647, %v2248
          %v2761 = vand.u32 2147483647, %v2249
          %v2762 = vand.u32 2147483647, %v2250
          %v2763 = vand.u32 2147483647, %v2251
          %v2764 = vand.u32 2147483647, %v2252
          %v2765 = vand.u32 2147483647, %v2253
          %v2766 = vand.u32 2147483647, %v2254
          %v2767 = vlaneseq
          %v2768 = vshrl.u32 %v2767, 7
          %v2769 = vadd.s32 %v2768, 8
          %v2770 = vadd.s32 %v2768, 16
          %v2771 = vadd.s32 %v2768, 24
          %v2772 = vadd.s32 %v2768, 32
          %v2773 = vadd.s32 %v2768, 40
          %v2774 = vadd.s32 %v2768, 48
          %v2775 = vadd.s32 %v2768, 56
          %v2776 = vadd.s32 %v2768, 64
          %v2777 = vadd.s32 %v2768, 72
          %v2778 = vadd.s32 %v2768, 80
          %v2779 = vadd.s32 %v2768, 88
          %v2780 = vadd.s32 %v2768, 96
          %v2781 = vadd.s32 %v2768, 104
          %v2782 = vadd.s32 %v2768, 112
          %v2783 = vadd.s32 %v2768, 120
          %v2784 = vadd.s32 %v2768, 128
          %v2785 = vadd.s32 %v2768, 136
          %v2786 = vadd.s32 %v2768, 144
          %v2787 = vadd.s32 %v2768, 152
          %v2788 = vadd.s32 %v2768, 160
          %v2789 = vadd.s32 %v2768, 168
          %v2790 = vadd.s32 %v2768, 176
          %v2791 = vadd.s32 %v2768, 184
          %v2792 = vadd.s32 %v2768, 192
          %v2793 = vadd.s32 %v2768, 200
          %v2794 = vadd.s32 %v2768, 208
          %v2795 = vadd.s32 %v2768, 216
          %v2796 = vadd.s32 %v2768, 224
          %v2797 = vadd.s32 %v2768, 232
          %v2798 = vadd.s32 %v2768, 240
          %v2799 = vadd.s32 %v2768, 248
          %v2800 = vadd.s32 %v2768, 256
          %v2801 = vadd.s32 %v2768, 264
          %v2802 = vadd.s32 %v2768, 272
          %v2803 = vadd.s32 %v2768, 280
          %v2804 = vadd.s32 %v2768, 288
          %v2805 = vadd.s32 %v2768, 296
          %v2806 = vadd.s32 %v2768, 304
          %v2807 = vadd.s32 %v2768, 312
          %v2808 = vadd.s32 %v2768, 320
          %v2809 = vadd.s32 %v2768, 328
          %v2810 = vadd.s32 %v2768, 336
          %v2811 = vadd.s32 %v2768, 344
          %v2812 = vadd.s32 %v2768, 352
          %v2813 = vadd.s32 %v2768, 360
          %v2814 = vadd.s32 %v2768, 368
          %v2815 = vadd.s32 %v2768, 376
          %v2816 = vadd.s32 %v2768, 384
          %v2817 = vadd.s32 %v2768, 392
          %v2818 = vadd.s32 %v2768, 400
          %v2819 = vadd.s32 %v2768, 408
          %v2820 = vadd.s32 %v2768, 416
          %v2821 = vadd.s32 %v2768, 424
          %v2822 = vadd.s32 %v2768, 432
          %v2823 = vadd.s32 %v2768, 440
          %v2824 = vadd.s32 %v2768, 448
          %v2825 = vadd.s32 %v2768, 456
          %v2826 = vadd.s32 %v2768, 464
          %v2827 = vadd.s32 %v2768, 472
          %v2828 = vadd.s32 %v2768, 480
          %v2829 = vadd.s32 %v2768, 488
          %v2830 = vadd.s32 %v2768, 496
          %v2831 = vadd.s32 %v2768, 504
          %v2832 = vadd.s32 %v2768, 512
          %v2833 = vadd.s32 %v2768, 520
          %v2834 = vadd.s32 %v2768, 528
          %v2835 = vadd.s32 %v2768, 536
          %v2836 = vadd.s32 %v2768, 544
          %v2837 = vadd.s32 %v2768, 552
          %v2838 = vadd.s32 %v2768, 560
          %v2839 = vadd.s32 %v2768, 568
          %v2840 = vadd.s32 %v2768, 576
          %v2841 = vadd.s32 %v2768, 584
          %v2842 = vadd.s32 %v2768, 592
          %v2843 = vadd.s32 %v2768, 600
          %v2844 = vadd.s32 %v2768, 608
          %v2845 = vadd.s32 %v2768, 616
          %v2846 = vadd.s32 %v2768, 624
          %v2847 = vadd.s32 %v2768, 632
          %v2848 = vadd.s32 %v2768, 640
          %v2849 = vadd.s32 %v2768, 648
          %v2850 = vadd.s32 %v2768, 656
          %v2851 = vadd.s32 %v2768, 664
          %v2852 = vadd.s32 %v2768, 672
          %v2853 = vadd.s32 %v2768, 680
          %v2854 = vadd.s32 %v2768, 688
          %v2855 = vadd.s32 %v2768, 696
          %v2856 = vadd.s32 %v2768, 704
          %v2857 = vadd.s32 %v2768, 712
          %v2858 = vadd.s32 %v2768, 720
          %v2859 = vadd.s32 %v2768, 728
          %v2860 = vadd.s32 %v2768, 736
          %v2861 = vadd.s32 %v2768, 744
          %v2862 = vadd.s32 %v2768, 752
          %v2863 = vadd.s32 %v2768, 760
          %v2864 = vadd.s32 %v2768, 768
          %v2865 = vadd.s32 %v2768, 776
          %v2866 = vadd.s32 %v2768, 784
          %v2867 = vadd.s32 %v2768, 792
          %v2868 = vadd.s32 %v2768, 800
          %v2869 = vadd.s32 %v2768, 808
          %v2870 = vadd.s32 %v2768, 816
          %v2871 = vadd.s32 %v2768, 824
          %v2872 = vadd.s32 %v2768, 832
          %v2873 = vadd.s32 %v2768, 840
          %v2874 = vadd.s32 %v2768, 848
          %v2875 = vadd.s32 %v2768, 856
          %v2876 = vadd.s32 %v2768, 864
          %v2877 = vadd.s32 %v2768, 872
          %v2878 = vadd.s32 %v2768, 880
          %v2879 = vadd.s32 %v2768, 888
          %v2880 = vadd.s32 %v2768, 896
          %v2881 = vadd.s32 %v2768, 904
          %v2882 = vadd.s32 %v2768, 912
          %v2883 = vadd.s32 %v2768, 920
          %v2884 = vadd.s32 %v2768, 928
          %v2885 = vadd.s32 %v2768, 936
          %v2886 = vadd.s32 %v2768, 944
          %v2887 = vadd.s32 %v2768, 952
          %v2888 = vadd.s32 %v2768, 960
          %v2889 = vadd.s32 %v2768, 968
          %v2890 = vadd.s32 %v2768, 976
          %v2891 = vadd.s32 %v2768, 984
          %v2892 = vadd.s32 %v2768, 992
          %v2893 = vadd.s32 %v2768, 1000
          %v2894 = vadd.s32 %v2768, 1008
          %v2895 = vadd.s32 %v2768, 1016
          %v2896 = vadd.s32 %v2768, 1024
          %v2897 = vadd.s32 %v2768, 1032
          %v2898 = vadd.s32 %v2768, 1040
          %v2899 = vadd.s32 %v2768, 1048
          %v2900 = vadd.s32 %v2768, 1056
          %v2901 = vadd.s32 %v2768, 1064
          %v2902 = vadd.s32 %v2768, 1072
          %v2903 = vadd.s32 %v2768, 1080
          %v2904 = vadd.s32 %v2768, 1088
          %v2905 = vadd.s32 %v2768, 1096
          %v2906 = vadd.s32 %v2768, 1104
          %v2907 = vadd.s32 %v2768, 1112
          %v2908 = vadd.s32 %v2768, 1120
          %v2909 = vadd.s32 %v2768, 1128
          %v2910 = vadd.s32 %v2768, 1136
          %v2911 = vadd.s32 %v2768, 1144
          %v2912 = vadd.s32 %v2768, 1152
          %v2913 = vadd.s32 %v2768, 1160
          %v2914 = vadd.s32 %v2768, 1168
          %v2915 = vadd.s32 %v2768, 1176
          %v2916 = vadd.s32 %v2768, 1184
          %v2917 = vadd.s32 %v2768, 1192
          %v2918 = vadd.s32 %v2768, 1200
          %v2919 = vadd.s32 %v2768, 1208
          %v2920 = vadd.s32 %v2768, 1216
          %v2921 = vadd.s32 %v2768, 1224
          %v2922 = vadd.s32 %v2768, 1232
          %v2923 = vadd.s32 %v2768, 1240
          %v2924 = vadd.s32 %v2768, 1248
          %v2925 = vadd.s32 %v2768, 1256
          %v2926 = vadd.s32 %v2768, 1264
          %v2927 = vadd.s32 %v2768, 1272
          %v2928 = vadd.s32 %v2768, 1280
          %v2929 = vadd.s32 %v2768, 1288
          %v2930 = vadd.s32 %v2768, 1296
          %v2931 = vadd.s32 %v2768, 1304
          %v2932 = vadd.s32 %v2768, 1312
          %v2933 = vadd.s32 %v2768, 1320
          %v2934 = vadd.s32 %v2768, 1328
          %v2935 = vadd.s32 %v2768, 1336
          %v2936 = vadd.s32 %v2768, 1344
          %v2937 = vadd.s32 %v2768, 1352
          %v2938 = vadd.s32 %v2768, 1360
          %v2939 = vadd.s32 %v2768, 1368
          %v2940 = vadd.s32 %v2768, 1376
          %v2941 = vadd.s32 %v2768, 1384
          %v2942 = vadd.s32 %v2768, 1392
          %v2943 = vadd.s32 %v2768, 1400
          %v2944 = vadd.s32 %v2768, 1408
          %v2945 = vadd.s32 %v2768, 1416
          %v2946 = vadd.s32 %v2768, 1424
          %v2947 = vadd.s32 %v2768, 1432
          %v2948 = vadd.s32 %v2768, 1440
          %v2949 = vadd.s32 %v2768, 1448
          %v2950 = vadd.s32 %v2768, 1456
          %v2951 = vadd.s32 %v2768, 1464
          %v2952 = vadd.s32 %v2768, 1472
          %v2953 = vadd.s32 %v2768, 1480
          %v2954 = vadd.s32 %v2768, 1488
          %v2955 = vadd.s32 %v2768, 1496
          %v2956 = vadd.s32 %v2768, 1504
          %v2957 = vadd.s32 %v2768, 1512
          %v2958 = vadd.s32 %v2768, 1520
          %v2959 = vadd.s32 %v2768, 1528
          %v2960 = vadd.s32 %v2768, 1536
          %v2961 = vadd.s32 %v2768, 1544
          %v2962 = vadd.s32 %v2768, 1552
          %v2963 = vadd.s32 %v2768, 1560
          %v2964 = vadd.s32 %v2768, 1568
          %v2965 = vadd.s32 %v2768, 1576
          %v2966 = vadd.s32 %v2768, 1584
          %v2967 = vadd.s32 %v2768, 1592
          %v2968 = vadd.s32 %v2768, 1600
          %v2969 = vadd.s32 %v2768, 1608
          %v2970 = vadd.s32 %v2768, 1616
          %v2971 = vadd.s32 %v2768, 1624
          %v2972 = vadd.s32 %v2768, 1632
          %v2973 = vadd.s32 %v2768, 1640
          %v2974 = vadd.s32 %v2768, 1648
          %v2975 = vadd.s32 %v2768, 1656
          %v2976 = vadd.s32 %v2768, 1664
          %v2977 = vadd.s32 %v2768, 1672
          %v2978 = vadd.s32 %v2768, 1680
          %v2979 = vadd.s32 %v2768, 1688
          %v2980 = vadd.s32 %v2768, 1696
          %v2981 = vadd.s32 %v2768, 1704
          %v2982 = vadd.s32 %v2768, 1712
          %v2983 = vadd.s32 %v2768, 1720
          %v2984 = vadd.s32 %v2768, 1728
          %v2985 = vadd.s32 %v2768, 1736
          %v2986 = vadd.s32 %v2768, 1744
          %v2987 = vadd.s32 %v2768, 1752
          %v2988 = vadd.s32 %v2768, 1760
          %v2989 = vadd.s32 %v2768, 1768
          %v2990 = vadd.s32 %v2768, 1776
          %v2991 = vadd.s32 %v2768, 1784
          %v2992 = vadd.s32 %v2768, 1792
          %v2993 = vadd.s32 %v2768, 1800
          %v2994 = vadd.s32 %v2768, 1808
          %v2995 = vadd.s32 %v2768, 1816
          %v2996 = vadd.s32 %v2768, 1824
          %v2997 = vadd.s32 %v2768, 1832
          %v2998 = vadd.s32 %v2768, 1840
          %v2999 = vadd.s32 %v2768, 1848
          %v3000 = vadd.s32 %v2768, 1856
          %v3001 = vadd.s32 %v2768, 1864
          %v3002 = vadd.s32 %v2768, 1872
          %v3003 = vadd.s32 %v2768, 1880
          %v3004 = vadd.s32 %v2768, 1888
          %v3005 = vadd.s32 %v2768, 1896
          %v3006 = vadd.s32 %v2768, 1904
          %v3007 = vadd.s32 %v2768, 1912
          %v3008 = vadd.s32 %v2768, 1920
          %v3009 = vadd.s32 %v2768, 1928
          %v3010 = vadd.s32 %v2768, 1936
          %v3011 = vadd.s32 %v2768, 1944
          %v3012 = vadd.s32 %v2768, 1952
          %v3013 = vadd.s32 %v2768, 1960
          %v3014 = vadd.s32 %v2768, 1968
          %v3015 = vadd.s32 %v2768, 1976
          %v3016 = vadd.s32 %v2768, 1984
          %v3017 = vadd.s32 %v2768, 1992
          %v3018 = vadd.s32 %v2768, 2000
          %v3019 = vadd.s32 %v2768, 2008
          %v3020 = vadd.s32 %v2768, 2016
          %v3021 = vadd.s32 %v2768, 2024
          %v3022 = vadd.s32 %v2768, 2032
          %v3023 = vadd.s32 %v2768, 2040
          %v3024 = vadd.s32 %v2768, 2048
          %v3025 = vadd.s32 %v2768, 2056
          %v3026 = vadd.s32 %v2768, 2064
          %v3027 = vadd.s32 %v2768, 2072
          %v3028 = vadd.s32 %v2768, 2080
          %v3029 = vadd.s32 %v2768, 2088
          %v3030 = vadd.s32 %v2768, 2096
          %v3031 = vadd.s32 %v2768, 2104
          %v3032 = vadd.s32 %v2768, 2112
          %v3033 = vadd.s32 %v2768, 2120
          %v3034 = vadd.s32 %v2768, 2128
          %v3035 = vadd.s32 %v2768, 2136
          %v3036 = vadd.s32 %v2768, 2144
          %v3037 = vadd.s32 %v2768, 2152
          %v3038 = vadd.s32 %v2768, 2160
          %v3039 = vadd.s32 %v2768, 2168
          %v3040 = vadd.s32 %v2768, 2176
          %v3041 = vadd.s32 %v2768, 2184
          %v3042 = vadd.s32 %v2768, 2192
          %v3043 = vadd.s32 %v2768, 2200
          %v3044 = vadd.s32 %v2768, 2208
          %v3045 = vadd.s32 %v2768, 2216
          %v3046 = vadd.s32 %v2768, 2224
          %v3047 = vadd.s32 %v2768, 2232
          %v3048 = vadd.s32 %v2768, 2240
          %v3049 = vadd.s32 %v2768, 2248
          %v3050 = vadd.s32 %v2768, 2256
          %v3051 = vadd.s32 %v2768, 2264
          %v3052 = vadd.s32 %v2768, 2272
          %v3053 = vadd.s32 %v2768, 2280
          %v3054 = vadd.s32 %v2768, 2288
          %v3055 = vadd.s32 %v2768, 2296
          %v3056 = vadd.s32 %v2768, 2304
          %v3057 = vadd.s32 %v2768, 2312
          %v3058 = vadd.s32 %v2768, 2320
          %v3059 = vadd.s32 %v2768, 2328
          %v3060 = vadd.s32 %v2768, 2336
          %v3061 = vadd.s32 %v2768, 2344
          %v3062 = vadd.s32 %v2768, 2352
          %v3063 = vadd.s32 %v2768, 2360
          %v3064 = vadd.s32 %v2768, 2368
          %v3065 = vadd.s32 %v2768, 2376
          %v3066 = vadd.s32 %v2768, 2384
          %v3067 = vadd.s32 %v2768, 2392
          %v3068 = vadd.s32 %v2768, 2400
          %v3069 = vadd.s32 %v2768, 2408
          %v3070 = vadd.s32 %v2768, 2416
          %v3071 = vadd.s32 %v2768, 2424
          %v3072 = vadd.s32 %v2768, 2432
          %v3073 = vadd.s32 %v2768, 2440
          %v3074 = vadd.s32 %v2768, 2448
          %v3075 = vadd.s32 %v2768, 2456
          %v3076 = vadd.s32 %v2768, 2464
          %v3077 = vadd.s32 %v2768, 2472
          %v3078 = vadd.s32 %v2768, 2480
          %v3079 = vadd.s32 %v2768, 2488
          %v3080 = vadd.s32 %v2768, 2496
          %v3081 = vadd.s32 %v2768, 2504
          %v3082 = vadd.s32 %v2768, 2512
          %v3083 = vadd.s32 %v2768, 2520
          %v3084 = vadd.s32 %v2768, 2528
          %v3085 = vadd.s32 %v2768, 2536
          %v3086 = vadd.s32 %v2768, 2544
          %v3087 = vadd.s32 %v2768, 2552
          %v3088 = vadd.s32 %v2768, 2560
          %v3089 = vadd.s32 %v2768, 2568
          %v3090 = vadd.s32 %v2768, 2576
          %v3091 = vadd.s32 %v2768, 2584
          %v3092 = vadd.s32 %v2768, 2592
          %v3093 = vadd.s32 %v2768, 2600
          %v3094 = vadd.s32 %v2768, 2608
          %v3095 = vadd.s32 %v2768, 2616
          %v3096 = vadd.s32 %v2768, 2624
          %v3097 = vadd.s32 %v2768, 2632
          %v3098 = vadd.s32 %v2768, 2640
          %v3099 = vadd.s32 %v2768, 2648
          %v3100 = vadd.s32 %v2768, 2656
          %v3101 = vadd.s32 %v2768, 2664
          %v3102 = vadd.s32 %v2768, 2672
          %v3103 = vadd.s32 %v2768, 2680
          %v3104 = vadd.s32 %v2768, 2688
          %v3105 = vadd.s32 %v2768, 2696
          %v3106 = vadd.s32 %v2768, 2704
          %v3107 = vadd.s32 %v2768, 2712
          %v3108 = vadd.s32 %v2768, 2720
          %v3109 = vadd.s32 %v2768, 2728
          %v3110 = vadd.s32 %v2768, 2736
          %v3111 = vadd.s32 %v2768, 2744
          %v3112 = vadd.s32 %v2768, 2752
          %v3113 = vadd.s32 %v2768, 2760
          %v3114 = vadd.s32 %v2768, 2768
          %v3115 = vadd.s32 %v2768, 2776
          %v3116 = vadd.s32 %v2768, 2784
          %v3117 = vadd.s32 %v2768, 2792
          %v3118 = vadd.s32 %v2768, 2800
          %v3119 = vadd.s32 %v2768, 2808
          %v3120 = vadd.s32 %v2768, 2816
          %v3121 = vadd.s32 %v2768, 2824
          %v3122 = vadd.s32 %v2768, 2832
          %v3123 = vadd.s32 %v2768, 2840
          %v3124 = vadd.s32 %v2768, 2848
          %v3125 = vadd.s32 %v2768, 2856
          %v3126 = vadd.s32 %v2768, 2864
          %v3127 = vadd.s32 %v2768, 2872
          %v3128 = vadd.s32 %v2768, 2880
          %v3129 = vadd.s32 %v2768, 2888
          %v3130 = vadd.s32 %v2768, 2896
          %v3131 = vadd.s32 %v2768, 2904
          %v3132 = vadd.s32 %v2768, 2912
          %v3133 = vadd.s32 %v2768, 2920
          %v3134 = vadd.s32 %v2768, 2928
          %v3135 = vadd.s32 %v2768, 2936
          %v3136 = vadd.s32 %v2768, 2944
          %v3137 = vadd.s32 %v2768, 2952
          %v3138 = vadd.s32 %v2768, 2960
          %v3139 = vadd.s32 %v2768, 2968
          %v3140 = vadd.s32 %v2768, 2976
          %v3141 = vadd.s32 %v2768, 2984
          %v3142 = vadd.s32 %v2768, 2992
          %v3143 = vadd.s32 %v2768, 3000
          %v3144 = vadd.s32 %v2768, 3008
          %v3145 = vadd.s32 %v2768, 3016
          %v3146 = vadd.s32 %v2768, 3024
          %v3147 = vadd.s32 %v2768, 3032
          %v3148 = vadd.s32 %v2768, 3040
          %v3149 = vadd.s32 %v2768, 3048
          %v3150 = vadd.s32 %v2768, 3056
          %v3151 = vadd.s32 %v2768, 3064
          %v3152 = vadd.s32 %v2768, 3072
          %v3153 = vadd.s32 %v2768, 3080
          %v3154 = vadd.s32 %v2768, 3088
          %v3155 = vadd.s32 %v2768, 3096
          %v3156 = vadd.s32 %v2768, 3104
          %v3157 = vadd.s32 %v2768, 3112
          %v3158 = vadd.s32 %v2768, 3120
          %v3159 = vadd.s32 %v2768, 3128
          %v3160 = vadd.s32 %v2768, 3136
          %v3161 = vadd.s32 %v2768, 3144
          %v3162 = vadd.s32 %v2768, 3152
          %v3163 = vadd.s32 %v2768, 3160
          %v3164 = vadd.s32 %v2768, 3168
          %v3165 = vadd.s32 %v2768, 3176
          %v3166 = vadd.s32 %v2768, 3184
          %v3167 = vadd.s32 %v2768, 3192
          %v3168 = vadd.s32 %v2768, 3200
          %v3169 = vadd.s32 %v2768, 3208
          %v3170 = vadd.s32 %v2768, 3216
          %v3171 = vadd.s32 %v2768, 3224
          %v3172 = vadd.s32 %v2768, 3232
          %v3173 = vadd.s32 %v2768, 3240
          %v3174 = vadd.s32 %v2768, 3248
          %v3175 = vadd.s32 %v2768, 3256
          %v3176 = vadd.s32 %v2768, 3264
          %v3177 = vadd.s32 %v2768, 3272
          %v3178 = vadd.s32 %v2768, 3280
          %v3179 = vadd.s32 %v2768, 3288
          %v3180 = vadd.s32 %v2768, 3296
          %v3181 = vadd.s32 %v2768, 3304
          %v3182 = vadd.s32 %v2768, 3312
          %v3183 = vadd.s32 %v2768, 3320
          %v3184 = vadd.s32 %v2768, 3328
          %v3185 = vadd.s32 %v2768, 3336
          %v3186 = vadd.s32 %v2768, 3344
          %v3187 = vadd.s32 %v2768, 3352
          %v3188 = vadd.s32 %v2768, 3360
          %v3189 = vadd.s32 %v2768, 3368
          %v3190 = vadd.s32 %v2768, 3376
          %v3191 = vadd.s32 %v2768, 3384
          %v3192 = vadd.s32 %v2768, 3392
          %v3193 = vadd.s32 %v2768, 3400
          %v3194 = vadd.s32 %v2768, 3408
          %v3195 = vadd.s32 %v2768, 3416
          %v3196 = vadd.s32 %v2768, 3424
          %v3197 = vadd.s32 %v2768, 3432
          %v3198 = vadd.s32 %v2768, 3440
          %v3199 = vadd.s32 %v2768, 3448
          %v3200 = vadd.s32 %v2768, 3456
          %v3201 = vadd.s32 %v2768, 3464
          %v3202 = vadd.s32 %v2768, 3472
          %v3203 = vadd.s32 %v2768, 3480
          %v3204 = vadd.s32 %v2768, 3488
          %v3205 = vadd.s32 %v2768, 3496
          %v3206 = vadd.s32 %v2768, 3504
          %v3207 = vadd.s32 %v2768, 3512
          %v3208 = vadd.s32 %v2768, 3520
          %v3209 = vadd.s32 %v2768, 3528
          %v3210 = vadd.s32 %v2768, 3536
          %v3211 = vadd.s32 %v2768, 3544
          %v3212 = vadd.s32 %v2768, 3552
          %v3213 = vadd.s32 %v2768, 3560
          %v3214 = vadd.s32 %v2768, 3568
          %v3215 = vadd.s32 %v2768, 3576
          %v3216 = vadd.s32 %v2768, 3584
          %v3217 = vadd.s32 %v2768, 3592
          %v3218 = vadd.s32 %v2768, 3600
          %v3219 = vadd.s32 %v2768, 3608
          %v3220 = vadd.s32 %v2768, 3616
          %v3221 = vadd.s32 %v2768, 3624
          %v3222 = vadd.s32 %v2768, 3632
          %v3223 = vadd.s32 %v2768, 3640
          %v3224 = vadd.s32 %v2768, 3648
          %v3225 = vadd.s32 %v2768, 3656
          %v3226 = vadd.s32 %v2768, 3664
          %v3227 = vadd.s32 %v2768, 3672
          %v3228 = vadd.s32 %v2768, 3680
          %v3229 = vadd.s32 %v2768, 3688
          %v3230 = vadd.s32 %v2768, 3696
          %v3231 = vadd.s32 %v2768, 3704
          %v3232 = vadd.s32 %v2768, 3712
          %v3233 = vadd.s32 %v2768, 3720
          %v3234 = vadd.s32 %v2768, 3728
          %v3235 = vadd.s32 %v2768, 3736
          %v3236 = vadd.s32 %v2768, 3744
          %v3237 = vadd.s32 %v2768, 3752
          %v3238 = vadd.s32 %v2768, 3760
          %v3239 = vadd.s32 %v2768, 3768
          %v3240 = vadd.s32 %v2768, 3776
          %v3241 = vadd.s32 %v2768, 3784
          %v3242 = vadd.s32 %v2768, 3792
          %v3243 = vadd.s32 %v2768, 3800
          %v3244 = vadd.s32 %v2768, 3808
          %v3245 = vadd.s32 %v2768, 3816
          %v3246 = vadd.s32 %v2768, 3824
          %v3247 = vadd.s32 %v2768, 3832
          %v3248 = vadd.s32 %v2768, 3840
          %v3249 = vadd.s32 %v2768, 3848
          %v3250 = vadd.s32 %v2768, 3856
          %v3251 = vadd.s32 %v2768, 3864
          %v3252 = vadd.s32 %v2768, 3872
          %v3253 = vadd.s32 %v2768, 3880
          %v3254 = vadd.s32 %v2768, 3888
          %v3255 = vadd.s32 %v2768, 3896
          %v3256 = vadd.s32 %v2768, 3904
          %v3257 = vadd.s32 %v2768, 3912
          %v3258 = vadd.s32 %v2768, 3920
          %v3259 = vadd.s32 %v2768, 3928
          %v3260 = vadd.s32 %v2768, 3936
          %v3261 = vadd.s32 %v2768, 3944
          %v3262 = vadd.s32 %v2768, 3952
          %v3263 = vadd.s32 %v2768, 3960
          %v3264 = vadd.s32 %v2768, 3968
          %v3265 = vadd.s32 %v2768, 3976
          %v3266 = vadd.s32 %v2768, 3984
          %v3267 = vadd.s32 %v2768, 3992
          %v3268 = vadd.s32 %v2768, 4000
          %v3269 = vadd.s32 %v2768, 4008
          %v3270 = vadd.s32 %v2768, 4016
          %v3271 = vadd.s32 %v2768, 4024
          %v3272 = vadd.s32 %v2768, 4032
          %v3273 = vadd.s32 %v2768, 4040
          %v3274 = vadd.s32 %v2768, 4048
          %v3275 = vadd.s32 %v2768, 4056
          %v3276 = vadd.s32 %v2768, 4064
          %v3277 = vadd.s32 %v2768, 4072
          %v3278 = vadd.s32 %v2768, 4080
          %v3279 = vadd.s32 %v2768, 4088
          %s3280 = ssub.s32 12297, %s181
          %v3281 = vstv %s3280
          %vm3282 = vcmp.lt.s32.totalorder %v2768, %v3281
          %vm3283 = vcmp.lt.s32.totalorder %v2769, %v3281
          %vm3284 = vcmp.lt.s32.totalorder %v2770, %v3281
          %vm3285 = vcmp.lt.s32.totalorder %v2771, %v3281
          %vm3286 = vcmp.lt.s32.totalorder %v2772, %v3281
          %vm3287 = vcmp.lt.s32.totalorder %v2773, %v3281
          %vm3288 = vcmp.lt.s32.totalorder %v2774, %v3281
          %vm3289 = vcmp.lt.s32.totalorder %v2775, %v3281
          %vm3290 = vcmp.lt.s32.totalorder %v2776, %v3281
          %vm3291 = vcmp.lt.s32.totalorder %v2777, %v3281
          %vm3292 = vcmp.lt.s32.totalorder %v2778, %v3281
          %vm3293 = vcmp.lt.s32.totalorder %v2779, %v3281
          %vm3294 = vcmp.lt.s32.totalorder %v2780, %v3281
          %vm3295 = vcmp.lt.s32.totalorder %v2781, %v3281
          %vm3296 = vcmp.lt.s32.totalorder %v2782, %v3281
          %vm3297 = vcmp.lt.s32.totalorder %v2783, %v3281
          %vm3298 = vcmp.lt.s32.totalorder %v2784, %v3281
          %vm3299 = vcmp.lt.s32.totalorder %v2785, %v3281
          %vm3300 = vcmp.lt.s32.totalorder %v2786, %v3281
          %vm3301 = vcmp.lt.s32.totalorder %v2787, %v3281
          %vm3302 = vcmp.lt.s32.totalorder %v2788, %v3281
          %vm3303 = vcmp.lt.s32.totalorder %v2789, %v3281
          %vm3304 = vcmp.lt.s32.totalorder %v2790, %v3281
          %vm3305 = vcmp.lt.s32.totalorder %v2791, %v3281
          %vm3306 = vcmp.lt.s32.totalorder %v2792, %v3281
          %vm3307 = vcmp.lt.s32.totalorder %v2793, %v3281
          %vm3308 = vcmp.lt.s32.totalorder %v2794, %v3281
          %vm3309 = vcmp.lt.s32.totalorder %v2795, %v3281
          %vm3310 = vcmp.lt.s32.totalorder %v2796, %v3281
          %vm3311 = vcmp.lt.s32.totalorder %v2797, %v3281
          %vm3312 = vcmp.lt.s32.totalorder %v2798, %v3281
          %vm3313 = vcmp.lt.s32.totalorder %v2799, %v3281
          %vm3314 = vcmp.lt.s32.totalorder %v2800, %v3281
          %vm3315 = vcmp.lt.s32.totalorder %v2801, %v3281
          %vm3316 = vcmp.lt.s32.totalorder %v2802, %v3281
          %vm3317 = vcmp.lt.s32.totalorder %v2803, %v3281
          %vm3318 = vcmp.lt.s32.totalorder %v2804, %v3281
          %vm3319 = vcmp.lt.s32.totalorder %v2805, %v3281
          %vm3320 = vcmp.lt.s32.totalorder %v2806, %v3281
          %vm3321 = vcmp.lt.s32.totalorder %v2807, %v3281
          %vm3322 = vcmp.lt.s32.totalorder %v2808, %v3281
          %vm3323 = vcmp.lt.s32.totalorder %v2809, %v3281
          %vm3324 = vcmp.lt.s32.totalorder %v2810, %v3281
          %vm3325 = vcmp.lt.s32.totalorder %v2811, %v3281
          %vm3326 = vcmp.lt.s32.totalorder %v2812, %v3281
          %vm3327 = vcmp.lt.s32.totalorder %v2813, %v3281
          %vm3328 = vcmp.lt.s32.totalorder %v2814, %v3281
          %vm3329 = vcmp.lt.s32.totalorder %v2815, %v3281
          %vm3330 = vcmp.lt.s32.totalorder %v2816, %v3281
          %vm3331 = vcmp.lt.s32.totalorder %v2817, %v3281
          %vm3332 = vcmp.lt.s32.totalorder %v2818, %v3281
          %vm3333 = vcmp.lt.s32.totalorder %v2819, %v3281
          %vm3334 = vcmp.lt.s32.totalorder %v2820, %v3281
          %vm3335 = vcmp.lt.s32.totalorder %v2821, %v3281
          %vm3336 = vcmp.lt.s32.totalorder %v2822, %v3281
          %vm3337 = vcmp.lt.s32.totalorder %v2823, %v3281
          %vm3338 = vcmp.lt.s32.totalorder %v2824, %v3281
          %vm3339 = vcmp.lt.s32.totalorder %v2825, %v3281
          %vm3340 = vcmp.lt.s32.totalorder %v2826, %v3281
          %vm3341 = vcmp.lt.s32.totalorder %v2827, %v3281
          %vm3342 = vcmp.lt.s32.totalorder %v2828, %v3281
          %vm3343 = vcmp.lt.s32.totalorder %v2829, %v3281
          %vm3344 = vcmp.lt.s32.totalorder %v2830, %v3281
          %vm3345 = vcmp.lt.s32.totalorder %v2831, %v3281
          %vm3346 = vcmp.lt.s32.totalorder %v2832, %v3281
          %vm3347 = vcmp.lt.s32.totalorder %v2833, %v3281
          %vm3348 = vcmp.lt.s32.totalorder %v2834, %v3281
          %vm3349 = vcmp.lt.s32.totalorder %v2835, %v3281
          %vm3350 = vcmp.lt.s32.totalorder %v2836, %v3281
          %vm3351 = vcmp.lt.s32.totalorder %v2837, %v3281
          %vm3352 = vcmp.lt.s32.totalorder %v2838, %v3281
          %vm3353 = vcmp.lt.s32.totalorder %v2839, %v3281
          %vm3354 = vcmp.lt.s32.totalorder %v2840, %v3281
          %vm3355 = vcmp.lt.s32.totalorder %v2841, %v3281
          %vm3356 = vcmp.lt.s32.totalorder %v2842, %v3281
          %vm3357 = vcmp.lt.s32.totalorder %v2843, %v3281
          %vm3358 = vcmp.lt.s32.totalorder %v2844, %v3281
          %vm3359 = vcmp.lt.s32.totalorder %v2845, %v3281
          %vm3360 = vcmp.lt.s32.totalorder %v2846, %v3281
          %vm3361 = vcmp.lt.s32.totalorder %v2847, %v3281
          %vm3362 = vcmp.lt.s32.totalorder %v2848, %v3281
          %vm3363 = vcmp.lt.s32.totalorder %v2849, %v3281
          %vm3364 = vcmp.lt.s32.totalorder %v2850, %v3281
          %vm3365 = vcmp.lt.s32.totalorder %v2851, %v3281
          %vm3366 = vcmp.lt.s32.totalorder %v2852, %v3281
          %vm3367 = vcmp.lt.s32.totalorder %v2853, %v3281
          %vm3368 = vcmp.lt.s32.totalorder %v2854, %v3281
          %vm3369 = vcmp.lt.s32.totalorder %v2855, %v3281
          %vm3370 = vcmp.lt.s32.totalorder %v2856, %v3281
          %vm3371 = vcmp.lt.s32.totalorder %v2857, %v3281
          %vm3372 = vcmp.lt.s32.totalorder %v2858, %v3281
          %vm3373 = vcmp.lt.s32.totalorder %v2859, %v3281
          %vm3374 = vcmp.lt.s32.totalorder %v2860, %v3281
          %vm3375 = vcmp.lt.s32.totalorder %v2861, %v3281
          %vm3376 = vcmp.lt.s32.totalorder %v2862, %v3281
          %vm3377 = vcmp.lt.s32.totalorder %v2863, %v3281
          %vm3378 = vcmp.lt.s32.totalorder %v2864, %v3281
          %vm3379 = vcmp.lt.s32.totalorder %v2865, %v3281
          %vm3380 = vcmp.lt.s32.totalorder %v2866, %v3281
          %vm3381 = vcmp.lt.s32.totalorder %v2867, %v3281
          %vm3382 = vcmp.lt.s32.totalorder %v2868, %v3281
          %vm3383 = vcmp.lt.s32.totalorder %v2869, %v3281
          %vm3384 = vcmp.lt.s32.totalorder %v2870, %v3281
          %vm3385 = vcmp.lt.s32.totalorder %v2871, %v3281
          %vm3386 = vcmp.lt.s32.totalorder %v2872, %v3281
          %vm3387 = vcmp.lt.s32.totalorder %v2873, %v3281
          %vm3388 = vcmp.lt.s32.totalorder %v2874, %v3281
          %vm3389 = vcmp.lt.s32.totalorder %v2875, %v3281
          %vm3390 = vcmp.lt.s32.totalorder %v2876, %v3281
          %vm3391 = vcmp.lt.s32.totalorder %v2877, %v3281
          %vm3392 = vcmp.lt.s32.totalorder %v2878, %v3281
          %vm3393 = vcmp.lt.s32.totalorder %v2879, %v3281
          %vm3394 = vcmp.lt.s32.totalorder %v2880, %v3281
          %vm3395 = vcmp.lt.s32.totalorder %v2881, %v3281
          %vm3396 = vcmp.lt.s32.totalorder %v2882, %v3281
          %vm3397 = vcmp.lt.s32.totalorder %v2883, %v3281
          %vm3398 = vcmp.lt.s32.totalorder %v2884, %v3281
          %vm3399 = vcmp.lt.s32.totalorder %v2885, %v3281
          %vm3400 = vcmp.lt.s32.totalorder %v2886, %v3281
          %vm3401 = vcmp.lt.s32.totalorder %v2887, %v3281
          %vm3402 = vcmp.lt.s32.totalorder %v2888, %v3281
          %vm3403 = vcmp.lt.s32.totalorder %v2889, %v3281
          %vm3404 = vcmp.lt.s32.totalorder %v2890, %v3281
          %vm3405 = vcmp.lt.s32.totalorder %v2891, %v3281
          %vm3406 = vcmp.lt.s32.totalorder %v2892, %v3281
          %vm3407 = vcmp.lt.s32.totalorder %v2893, %v3281
          %vm3408 = vcmp.lt.s32.totalorder %v2894, %v3281
          %vm3409 = vcmp.lt.s32.totalorder %v2895, %v3281
          %vm3410 = vcmp.lt.s32.totalorder %v2896, %v3281
          %vm3411 = vcmp.lt.s32.totalorder %v2897, %v3281
          %vm3412 = vcmp.lt.s32.totalorder %v2898, %v3281
          %vm3413 = vcmp.lt.s32.totalorder %v2899, %v3281
          %vm3414 = vcmp.lt.s32.totalorder %v2900, %v3281
          %vm3415 = vcmp.lt.s32.totalorder %v2901, %v3281
          %vm3416 = vcmp.lt.s32.totalorder %v2902, %v3281
          %vm3417 = vcmp.lt.s32.totalorder %v2903, %v3281
          %vm3418 = vcmp.lt.s32.totalorder %v2904, %v3281
          %vm3419 = vcmp.lt.s32.totalorder %v2905, %v3281
          %vm3420 = vcmp.lt.s32.totalorder %v2906, %v3281
          %vm3421 = vcmp.lt.s32.totalorder %v2907, %v3281
          %vm3422 = vcmp.lt.s32.totalorder %v2908, %v3281
          %vm3423 = vcmp.lt.s32.totalorder %v2909, %v3281
          %vm3424 = vcmp.lt.s32.totalorder %v2910, %v3281
          %vm3425 = vcmp.lt.s32.totalorder %v2911, %v3281
          %vm3426 = vcmp.lt.s32.totalorder %v2912, %v3281
          %vm3427 = vcmp.lt.s32.totalorder %v2913, %v3281
          %vm3428 = vcmp.lt.s32.totalorder %v2914, %v3281
          %vm3429 = vcmp.lt.s32.totalorder %v2915, %v3281
          %vm3430 = vcmp.lt.s32.totalorder %v2916, %v3281
          %vm3431 = vcmp.lt.s32.totalorder %v2917, %v3281
          %vm3432 = vcmp.lt.s32.totalorder %v2918, %v3281
          %vm3433 = vcmp.lt.s32.totalorder %v2919, %v3281
          %vm3434 = vcmp.lt.s32.totalorder %v2920, %v3281
          %vm3435 = vcmp.lt.s32.totalorder %v2921, %v3281
          %vm3436 = vcmp.lt.s32.totalorder %v2922, %v3281
          %vm3437 = vcmp.lt.s32.totalorder %v2923, %v3281
          %vm3438 = vcmp.lt.s32.totalorder %v2924, %v3281
          %vm3439 = vcmp.lt.s32.totalorder %v2925, %v3281
          %vm3440 = vcmp.lt.s32.totalorder %v2926, %v3281
          %vm3441 = vcmp.lt.s32.totalorder %v2927, %v3281
          %vm3442 = vcmp.lt.s32.totalorder %v2928, %v3281
          %vm3443 = vcmp.lt.s32.totalorder %v2929, %v3281
          %vm3444 = vcmp.lt.s32.totalorder %v2930, %v3281
          %vm3445 = vcmp.lt.s32.totalorder %v2931, %v3281
          %vm3446 = vcmp.lt.s32.totalorder %v2932, %v3281
          %vm3447 = vcmp.lt.s32.totalorder %v2933, %v3281
          %vm3448 = vcmp.lt.s32.totalorder %v2934, %v3281
          %vm3449 = vcmp.lt.s32.totalorder %v2935, %v3281
          %vm3450 = vcmp.lt.s32.totalorder %v2936, %v3281
          %vm3451 = vcmp.lt.s32.totalorder %v2937, %v3281
          %vm3452 = vcmp.lt.s32.totalorder %v2938, %v3281
          %vm3453 = vcmp.lt.s32.totalorder %v2939, %v3281
          %vm3454 = vcmp.lt.s32.totalorder %v2940, %v3281
          %vm3455 = vcmp.lt.s32.totalorder %v2941, %v3281
          %vm3456 = vcmp.lt.s32.totalorder %v2942, %v3281
          %vm3457 = vcmp.lt.s32.totalorder %v2943, %v3281
          %vm3458 = vcmp.lt.s32.totalorder %v2944, %v3281
          %vm3459 = vcmp.lt.s32.totalorder %v2945, %v3281
          %vm3460 = vcmp.lt.s32.totalorder %v2946, %v3281
          %vm3461 = vcmp.lt.s32.totalorder %v2947, %v3281
          %vm3462 = vcmp.lt.s32.totalorder %v2948, %v3281
          %vm3463 = vcmp.lt.s32.totalorder %v2949, %v3281
          %vm3464 = vcmp.lt.s32.totalorder %v2950, %v3281
          %vm3465 = vcmp.lt.s32.totalorder %v2951, %v3281
          %vm3466 = vcmp.lt.s32.totalorder %v2952, %v3281
          %vm3467 = vcmp.lt.s32.totalorder %v2953, %v3281
          %vm3468 = vcmp.lt.s32.totalorder %v2954, %v3281
          %vm3469 = vcmp.lt.s32.totalorder %v2955, %v3281
          %vm3470 = vcmp.lt.s32.totalorder %v2956, %v3281
          %vm3471 = vcmp.lt.s32.totalorder %v2957, %v3281
          %vm3472 = vcmp.lt.s32.totalorder %v2958, %v3281
          %vm3473 = vcmp.lt.s32.totalorder %v2959, %v3281
          %vm3474 = vcmp.lt.s32.totalorder %v2960, %v3281
          %vm3475 = vcmp.lt.s32.totalorder %v2961, %v3281
          %vm3476 = vcmp.lt.s32.totalorder %v2962, %v3281
          %vm3477 = vcmp.lt.s32.totalorder %v2963, %v3281
          %vm3478 = vcmp.lt.s32.totalorder %v2964, %v3281
          %vm3479 = vcmp.lt.s32.totalorder %v2965, %v3281
          %vm3480 = vcmp.lt.s32.totalorder %v2966, %v3281
          %vm3481 = vcmp.lt.s32.totalorder %v2967, %v3281
          %vm3482 = vcmp.lt.s32.totalorder %v2968, %v3281
          %vm3483 = vcmp.lt.s32.totalorder %v2969, %v3281
          %vm3484 = vcmp.lt.s32.totalorder %v2970, %v3281
          %vm3485 = vcmp.lt.s32.totalorder %v2971, %v3281
          %vm3486 = vcmp.lt.s32.totalorder %v2972, %v3281
          %vm3487 = vcmp.lt.s32.totalorder %v2973, %v3281
          %vm3488 = vcmp.lt.s32.totalorder %v2974, %v3281
          %vm3489 = vcmp.lt.s32.totalorder %v2975, %v3281
          %vm3490 = vcmp.lt.s32.totalorder %v2976, %v3281
          %vm3491 = vcmp.lt.s32.totalorder %v2977, %v3281
          %vm3492 = vcmp.lt.s32.totalorder %v2978, %v3281
          %vm3493 = vcmp.lt.s32.totalorder %v2979, %v3281
          %vm3494 = vcmp.lt.s32.totalorder %v2980, %v3281
          %vm3495 = vcmp.lt.s32.totalorder %v2981, %v3281
          %vm3496 = vcmp.lt.s32.totalorder %v2982, %v3281
          %vm3497 = vcmp.lt.s32.totalorder %v2983, %v3281
          %vm3498 = vcmp.lt.s32.totalorder %v2984, %v3281
          %vm3499 = vcmp.lt.s32.totalorder %v2985, %v3281
          %vm3500 = vcmp.lt.s32.totalorder %v2986, %v3281
          %vm3501 = vcmp.lt.s32.totalorder %v2987, %v3281
          %vm3502 = vcmp.lt.s32.totalorder %v2988, %v3281
          %vm3503 = vcmp.lt.s32.totalorder %v2989, %v3281
          %vm3504 = vcmp.lt.s32.totalorder %v2990, %v3281
          %vm3505 = vcmp.lt.s32.totalorder %v2991, %v3281
          %vm3506 = vcmp.lt.s32.totalorder %v2992, %v3281
          %vm3507 = vcmp.lt.s32.totalorder %v2993, %v3281
          %vm3508 = vcmp.lt.s32.totalorder %v2994, %v3281
          %vm3509 = vcmp.lt.s32.totalorder %v2995, %v3281
          %vm3510 = vcmp.lt.s32.totalorder %v2996, %v3281
          %vm3511 = vcmp.lt.s32.totalorder %v2997, %v3281
          %vm3512 = vcmp.lt.s32.totalorder %v2998, %v3281
          %vm3513 = vcmp.lt.s32.totalorder %v2999, %v3281
          %vm3514 = vcmp.lt.s32.totalorder %v3000, %v3281
          %vm3515 = vcmp.lt.s32.totalorder %v3001, %v3281
          %vm3516 = vcmp.lt.s32.totalorder %v3002, %v3281
          %vm3517 = vcmp.lt.s32.totalorder %v3003, %v3281
          %vm3518 = vcmp.lt.s32.totalorder %v3004, %v3281
          %vm3519 = vcmp.lt.s32.totalorder %v3005, %v3281
          %vm3520 = vcmp.lt.s32.totalorder %v3006, %v3281
          %vm3521 = vcmp.lt.s32.totalorder %v3007, %v3281
          %vm3522 = vcmp.lt.s32.totalorder %v3008, %v3281
          %vm3523 = vcmp.lt.s32.totalorder %v3009, %v3281
          %vm3524 = vcmp.lt.s32.totalorder %v3010, %v3281
          %vm3525 = vcmp.lt.s32.totalorder %v3011, %v3281
          %vm3526 = vcmp.lt.s32.totalorder %v3012, %v3281
          %vm3527 = vcmp.lt.s32.totalorder %v3013, %v3281
          %vm3528 = vcmp.lt.s32.totalorder %v3014, %v3281
          %vm3529 = vcmp.lt.s32.totalorder %v3015, %v3281
          %vm3530 = vcmp.lt.s32.totalorder %v3016, %v3281
          %vm3531 = vcmp.lt.s32.totalorder %v3017, %v3281
          %vm3532 = vcmp.lt.s32.totalorder %v3018, %v3281
          %vm3533 = vcmp.lt.s32.totalorder %v3019, %v3281
          %vm3534 = vcmp.lt.s32.totalorder %v3020, %v3281
          %vm3535 = vcmp.lt.s32.totalorder %v3021, %v3281
          %vm3536 = vcmp.lt.s32.totalorder %v3022, %v3281
          %vm3537 = vcmp.lt.s32.totalorder %v3023, %v3281
          %vm3538 = vcmp.lt.s32.totalorder %v3024, %v3281
          %vm3539 = vcmp.lt.s32.totalorder %v3025, %v3281
          %vm3540 = vcmp.lt.s32.totalorder %v3026, %v3281
          %vm3541 = vcmp.lt.s32.totalorder %v3027, %v3281
          %vm3542 = vcmp.lt.s32.totalorder %v3028, %v3281
          %vm3543 = vcmp.lt.s32.totalorder %v3029, %v3281
          %vm3544 = vcmp.lt.s32.totalorder %v3030, %v3281
          %vm3545 = vcmp.lt.s32.totalorder %v3031, %v3281
          %vm3546 = vcmp.lt.s32.totalorder %v3032, %v3281
          %vm3547 = vcmp.lt.s32.totalorder %v3033, %v3281
          %vm3548 = vcmp.lt.s32.totalorder %v3034, %v3281
          %vm3549 = vcmp.lt.s32.totalorder %v3035, %v3281
          %vm3550 = vcmp.lt.s32.totalorder %v3036, %v3281
          %vm3551 = vcmp.lt.s32.totalorder %v3037, %v3281
          %vm3552 = vcmp.lt.s32.totalorder %v3038, %v3281
          %vm3553 = vcmp.lt.s32.totalorder %v3039, %v3281
          %vm3554 = vcmp.lt.s32.totalorder %v3040, %v3281
          %vm3555 = vcmp.lt.s32.totalorder %v3041, %v3281
          %vm3556 = vcmp.lt.s32.totalorder %v3042, %v3281
          %vm3557 = vcmp.lt.s32.totalorder %v3043, %v3281
          %vm3558 = vcmp.lt.s32.totalorder %v3044, %v3281
          %vm3559 = vcmp.lt.s32.totalorder %v3045, %v3281
          %vm3560 = vcmp.lt.s32.totalorder %v3046, %v3281
          %vm3561 = vcmp.lt.s32.totalorder %v3047, %v3281
          %vm3562 = vcmp.lt.s32.totalorder %v3048, %v3281
          %vm3563 = vcmp.lt.s32.totalorder %v3049, %v3281
          %vm3564 = vcmp.lt.s32.totalorder %v3050, %v3281
          %vm3565 = vcmp.lt.s32.totalorder %v3051, %v3281
          %vm3566 = vcmp.lt.s32.totalorder %v3052, %v3281
          %vm3567 = vcmp.lt.s32.totalorder %v3053, %v3281
          %vm3568 = vcmp.lt.s32.totalorder %v3054, %v3281
          %vm3569 = vcmp.lt.s32.totalorder %v3055, %v3281
          %vm3570 = vcmp.lt.s32.totalorder %v3056, %v3281
          %vm3571 = vcmp.lt.s32.totalorder %v3057, %v3281
          %vm3572 = vcmp.lt.s32.totalorder %v3058, %v3281
          %vm3573 = vcmp.lt.s32.totalorder %v3059, %v3281
          %vm3574 = vcmp.lt.s32.totalorder %v3060, %v3281
          %vm3575 = vcmp.lt.s32.totalorder %v3061, %v3281
          %vm3576 = vcmp.lt.s32.totalorder %v3062, %v3281
          %vm3577 = vcmp.lt.s32.totalorder %v3063, %v3281
          %vm3578 = vcmp.lt.s32.totalorder %v3064, %v3281
          %vm3579 = vcmp.lt.s32.totalorder %v3065, %v3281
          %vm3580 = vcmp.lt.s32.totalorder %v3066, %v3281
          %vm3581 = vcmp.lt.s32.totalorder %v3067, %v3281
          %vm3582 = vcmp.lt.s32.totalorder %v3068, %v3281
          %vm3583 = vcmp.lt.s32.totalorder %v3069, %v3281
          %vm3584 = vcmp.lt.s32.totalorder %v3070, %v3281
          %vm3585 = vcmp.lt.s32.totalorder %v3071, %v3281
          %vm3586 = vcmp.lt.s32.totalorder %v3072, %v3281
          %vm3587 = vcmp.lt.s32.totalorder %v3073, %v3281
          %vm3588 = vcmp.lt.s32.totalorder %v3074, %v3281
          %vm3589 = vcmp.lt.s32.totalorder %v3075, %v3281
          %vm3590 = vcmp.lt.s32.totalorder %v3076, %v3281
          %vm3591 = vcmp.lt.s32.totalorder %v3077, %v3281
          %vm3592 = vcmp.lt.s32.totalorder %v3078, %v3281
          %vm3593 = vcmp.lt.s32.totalorder %v3079, %v3281
          %vm3594 = vcmp.lt.s32.totalorder %v3080, %v3281
          %vm3595 = vcmp.lt.s32.totalorder %v3081, %v3281
          %vm3596 = vcmp.lt.s32.totalorder %v3082, %v3281
          %vm3597 = vcmp.lt.s32.totalorder %v3083, %v3281
          %vm3598 = vcmp.lt.s32.totalorder %v3084, %v3281
          %vm3599 = vcmp.lt.s32.totalorder %v3085, %v3281
          %vm3600 = vcmp.lt.s32.totalorder %v3086, %v3281
          %vm3601 = vcmp.lt.s32.totalorder %v3087, %v3281
          %vm3602 = vcmp.lt.s32.totalorder %v3088, %v3281
          %vm3603 = vcmp.lt.s32.totalorder %v3089, %v3281
          %vm3604 = vcmp.lt.s32.totalorder %v3090, %v3281
          %vm3605 = vcmp.lt.s32.totalorder %v3091, %v3281
          %vm3606 = vcmp.lt.s32.totalorder %v3092, %v3281
          %vm3607 = vcmp.lt.s32.totalorder %v3093, %v3281
          %vm3608 = vcmp.lt.s32.totalorder %v3094, %v3281
          %vm3609 = vcmp.lt.s32.totalorder %v3095, %v3281
          %vm3610 = vcmp.lt.s32.totalorder %v3096, %v3281
          %vm3611 = vcmp.lt.s32.totalorder %v3097, %v3281
          %vm3612 = vcmp.lt.s32.totalorder %v3098, %v3281
          %vm3613 = vcmp.lt.s32.totalorder %v3099, %v3281
          %vm3614 = vcmp.lt.s32.totalorder %v3100, %v3281
          %vm3615 = vcmp.lt.s32.totalorder %v3101, %v3281
          %vm3616 = vcmp.lt.s32.totalorder %v3102, %v3281
          %vm3617 = vcmp.lt.s32.totalorder %v3103, %v3281
          %vm3618 = vcmp.lt.s32.totalorder %v3104, %v3281
          %vm3619 = vcmp.lt.s32.totalorder %v3105, %v3281
          %vm3620 = vcmp.lt.s32.totalorder %v3106, %v3281
          %vm3621 = vcmp.lt.s32.totalorder %v3107, %v3281
          %vm3622 = vcmp.lt.s32.totalorder %v3108, %v3281
          %vm3623 = vcmp.lt.s32.totalorder %v3109, %v3281
          %vm3624 = vcmp.lt.s32.totalorder %v3110, %v3281
          %vm3625 = vcmp.lt.s32.totalorder %v3111, %v3281
          %vm3626 = vcmp.lt.s32.totalorder %v3112, %v3281
          %vm3627 = vcmp.lt.s32.totalorder %v3113, %v3281
          %vm3628 = vcmp.lt.s32.totalorder %v3114, %v3281
          %vm3629 = vcmp.lt.s32.totalorder %v3115, %v3281
          %vm3630 = vcmp.lt.s32.totalorder %v3116, %v3281
          %vm3631 = vcmp.lt.s32.totalorder %v3117, %v3281
          %vm3632 = vcmp.lt.s32.totalorder %v3118, %v3281
          %vm3633 = vcmp.lt.s32.totalorder %v3119, %v3281
          %vm3634 = vcmp.lt.s32.totalorder %v3120, %v3281
          %vm3635 = vcmp.lt.s32.totalorder %v3121, %v3281
          %vm3636 = vcmp.lt.s32.totalorder %v3122, %v3281
          %vm3637 = vcmp.lt.s32.totalorder %v3123, %v3281
          %vm3638 = vcmp.lt.s32.totalorder %v3124, %v3281
          %vm3639 = vcmp.lt.s32.totalorder %v3125, %v3281
          %vm3640 = vcmp.lt.s32.totalorder %v3126, %v3281
          %vm3641 = vcmp.lt.s32.totalorder %v3127, %v3281
          %vm3642 = vcmp.lt.s32.totalorder %v3128, %v3281
          %vm3643 = vcmp.lt.s32.totalorder %v3129, %v3281
          %vm3644 = vcmp.lt.s32.totalorder %v3130, %v3281
          %vm3645 = vcmp.lt.s32.totalorder %v3131, %v3281
          %vm3646 = vcmp.lt.s32.totalorder %v3132, %v3281
          %vm3647 = vcmp.lt.s32.totalorder %v3133, %v3281
          %vm3648 = vcmp.lt.s32.totalorder %v3134, %v3281
          %vm3649 = vcmp.lt.s32.totalorder %v3135, %v3281
          %vm3650 = vcmp.lt.s32.totalorder %v3136, %v3281
          %vm3651 = vcmp.lt.s32.totalorder %v3137, %v3281
          %vm3652 = vcmp.lt.s32.totalorder %v3138, %v3281
          %vm3653 = vcmp.lt.s32.totalorder %v3139, %v3281
          %vm3654 = vcmp.lt.s32.totalorder %v3140, %v3281
          %vm3655 = vcmp.lt.s32.totalorder %v3141, %v3281
          %vm3656 = vcmp.lt.s32.totalorder %v3142, %v3281
          %vm3657 = vcmp.lt.s32.totalorder %v3143, %v3281
          %vm3658 = vcmp.lt.s32.totalorder %v3144, %v3281
          %vm3659 = vcmp.lt.s32.totalorder %v3145, %v3281
          %vm3660 = vcmp.lt.s32.totalorder %v3146, %v3281
          %vm3661 = vcmp.lt.s32.totalorder %v3147, %v3281
          %vm3662 = vcmp.lt.s32.totalorder %v3148, %v3281
          %vm3663 = vcmp.lt.s32.totalorder %v3149, %v3281
          %vm3664 = vcmp.lt.s32.totalorder %v3150, %v3281
          %vm3665 = vcmp.lt.s32.totalorder %v3151, %v3281
          %vm3666 = vcmp.lt.s32.totalorder %v3152, %v3281
          %vm3667 = vcmp.lt.s32.totalorder %v3153, %v3281
          %vm3668 = vcmp.lt.s32.totalorder %v3154, %v3281
          %vm3669 = vcmp.lt.s32.totalorder %v3155, %v3281
          %vm3670 = vcmp.lt.s32.totalorder %v3156, %v3281
          %vm3671 = vcmp.lt.s32.totalorder %v3157, %v3281
          %vm3672 = vcmp.lt.s32.totalorder %v3158, %v3281
          %vm3673 = vcmp.lt.s32.totalorder %v3159, %v3281
          %vm3674 = vcmp.lt.s32.totalorder %v3160, %v3281
          %vm3675 = vcmp.lt.s32.totalorder %v3161, %v3281
          %vm3676 = vcmp.lt.s32.totalorder %v3162, %v3281
          %vm3677 = vcmp.lt.s32.totalorder %v3163, %v3281
          %vm3678 = vcmp.lt.s32.totalorder %v3164, %v3281
          %vm3679 = vcmp.lt.s32.totalorder %v3165, %v3281
          %vm3680 = vcmp.lt.s32.totalorder %v3166, %v3281
          %vm3681 = vcmp.lt.s32.totalorder %v3167, %v3281
          %vm3682 = vcmp.lt.s32.totalorder %v3168, %v3281
          %vm3683 = vcmp.lt.s32.totalorder %v3169, %v3281
          %vm3684 = vcmp.lt.s32.totalorder %v3170, %v3281
          %vm3685 = vcmp.lt.s32.totalorder %v3171, %v3281
          %vm3686 = vcmp.lt.s32.totalorder %v3172, %v3281
          %vm3687 = vcmp.lt.s32.totalorder %v3173, %v3281
          %vm3688 = vcmp.lt.s32.totalorder %v3174, %v3281
          %vm3689 = vcmp.lt.s32.totalorder %v3175, %v3281
          %vm3690 = vcmp.lt.s32.totalorder %v3176, %v3281
          %vm3691 = vcmp.lt.s32.totalorder %v3177, %v3281
          %vm3692 = vcmp.lt.s32.totalorder %v3178, %v3281
          %vm3693 = vcmp.lt.s32.totalorder %v3179, %v3281
          %vm3694 = vcmp.lt.s32.totalorder %v3180, %v3281
          %vm3695 = vcmp.lt.s32.totalorder %v3181, %v3281
          %vm3696 = vcmp.lt.s32.totalorder %v3182, %v3281
          %vm3697 = vcmp.lt.s32.totalorder %v3183, %v3281
          %vm3698 = vcmp.lt.s32.totalorder %v3184, %v3281
          %vm3699 = vcmp.lt.s32.totalorder %v3185, %v3281
          %vm3700 = vcmp.lt.s32.totalorder %v3186, %v3281
          %vm3701 = vcmp.lt.s32.totalorder %v3187, %v3281
          %vm3702 = vcmp.lt.s32.totalorder %v3188, %v3281
          %vm3703 = vcmp.lt.s32.totalorder %v3189, %v3281
          %vm3704 = vcmp.lt.s32.totalorder %v3190, %v3281
          %vm3705 = vcmp.lt.s32.totalorder %v3191, %v3281
          %vm3706 = vcmp.lt.s32.totalorder %v3192, %v3281
          %vm3707 = vcmp.lt.s32.totalorder %v3193, %v3281
          %vm3708 = vcmp.lt.s32.totalorder %v3194, %v3281
          %vm3709 = vcmp.lt.s32.totalorder %v3195, %v3281
          %vm3710 = vcmp.lt.s32.totalorder %v3196, %v3281
          %vm3711 = vcmp.lt.s32.totalorder %v3197, %v3281
          %vm3712 = vcmp.lt.s32.totalorder %v3198, %v3281
          %vm3713 = vcmp.lt.s32.totalorder %v3199, %v3281
          %vm3714 = vcmp.lt.s32.totalorder %v3200, %v3281
          %vm3715 = vcmp.lt.s32.totalorder %v3201, %v3281
          %vm3716 = vcmp.lt.s32.totalorder %v3202, %v3281
          %vm3717 = vcmp.lt.s32.totalorder %v3203, %v3281
          %vm3718 = vcmp.lt.s32.totalorder %v3204, %v3281
          %vm3719 = vcmp.lt.s32.totalorder %v3205, %v3281
          %vm3720 = vcmp.lt.s32.totalorder %v3206, %v3281
          %vm3721 = vcmp.lt.s32.totalorder %v3207, %v3281
          %vm3722 = vcmp.lt.s32.totalorder %v3208, %v3281
          %vm3723 = vcmp.lt.s32.totalorder %v3209, %v3281
          %vm3724 = vcmp.lt.s32.totalorder %v3210, %v3281
          %vm3725 = vcmp.lt.s32.totalorder %v3211, %v3281
          %vm3726 = vcmp.lt.s32.totalorder %v3212, %v3281
          %vm3727 = vcmp.lt.s32.totalorder %v3213, %v3281
          %vm3728 = vcmp.lt.s32.totalorder %v3214, %v3281
          %vm3729 = vcmp.lt.s32.totalorder %v3215, %v3281
          %vm3730 = vcmp.lt.s32.totalorder %v3216, %v3281
          %vm3731 = vcmp.lt.s32.totalorder %v3217, %v3281
          %vm3732 = vcmp.lt.s32.totalorder %v3218, %v3281
          %vm3733 = vcmp.lt.s32.totalorder %v3219, %v3281
          %vm3734 = vcmp.lt.s32.totalorder %v3220, %v3281
          %vm3735 = vcmp.lt.s32.totalorder %v3221, %v3281
          %vm3736 = vcmp.lt.s32.totalorder %v3222, %v3281
          %vm3737 = vcmp.lt.s32.totalorder %v3223, %v3281
          %vm3738 = vcmp.lt.s32.totalorder %v3224, %v3281
          %vm3739 = vcmp.lt.s32.totalorder %v3225, %v3281
          %vm3740 = vcmp.lt.s32.totalorder %v3226, %v3281
          %vm3741 = vcmp.lt.s32.totalorder %v3227, %v3281
          %vm3742 = vcmp.lt.s32.totalorder %v3228, %v3281
          %vm3743 = vcmp.lt.s32.totalorder %v3229, %v3281
          %vm3744 = vcmp.lt.s32.totalorder %v3230, %v3281
          %vm3745 = vcmp.lt.s32.totalorder %v3231, %v3281
          %vm3746 = vcmp.lt.s32.totalorder %v3232, %v3281
          %vm3747 = vcmp.lt.s32.totalorder %v3233, %v3281
          %vm3748 = vcmp.lt.s32.totalorder %v3234, %v3281
          %vm3749 = vcmp.lt.s32.totalorder %v3235, %v3281
          %vm3750 = vcmp.lt.s32.totalorder %v3236, %v3281
          %vm3751 = vcmp.lt.s32.totalorder %v3237, %v3281
          %vm3752 = vcmp.lt.s32.totalorder %v3238, %v3281
          %vm3753 = vcmp.lt.s32.totalorder %v3239, %v3281
          %vm3754 = vcmp.lt.s32.totalorder %v3240, %v3281
          %vm3755 = vcmp.lt.s32.totalorder %v3241, %v3281
          %vm3756 = vcmp.lt.s32.totalorder %v3242, %v3281
          %vm3757 = vcmp.lt.s32.totalorder %v3243, %v3281
          %vm3758 = vcmp.lt.s32.totalorder %v3244, %v3281
          %vm3759 = vcmp.lt.s32.totalorder %v3245, %v3281
          %vm3760 = vcmp.lt.s32.totalorder %v3246, %v3281
          %vm3761 = vcmp.lt.s32.totalorder %v3247, %v3281
          %vm3762 = vcmp.lt.s32.totalorder %v3248, %v3281
          %vm3763 = vcmp.lt.s32.totalorder %v3249, %v3281
          %vm3764 = vcmp.lt.s32.totalorder %v3250, %v3281
          %vm3765 = vcmp.lt.s32.totalorder %v3251, %v3281
          %vm3766 = vcmp.lt.s32.totalorder %v3252, %v3281
          %vm3767 = vcmp.lt.s32.totalorder %v3253, %v3281
          %vm3768 = vcmp.lt.s32.totalorder %v3254, %v3281
          %vm3769 = vcmp.lt.s32.totalorder %v3255, %v3281
          %vm3770 = vcmp.lt.s32.totalorder %v3256, %v3281
          %vm3771 = vcmp.lt.s32.totalorder %v3257, %v3281
          %vm3772 = vcmp.lt.s32.totalorder %v3258, %v3281
          %vm3773 = vcmp.lt.s32.totalorder %v3259, %v3281
          %vm3774 = vcmp.lt.s32.totalorder %v3260, %v3281
          %vm3775 = vcmp.lt.s32.totalorder %v3261, %v3281
          %vm3776 = vcmp.lt.s32.totalorder %v3262, %v3281
          %vm3777 = vcmp.lt.s32.totalorder %v3263, %v3281
          %vm3778 = vcmp.lt.s32.totalorder %v3264, %v3281
          %vm3779 = vcmp.lt.s32.totalorder %v3265, %v3281
          %vm3780 = vcmp.lt.s32.totalorder %v3266, %v3281
          %vm3781 = vcmp.lt.s32.totalorder %v3267, %v3281
          %vm3782 = vcmp.lt.s32.totalorder %v3268, %v3281
          %vm3783 = vcmp.lt.s32.totalorder %v3269, %v3281
          %vm3784 = vcmp.lt.s32.totalorder %v3270, %v3281
          %vm3785 = vcmp.lt.s32.totalorder %v3271, %v3281
          %vm3786 = vcmp.lt.s32.totalorder %v3272, %v3281
          %vm3787 = vcmp.lt.s32.totalorder %v3273, %v3281
          %vm3788 = vcmp.lt.s32.totalorder %v3274, %v3281
          %vm3789 = vcmp.lt.s32.totalorder %v3275, %v3281
          %vm3790 = vcmp.lt.s32.totalorder %v3276, %v3281
          %vm3791 = vcmp.lt.s32.totalorder %v3277, %v3281
          %vm3792 = vcmp.lt.s32.totalorder %v3278, %v3281
          %vm3793 = vcmp.lt.s32.totalorder %v3279, %v3281
          %v3794 = vsel %vm3282, %v2255, 0.0
          %v3795 = vsel %vm3283, %v2256, 0.0
          %v3796 = vsel %vm3284, %v2257, 0.0
          %v3797 = vsel %vm3285, %v2258, 0.0
          %v3798 = vsel %vm3286, %v2259, 0.0
          %v3799 = vsel %vm3287, %v2260, 0.0
          %v3800 = vsel %vm3288, %v2261, 0.0
          %v3801 = vsel %vm3289, %v2262, 0.0
          %v3802 = vsel %vm3290, %v2263, 0.0
          %v3803 = vsel %vm3291, %v2264, 0.0
          %v3804 = vsel %vm3292, %v2265, 0.0
          %v3805 = vsel %vm3293, %v2266, 0.0
          %v3806 = vsel %vm3294, %v2267, 0.0
          %v3807 = vsel %vm3295, %v2268, 0.0
          %v3808 = vsel %vm3296, %v2269, 0.0
          %v3809 = vsel %vm3297, %v2270, 0.0
          %v3810 = vsel %vm3298, %v2271, 0.0
          %v3811 = vsel %vm3299, %v2272, 0.0
          %v3812 = vsel %vm3300, %v2273, 0.0
          %v3813 = vsel %vm3301, %v2274, 0.0
          %v3814 = vsel %vm3302, %v2275, 0.0
          %v3815 = vsel %vm3303, %v2276, 0.0
          %v3816 = vsel %vm3304, %v2277, 0.0
          %v3817 = vsel %vm3305, %v2278, 0.0
          %v3818 = vsel %vm3306, %v2279, 0.0
          %v3819 = vsel %vm3307, %v2280, 0.0
          %v3820 = vsel %vm3308, %v2281, 0.0
          %v3821 = vsel %vm3309, %v2282, 0.0
          %v3822 = vsel %vm3310, %v2283, 0.0
          %v3823 = vsel %vm3311, %v2284, 0.0
          %v3824 = vsel %vm3312, %v2285, 0.0
          %v3825 = vsel %vm3313, %v2286, 0.0
          %v3826 = vsel %vm3314, %v2287, 0.0
          %v3827 = vsel %vm3315, %v2288, 0.0
          %v3828 = vsel %vm3316, %v2289, 0.0
          %v3829 = vsel %vm3317, %v2290, 0.0
          %v3830 = vsel %vm3318, %v2291, 0.0
          %v3831 = vsel %vm3319, %v2292, 0.0
          %v3832 = vsel %vm3320, %v2293, 0.0
          %v3833 = vsel %vm3321, %v2294, 0.0
          %v3834 = vsel %vm3322, %v2295, 0.0
          %v3835 = vsel %vm3323, %v2296, 0.0
          %v3836 = vsel %vm3324, %v2297, 0.0
          %v3837 = vsel %vm3325, %v2298, 0.0
          %v3838 = vsel %vm3326, %v2299, 0.0
          %v3839 = vsel %vm3327, %v2300, 0.0
          %v3840 = vsel %vm3328, %v2301, 0.0
          %v3841 = vsel %vm3329, %v2302, 0.0
          %v3842 = vsel %vm3330, %v2303, 0.0
          %v3843 = vsel %vm3331, %v2304, 0.0
          %v3844 = vsel %vm3332, %v2305, 0.0
          %v3845 = vsel %vm3333, %v2306, 0.0
          %v3846 = vsel %vm3334, %v2307, 0.0
          %v3847 = vsel %vm3335, %v2308, 0.0
          %v3848 = vsel %vm3336, %v2309, 0.0
          %v3849 = vsel %vm3337, %v2310, 0.0
          %v3850 = vsel %vm3338, %v2311, 0.0
          %v3851 = vsel %vm3339, %v2312, 0.0
          %v3852 = vsel %vm3340, %v2313, 0.0
          %v3853 = vsel %vm3341, %v2314, 0.0
          %v3854 = vsel %vm3342, %v2315, 0.0
          %v3855 = vsel %vm3343, %v2316, 0.0
          %v3856 = vsel %vm3344, %v2317, 0.0
          %v3857 = vsel %vm3345, %v2318, 0.0
          %v3858 = vsel %vm3346, %v2319, 0.0
          %v3859 = vsel %vm3347, %v2320, 0.0
          %v3860 = vsel %vm3348, %v2321, 0.0
          %v3861 = vsel %vm3349, %v2322, 0.0
          %v3862 = vsel %vm3350, %v2323, 0.0
          %v3863 = vsel %vm3351, %v2324, 0.0
          %v3864 = vsel %vm3352, %v2325, 0.0
          %v3865 = vsel %vm3353, %v2326, 0.0
          %v3866 = vsel %vm3354, %v2327, 0.0
          %v3867 = vsel %vm3355, %v2328, 0.0
          %v3868 = vsel %vm3356, %v2329, 0.0
          %v3869 = vsel %vm3357, %v2330, 0.0
          %v3870 = vsel %vm3358, %v2331, 0.0
          %v3871 = vsel %vm3359, %v2332, 0.0
          %v3872 = vsel %vm3360, %v2333, 0.0
          %v3873 = vsel %vm3361, %v2334, 0.0
          %v3874 = vsel %vm3362, %v2335, 0.0
          %v3875 = vsel %vm3363, %v2336, 0.0
          %v3876 = vsel %vm3364, %v2337, 0.0
          %v3877 = vsel %vm3365, %v2338, 0.0
          %v3878 = vsel %vm3366, %v2339, 0.0
          %v3879 = vsel %vm3367, %v2340, 0.0
          %v3880 = vsel %vm3368, %v2341, 0.0
          %v3881 = vsel %vm3369, %v2342, 0.0
          %v3882 = vsel %vm3370, %v2343, 0.0
          %v3883 = vsel %vm3371, %v2344, 0.0
          %v3884 = vsel %vm3372, %v2345, 0.0
          %v3885 = vsel %vm3373, %v2346, 0.0
          %v3886 = vsel %vm3374, %v2347, 0.0
          %v3887 = vsel %vm3375, %v2348, 0.0
          %v3888 = vsel %vm3376, %v2349, 0.0
          %v3889 = vsel %vm3377, %v2350, 0.0
          %v3890 = vsel %vm3378, %v2351, 0.0
          %v3891 = vsel %vm3379, %v2352, 0.0
          %v3892 = vsel %vm3380, %v2353, 0.0
          %v3893 = vsel %vm3381, %v2354, 0.0
          %v3894 = vsel %vm3382, %v2355, 0.0
          %v3895 = vsel %vm3383, %v2356, 0.0
          %v3896 = vsel %vm3384, %v2357, 0.0
          %v3897 = vsel %vm3385, %v2358, 0.0
          %v3898 = vsel %vm3386, %v2359, 0.0
          %v3899 = vsel %vm3387, %v2360, 0.0
          %v3900 = vsel %vm3388, %v2361, 0.0
          %v3901 = vsel %vm3389, %v2362, 0.0
          %v3902 = vsel %vm3390, %v2363, 0.0
          %v3903 = vsel %vm3391, %v2364, 0.0
          %v3904 = vsel %vm3392, %v2365, 0.0
          %v3905 = vsel %vm3393, %v2366, 0.0
          %v3906 = vsel %vm3394, %v2367, 0.0
          %v3907 = vsel %vm3395, %v2368, 0.0
          %v3908 = vsel %vm3396, %v2369, 0.0
          %v3909 = vsel %vm3397, %v2370, 0.0
          %v3910 = vsel %vm3398, %v2371, 0.0
          %v3911 = vsel %vm3399, %v2372, 0.0
          %v3912 = vsel %vm3400, %v2373, 0.0
          %v3913 = vsel %vm3401, %v2374, 0.0
          %v3914 = vsel %vm3402, %v2375, 0.0
          %v3915 = vsel %vm3403, %v2376, 0.0
          %v3916 = vsel %vm3404, %v2377, 0.0
          %v3917 = vsel %vm3405, %v2378, 0.0
          %v3918 = vsel %vm3406, %v2379, 0.0
          %v3919 = vsel %vm3407, %v2380, 0.0
          %v3920 = vsel %vm3408, %v2381, 0.0
          %v3921 = vsel %vm3409, %v2382, 0.0
          %v3922 = vsel %vm3410, %v2383, 0.0
          %v3923 = vsel %vm3411, %v2384, 0.0
          %v3924 = vsel %vm3412, %v2385, 0.0
          %v3925 = vsel %vm3413, %v2386, 0.0
          %v3926 = vsel %vm3414, %v2387, 0.0
          %v3927 = vsel %vm3415, %v2388, 0.0
          %v3928 = vsel %vm3416, %v2389, 0.0
          %v3929 = vsel %vm3417, %v2390, 0.0
          %v3930 = vsel %vm3418, %v2391, 0.0
          %v3931 = vsel %vm3419, %v2392, 0.0
          %v3932 = vsel %vm3420, %v2393, 0.0
          %v3933 = vsel %vm3421, %v2394, 0.0
          %v3934 = vsel %vm3422, %v2395, 0.0
          %v3935 = vsel %vm3423, %v2396, 0.0
          %v3936 = vsel %vm3424, %v2397, 0.0
          %v3937 = vsel %vm3425, %v2398, 0.0
          %v3938 = vsel %vm3426, %v2399, 0.0
          %v3939 = vsel %vm3427, %v2400, 0.0
          %v3940 = vsel %vm3428, %v2401, 0.0
          %v3941 = vsel %vm3429, %v2402, 0.0
          %v3942 = vsel %vm3430, %v2403, 0.0
          %v3943 = vsel %vm3431, %v2404, 0.0
          %v3944 = vsel %vm3432, %v2405, 0.0
          %v3945 = vsel %vm3433, %v2406, 0.0
          %v3946 = vsel %vm3434, %v2407, 0.0
          %v3947 = vsel %vm3435, %v2408, 0.0
          %v3948 = vsel %vm3436, %v2409, 0.0
          %v3949 = vsel %vm3437, %v2410, 0.0
          %v3950 = vsel %vm3438, %v2411, 0.0
          %v3951 = vsel %vm3439, %v2412, 0.0
          %v3952 = vsel %vm3440, %v2413, 0.0
          %v3953 = vsel %vm3441, %v2414, 0.0
          %v3954 = vsel %vm3442, %v2415, 0.0
          %v3955 = vsel %vm3443, %v2416, 0.0
          %v3956 = vsel %vm3444, %v2417, 0.0
          %v3957 = vsel %vm3445, %v2418, 0.0
          %v3958 = vsel %vm3446, %v2419, 0.0
          %v3959 = vsel %vm3447, %v2420, 0.0
          %v3960 = vsel %vm3448, %v2421, 0.0
          %v3961 = vsel %vm3449, %v2422, 0.0
          %v3962 = vsel %vm3450, %v2423, 0.0
          %v3963 = vsel %vm3451, %v2424, 0.0
          %v3964 = vsel %vm3452, %v2425, 0.0
          %v3965 = vsel %vm3453, %v2426, 0.0
          %v3966 = vsel %vm3454, %v2427, 0.0
          %v3967 = vsel %vm3455, %v2428, 0.0
          %v3968 = vsel %vm3456, %v2429, 0.0
          %v3969 = vsel %vm3457, %v2430, 0.0
          %v3970 = vsel %vm3458, %v2431, 0.0
          %v3971 = vsel %vm3459, %v2432, 0.0
          %v3972 = vsel %vm3460, %v2433, 0.0
          %v3973 = vsel %vm3461, %v2434, 0.0
          %v3974 = vsel %vm3462, %v2435, 0.0
          %v3975 = vsel %vm3463, %v2436, 0.0
          %v3976 = vsel %vm3464, %v2437, 0.0
          %v3977 = vsel %vm3465, %v2438, 0.0
          %v3978 = vsel %vm3466, %v2439, 0.0
          %v3979 = vsel %vm3467, %v2440, 0.0
          %v3980 = vsel %vm3468, %v2441, 0.0
          %v3981 = vsel %vm3469, %v2442, 0.0
          %v3982 = vsel %vm3470, %v2443, 0.0
          %v3983 = vsel %vm3471, %v2444, 0.0
          %v3984 = vsel %vm3472, %v2445, 0.0
          %v3985 = vsel %vm3473, %v2446, 0.0
          %v3986 = vsel %vm3474, %v2447, 0.0
          %v3987 = vsel %vm3475, %v2448, 0.0
          %v3988 = vsel %vm3476, %v2449, 0.0
          %v3989 = vsel %vm3477, %v2450, 0.0
          %v3990 = vsel %vm3478, %v2451, 0.0
          %v3991 = vsel %vm3479, %v2452, 0.0
          %v3992 = vsel %vm3480, %v2453, 0.0
          %v3993 = vsel %vm3481, %v2454, 0.0
          %v3994 = vsel %vm3482, %v2455, 0.0
          %v3995 = vsel %vm3483, %v2456, 0.0
          %v3996 = vsel %vm3484, %v2457, 0.0
          %v3997 = vsel %vm3485, %v2458, 0.0
          %v3998 = vsel %vm3486, %v2459, 0.0
          %v3999 = vsel %vm3487, %v2460, 0.0
          %v4000 = vsel %vm3488, %v2461, 0.0
          %v4001 = vsel %vm3489, %v2462, 0.0
          %v4002 = vsel %vm3490, %v2463, 0.0
          %v4003 = vsel %vm3491, %v2464, 0.0
          %v4004 = vsel %vm3492, %v2465, 0.0
          %v4005 = vsel %vm3493, %v2466, 0.0
          %v4006 = vsel %vm3494, %v2467, 0.0
          %v4007 = vsel %vm3495, %v2468, 0.0
          %v4008 = vsel %vm3496, %v2469, 0.0
          %v4009 = vsel %vm3497, %v2470, 0.0
          %v4010 = vsel %vm3498, %v2471, 0.0
          %v4011 = vsel %vm3499, %v2472, 0.0
          %v4012 = vsel %vm3500, %v2473, 0.0
          %v4013 = vsel %vm3501, %v2474, 0.0
          %v4014 = vsel %vm3502, %v2475, 0.0
          %v4015 = vsel %vm3503, %v2476, 0.0
          %v4016 = vsel %vm3504, %v2477, 0.0
          %v4017 = vsel %vm3505, %v2478, 0.0
          %v4018 = vsel %vm3506, %v2479, 0.0
          %v4019 = vsel %vm3507, %v2480, 0.0
          %v4020 = vsel %vm3508, %v2481, 0.0
          %v4021 = vsel %vm3509, %v2482, 0.0
          %v4022 = vsel %vm3510, %v2483, 0.0
          %v4023 = vsel %vm3511, %v2484, 0.0
          %v4024 = vsel %vm3512, %v2485, 0.0
          %v4025 = vsel %vm3513, %v2486, 0.0
          %v4026 = vsel %vm3514, %v2487, 0.0
          %v4027 = vsel %vm3515, %v2488, 0.0
          %v4028 = vsel %vm3516, %v2489, 0.0
          %v4029 = vsel %vm3517, %v2490, 0.0
          %v4030 = vsel %vm3518, %v2491, 0.0
          %v4031 = vsel %vm3519, %v2492, 0.0
          %v4032 = vsel %vm3520, %v2493, 0.0
          %v4033 = vsel %vm3521, %v2494, 0.0
          %v4034 = vsel %vm3522, %v2495, 0.0
          %v4035 = vsel %vm3523, %v2496, 0.0
          %v4036 = vsel %vm3524, %v2497, 0.0
          %v4037 = vsel %vm3525, %v2498, 0.0
          %v4038 = vsel %vm3526, %v2499, 0.0
          %v4039 = vsel %vm3527, %v2500, 0.0
          %v4040 = vsel %vm3528, %v2501, 0.0
          %v4041 = vsel %vm3529, %v2502, 0.0
          %v4042 = vsel %vm3530, %v2503, 0.0
          %v4043 = vsel %vm3531, %v2504, 0.0
          %v4044 = vsel %vm3532, %v2505, 0.0
          %v4045 = vsel %vm3533, %v2506, 0.0
          %v4046 = vsel %vm3534, %v2507, 0.0
          %v4047 = vsel %vm3535, %v2508, 0.0
          %v4048 = vsel %vm3536, %v2509, 0.0
          %v4049 = vsel %vm3537, %v2510, 0.0
          %v4050 = vsel %vm3538, %v2511, 0.0
          %v4051 = vsel %vm3539, %v2512, 0.0
          %v4052 = vsel %vm3540, %v2513, 0.0
          %v4053 = vsel %vm3541, %v2514, 0.0
          %v4054 = vsel %vm3542, %v2515, 0.0
          %v4055 = vsel %vm3543, %v2516, 0.0
          %v4056 = vsel %vm3544, %v2517, 0.0
          %v4057 = vsel %vm3545, %v2518, 0.0
          %v4058 = vsel %vm3546, %v2519, 0.0
          %v4059 = vsel %vm3547, %v2520, 0.0
          %v4060 = vsel %vm3548, %v2521, 0.0
          %v4061 = vsel %vm3549, %v2522, 0.0
          %v4062 = vsel %vm3550, %v2523, 0.0
          %v4063 = vsel %vm3551, %v2524, 0.0
          %v4064 = vsel %vm3552, %v2525, 0.0
          %v4065 = vsel %vm3553, %v2526, 0.0
          %v4066 = vsel %vm3554, %v2527, 0.0
          %v4067 = vsel %vm3555, %v2528, 0.0
          %v4068 = vsel %vm3556, %v2529, 0.0
          %v4069 = vsel %vm3557, %v2530, 0.0
          %v4070 = vsel %vm3558, %v2531, 0.0
          %v4071 = vsel %vm3559, %v2532, 0.0
          %v4072 = vsel %vm3560, %v2533, 0.0
          %v4073 = vsel %vm3561, %v2534, 0.0
          %v4074 = vsel %vm3562, %v2535, 0.0
          %v4075 = vsel %vm3563, %v2536, 0.0
          %v4076 = vsel %vm3564, %v2537, 0.0
          %v4077 = vsel %vm3565, %v2538, 0.0
          %v4078 = vsel %vm3566, %v2539, 0.0
          %v4079 = vsel %vm3567, %v2540, 0.0
          %v4080 = vsel %vm3568, %v2541, 0.0
          %v4081 = vsel %vm3569, %v2542, 0.0
          %v4082 = vsel %vm3570, %v2543, 0.0
          %v4083 = vsel %vm3571, %v2544, 0.0
          %v4084 = vsel %vm3572, %v2545, 0.0
          %v4085 = vsel %vm3573, %v2546, 0.0
          %v4086 = vsel %vm3574, %v2547, 0.0
          %v4087 = vsel %vm3575, %v2548, 0.0
          %v4088 = vsel %vm3576, %v2549, 0.0
          %v4089 = vsel %vm3577, %v2550, 0.0
          %v4090 = vsel %vm3578, %v2551, 0.0
          %v4091 = vsel %vm3579, %v2552, 0.0
          %v4092 = vsel %vm3580, %v2553, 0.0
          %v4093 = vsel %vm3581, %v2554, 0.0
          %v4094 = vsel %vm3582, %v2555, 0.0
          %v4095 = vsel %vm3583, %v2556, 0.0
          %v4096 = vsel %vm3584, %v2557, 0.0
          %v4097 = vsel %vm3585, %v2558, 0.0
          %v4098 = vsel %vm3586, %v2559, 0.0
          %v4099 = vsel %vm3587, %v2560, 0.0
          %v4100 = vsel %vm3588, %v2561, 0.0
          %v4101 = vsel %vm3589, %v2562, 0.0
          %v4102 = vsel %vm3590, %v2563, 0.0
          %v4103 = vsel %vm3591, %v2564, 0.0
          %v4104 = vsel %vm3592, %v2565, 0.0
          %v4105 = vsel %vm3593, %v2566, 0.0
          %v4106 = vsel %vm3594, %v2567, 0.0
          %v4107 = vsel %vm3595, %v2568, 0.0
          %v4108 = vsel %vm3596, %v2569, 0.0
          %v4109 = vsel %vm3597, %v2570, 0.0
          %v4110 = vsel %vm3598, %v2571, 0.0
          %v4111 = vsel %vm3599, %v2572, 0.0
          %v4112 = vsel %vm3600, %v2573, 0.0
          %v4113 = vsel %vm3601, %v2574, 0.0
          %v4114 = vsel %vm3602, %v2575, 0.0
          %v4115 = vsel %vm3603, %v2576, 0.0
          %v4116 = vsel %vm3604, %v2577, 0.0
          %v4117 = vsel %vm3605, %v2578, 0.0
          %v4118 = vsel %vm3606, %v2579, 0.0
          %v4119 = vsel %vm3607, %v2580, 0.0
          %v4120 = vsel %vm3608, %v2581, 0.0
          %v4121 = vsel %vm3609, %v2582, 0.0
          %v4122 = vsel %vm3610, %v2583, 0.0
          %v4123 = vsel %vm3611, %v2584, 0.0
          %v4124 = vsel %vm3612, %v2585, 0.0
          %v4125 = vsel %vm3613, %v2586, 0.0
          %v4126 = vsel %vm3614, %v2587, 0.0
          %v4127 = vsel %vm3615, %v2588, 0.0
          %v4128 = vsel %vm3616, %v2589, 0.0
          %v4129 = vsel %vm3617, %v2590, 0.0
          %v4130 = vsel %vm3618, %v2591, 0.0
          %v4131 = vsel %vm3619, %v2592, 0.0
          %v4132 = vsel %vm3620, %v2593, 0.0
          %v4133 = vsel %vm3621, %v2594, 0.0
          %v4134 = vsel %vm3622, %v2595, 0.0
          %v4135 = vsel %vm3623, %v2596, 0.0
          %v4136 = vsel %vm3624, %v2597, 0.0
          %v4137 = vsel %vm3625, %v2598, 0.0
          %v4138 = vsel %vm3626, %v2599, 0.0
          %v4139 = vsel %vm3627, %v2600, 0.0
          %v4140 = vsel %vm3628, %v2601, 0.0
          %v4141 = vsel %vm3629, %v2602, 0.0
          %v4142 = vsel %vm3630, %v2603, 0.0
          %v4143 = vsel %vm3631, %v2604, 0.0
          %v4144 = vsel %vm3632, %v2605, 0.0
          %v4145 = vsel %vm3633, %v2606, 0.0
          %v4146 = vsel %vm3634, %v2607, 0.0
          %v4147 = vsel %vm3635, %v2608, 0.0
          %v4148 = vsel %vm3636, %v2609, 0.0
          %v4149 = vsel %vm3637, %v2610, 0.0
          %v4150 = vsel %vm3638, %v2611, 0.0
          %v4151 = vsel %vm3639, %v2612, 0.0
          %v4152 = vsel %vm3640, %v2613, 0.0
          %v4153 = vsel %vm3641, %v2614, 0.0
          %v4154 = vsel %vm3642, %v2615, 0.0
          %v4155 = vsel %vm3643, %v2616, 0.0
          %v4156 = vsel %vm3644, %v2617, 0.0
          %v4157 = vsel %vm3645, %v2618, 0.0
          %v4158 = vsel %vm3646, %v2619, 0.0
          %v4159 = vsel %vm3647, %v2620, 0.0
          %v4160 = vsel %vm3648, %v2621, 0.0
          %v4161 = vsel %vm3649, %v2622, 0.0
          %v4162 = vsel %vm3650, %v2623, 0.0
          %v4163 = vsel %vm3651, %v2624, 0.0
          %v4164 = vsel %vm3652, %v2625, 0.0
          %v4165 = vsel %vm3653, %v2626, 0.0
          %v4166 = vsel %vm3654, %v2627, 0.0
          %v4167 = vsel %vm3655, %v2628, 0.0
          %v4168 = vsel %vm3656, %v2629, 0.0
          %v4169 = vsel %vm3657, %v2630, 0.0
          %v4170 = vsel %vm3658, %v2631, 0.0
          %v4171 = vsel %vm3659, %v2632, 0.0
          %v4172 = vsel %vm3660, %v2633, 0.0
          %v4173 = vsel %vm3661, %v2634, 0.0
          %v4174 = vsel %vm3662, %v2635, 0.0
          %v4175 = vsel %vm3663, %v2636, 0.0
          %v4176 = vsel %vm3664, %v2637, 0.0
          %v4177 = vsel %vm3665, %v2638, 0.0
          %v4178 = vsel %vm3666, %v2639, 0.0
          %v4179 = vsel %vm3667, %v2640, 0.0
          %v4180 = vsel %vm3668, %v2641, 0.0
          %v4181 = vsel %vm3669, %v2642, 0.0
          %v4182 = vsel %vm3670, %v2643, 0.0
          %v4183 = vsel %vm3671, %v2644, 0.0
          %v4184 = vsel %vm3672, %v2645, 0.0
          %v4185 = vsel %vm3673, %v2646, 0.0
          %v4186 = vsel %vm3674, %v2647, 0.0
          %v4187 = vsel %vm3675, %v2648, 0.0
          %v4188 = vsel %vm3676, %v2649, 0.0
          %v4189 = vsel %vm3677, %v2650, 0.0
          %v4190 = vsel %vm3678, %v2651, 0.0
          %v4191 = vsel %vm3679, %v2652, 0.0
          %v4192 = vsel %vm3680, %v2653, 0.0
          %v4193 = vsel %vm3681, %v2654, 0.0
          %v4194 = vsel %vm3682, %v2655, 0.0
          %v4195 = vsel %vm3683, %v2656, 0.0
          %v4196 = vsel %vm3684, %v2657, 0.0
          %v4197 = vsel %vm3685, %v2658, 0.0
          %v4198 = vsel %vm3686, %v2659, 0.0
          %v4199 = vsel %vm3687, %v2660, 0.0
          %v4200 = vsel %vm3688, %v2661, 0.0
          %v4201 = vsel %vm3689, %v2662, 0.0
          %v4202 = vsel %vm3690, %v2663, 0.0
          %v4203 = vsel %vm3691, %v2664, 0.0
          %v4204 = vsel %vm3692, %v2665, 0.0
          %v4205 = vsel %vm3693, %v2666, 0.0
          %v4206 = vsel %vm3694, %v2667, 0.0
          %v4207 = vsel %vm3695, %v2668, 0.0
          %v4208 = vsel %vm3696, %v2669, 0.0
          %v4209 = vsel %vm3697, %v2670, 0.0
          %v4210 = vsel %vm3698, %v2671, 0.0
          %v4211 = vsel %vm3699, %v2672, 0.0
          %v4212 = vsel %vm3700, %v2673, 0.0
          %v4213 = vsel %vm3701, %v2674, 0.0
          %v4214 = vsel %vm3702, %v2675, 0.0
          %v4215 = vsel %vm3703, %v2676, 0.0
          %v4216 = vsel %vm3704, %v2677, 0.0
          %v4217 = vsel %vm3705, %v2678, 0.0
          %v4218 = vsel %vm3706, %v2679, 0.0
          %v4219 = vsel %vm3707, %v2680, 0.0
          %v4220 = vsel %vm3708, %v2681, 0.0
          %v4221 = vsel %vm3709, %v2682, 0.0
          %v4222 = vsel %vm3710, %v2683, 0.0
          %v4223 = vsel %vm3711, %v2684, 0.0
          %v4224 = vsel %vm3712, %v2685, 0.0
          %v4225 = vsel %vm3713, %v2686, 0.0
          %v4226 = vsel %vm3714, %v2687, 0.0
          %v4227 = vsel %vm3715, %v2688, 0.0
          %v4228 = vsel %vm3716, %v2689, 0.0
          %v4229 = vsel %vm3717, %v2690, 0.0
          %v4230 = vsel %vm3718, %v2691, 0.0
          %v4231 = vsel %vm3719, %v2692, 0.0
          %v4232 = vsel %vm3720, %v2693, 0.0
          %v4233 = vsel %vm3721, %v2694, 0.0
          %v4234 = vsel %vm3722, %v2695, 0.0
          %v4235 = vsel %vm3723, %v2696, 0.0
          %v4236 = vsel %vm3724, %v2697, 0.0
          %v4237 = vsel %vm3725, %v2698, 0.0
          %v4238 = vsel %vm3726, %v2699, 0.0
          %v4239 = vsel %vm3727, %v2700, 0.0
          %v4240 = vsel %vm3728, %v2701, 0.0
          %v4241 = vsel %vm3729, %v2702, 0.0
          %v4242 = vsel %vm3730, %v2703, 0.0
          %v4243 = vsel %vm3731, %v2704, 0.0
          %v4244 = vsel %vm3732, %v2705, 0.0
          %v4245 = vsel %vm3733, %v2706, 0.0
          %v4246 = vsel %vm3734, %v2707, 0.0
          %v4247 = vsel %vm3735, %v2708, 0.0
          %v4248 = vsel %vm3736, %v2709, 0.0
          %v4249 = vsel %vm3737, %v2710, 0.0
          %v4250 = vsel %vm3738, %v2711, 0.0
          %v4251 = vsel %vm3739, %v2712, 0.0
          %v4252 = vsel %vm3740, %v2713, 0.0
          %v4253 = vsel %vm3741, %v2714, 0.0
          %v4254 = vsel %vm3742, %v2715, 0.0
          %v4255 = vsel %vm3743, %v2716, 0.0
          %v4256 = vsel %vm3744, %v2717, 0.0
          %v4257 = vsel %vm3745, %v2718, 0.0
          %v4258 = vsel %vm3746, %v2719, 0.0
          %v4259 = vsel %vm3747, %v2720, 0.0
          %v4260 = vsel %vm3748, %v2721, 0.0
          %v4261 = vsel %vm3749, %v2722, 0.0
          %v4262 = vsel %vm3750, %v2723, 0.0
          %v4263 = vsel %vm3751, %v2724, 0.0
          %v4264 = vsel %vm3752, %v2725, 0.0
          %v4265 = vsel %vm3753, %v2726, 0.0
          %v4266 = vsel %vm3754, %v2727, 0.0
          %v4267 = vsel %vm3755, %v2728, 0.0
          %v4268 = vsel %vm3756, %v2729, 0.0
          %v4269 = vsel %vm3757, %v2730, 0.0
          %v4270 = vsel %vm3758, %v2731, 0.0
          %v4271 = vsel %vm3759, %v2732, 0.0
          %v4272 = vsel %vm3760, %v2733, 0.0
          %v4273 = vsel %vm3761, %v2734, 0.0
          %v4274 = vsel %vm3762, %v2735, 0.0
          %v4275 = vsel %vm3763, %v2736, 0.0
          %v4276 = vsel %vm3764, %v2737, 0.0
          %v4277 = vsel %vm3765, %v2738, 0.0
          %v4278 = vsel %vm3766, %v2739, 0.0
          %v4279 = vsel %vm3767, %v2740, 0.0
          %v4280 = vsel %vm3768, %v2741, 0.0
          %v4281 = vsel %vm3769, %v2742, 0.0
          %v4282 = vsel %vm3770, %v2743, 0.0
          %v4283 = vsel %vm3771, %v2744, 0.0
          %v4284 = vsel %vm3772, %v2745, 0.0
          %v4285 = vsel %vm3773, %v2746, 0.0
          %v4286 = vsel %vm3774, %v2747, 0.0
          %v4287 = vsel %vm3775, %v2748, 0.0
          %v4288 = vsel %vm3776, %v2749, 0.0
          %v4289 = vsel %vm3777, %v2750, 0.0
          %v4290 = vsel %vm3778, %v2751, 0.0
          %v4291 = vsel %vm3779, %v2752, 0.0
          %v4292 = vsel %vm3780, %v2753, 0.0
          %v4293 = vsel %vm3781, %v2754, 0.0
          %v4294 = vsel %vm3782, %v2755, 0.0
          %v4295 = vsel %vm3783, %v2756, 0.0
          %v4296 = vsel %vm3784, %v2757, 0.0
          %v4297 = vsel %vm3785, %v2758, 0.0
          %v4298 = vsel %vm3786, %v2759, 0.0
          %v4299 = vsel %vm3787, %v2760, 0.0
          %v4300 = vsel %vm3788, %v2761, 0.0
          %v4301 = vsel %vm3789, %v2762, 0.0
          %v4302 = vsel %vm3790, %v2763, 0.0
          %v4303 = vsel %vm3791, %v2764, 0.0
          %v4304 = vsel %vm3792, %v2765, 0.0
          %v4305 = vsel %vm3793, %v2766, 0.0
          %v4306 = vld [vmem:[%s158] sm:$0xff]
          %v4307 = vld [vmem:[%s158 + $0x8] sm:$0xff]
          %v4308 = vld [vmem:[%s158 + $0x10] sm:$0xff]
          %v4309 = vld [vmem:[%s158 + $0x18] sm:$0xff]
          %v4310 = vld [vmem:[%s158 + $0x20] sm:$0xff]
          %v4311 = vld [vmem:[%s158 + $0x28] sm:$0xff]
          %v4312 = vld [vmem:[%s158 + $0x30] sm:$0xff]
          %v4313 = vld [vmem:[%s158 + $0x38] sm:$0xff]
          %v4314 = vadd.f32 %v3794, %v3802
          %v4315 = vadd.f32 %v4314, %v3810
          %v4316 = vadd.f32 %v4315, %v3818
          %v4317 = vadd.f32 %v4316, %v3826
          %v4318 = vadd.f32 %v4317, %v3834
          %v4319 = vadd.f32 %v4318, %v3842
          %v4320 = vadd.f32 %v4319, %v3850
          %v4321 = vadd.f32 %v4320, %v3858
          %v4322 = vadd.f32 %v4321, %v3866
          %v4323 = vadd.f32 %v4322, %v3874
          %v4324 = vadd.f32 %v4323, %v3882
          %v4325 = vadd.f32 %v4324, %v3890
          %v4326 = vadd.f32 %v4325, %v3898
          %v4327 = vadd.f32 %v4326, %v3906
          %v4328 = vadd.f32 %v4327, %v3914
          %v4329 = vadd.f32 %v4328, %v3922
          %v4330 = vadd.f32 %v4329, %v3930
          %v4331 = vadd.f32 %v4330, %v3938
          %v4332 = vadd.f32 %v4331, %v3946
          %v4333 = vadd.f32 %v4332, %v3954
          %v4334 = vadd.f32 %v4333, %v3962
          %v4335 = vadd.f32 %v4334, %v3970
          %v4336 = vadd.f32 %v4335, %v3978
          %v4337 = vadd.f32 %v4336, %v3986
          %v4338 = vadd.f32 %v4337, %v3994
          %v4339 = vadd.f32 %v4338, %v4002
          %v4340 = vadd.f32 %v4339, %v4010
          %v4341 = vadd.f32 %v4340, %v4018
          %v4342 = vadd.f32 %v4341, %v4026
          %v4343 = vadd.f32 %v4342, %v4034
          %v4344 = vadd.f32 %v4343, %v4042
          %v4345 = vadd.f32 %v4344, %v4050
          %v4346 = vadd.f32 %v4345, %v4058
          %v4347 = vadd.f32 %v4346, %v4066
          %v4348 = vadd.f32 %v4347, %v4074
          %v4349 = vadd.f32 %v4348, %v4082
          %v4350 = vadd.f32 %v4349, %v4090
          %v4351 = vadd.f32 %v4350, %v4098
          %v4352 = vadd.f32 %v4351, %v4106
          %v4353 = vadd.f32 %v4352, %v4114
          %v4354 = vadd.f32 %v4353, %v4122
          %v4355 = vadd.f32 %v4354, %v4130
          %v4356 = vadd.f32 %v4355, %v4138
          %v4357 = vadd.f32 %v4356, %v4146
          %v4358 = vadd.f32 %v4357, %v4154
          %v4359 = vadd.f32 %v4358, %v4162
          %v4360 = vadd.f32 %v4359, %v4170
          %v4361 = vadd.f32 %v4360, %v4178
          %v4362 = vadd.f32 %v4361, %v4186
          %v4363 = vadd.f32 %v4362, %v4194
          %v4364 = vadd.f32 %v4363, %v4202
          %v4365 = vadd.f32 %v4364, %v4210
          %v4366 = vadd.f32 %v4365, %v4218
          %v4367 = vadd.f32 %v4366, %v4226
          %v4368 = vadd.f32 %v4367, %v4234
          %v4369 = vadd.f32 %v4368, %v4242
          %v4370 = vadd.f32 %v4369, %v4250
          %v4371 = vadd.f32 %v4370, %v4258
          %v4372 = vadd.f32 %v4371, %v4266
          %v4373 = vadd.f32 %v4372, %v4274
          %v4374 = vadd.f32 %v4373, %v4282
          %v4375 = vadd.f32 %v4374, %v4290
          %v4376 = vadd.f32 %v4375, %v4298
          %v4377 = vadd.f32 %v3795, %v3803
          %v4378 = vadd.f32 %v4377, %v3811
          %v4379 = vadd.f32 %v4378, %v3819
          %v4380 = vadd.f32 %v4379, %v3827
          %v4381 = vadd.f32 %v4380, %v3835
          %v4382 = vadd.f32 %v4381, %v3843
          %v4383 = vadd.f32 %v4382, %v3851
          %v4384 = vadd.f32 %v4383, %v3859
          %v4385 = vadd.f32 %v4384, %v3867
          %v4386 = vadd.f32 %v4385, %v3875
          %v4387 = vadd.f32 %v4386, %v3883
          %v4388 = vadd.f32 %v4387, %v3891
          %v4389 = vadd.f32 %v4388, %v3899
          %v4390 = vadd.f32 %v4389, %v3907
          %v4391 = vadd.f32 %v4390, %v3915
          %v4392 = vadd.f32 %v4391, %v3923
          %v4393 = vadd.f32 %v4392, %v3931
          %v4394 = vadd.f32 %v4393, %v3939
          %v4395 = vadd.f32 %v4394, %v3947
          %v4396 = vadd.f32 %v4395, %v3955
          %v4397 = vadd.f32 %v4396, %v3963
          %v4398 = vadd.f32 %v4397, %v3971
          %v4399 = vadd.f32 %v4398, %v3979
          %v4400 = vadd.f32 %v4399, %v3987
          %v4401 = vadd.f32 %v4400, %v3995
          %v4402 = vadd.f32 %v4401, %v4003
          %v4403 = vadd.f32 %v4402, %v4011
          %v4404 = vadd.f32 %v4403, %v4019
          %v4405 = vadd.f32 %v4404, %v4027
          %v4406 = vadd.f32 %v4405, %v4035
          %v4407 = vadd.f32 %v4406, %v4043
          %v4408 = vadd.f32 %v4407, %v4051
          %v4409 = vadd.f32 %v4408, %v4059
          %v4410 = vadd.f32 %v4409, %v4067
          %v4411 = vadd.f32 %v4410, %v4075
          %v4412 = vadd.f32 %v4411, %v4083
          %v4413 = vadd.f32 %v4412, %v4091
          %v4414 = vadd.f32 %v4413, %v4099
          %v4415 = vadd.f32 %v4414, %v4107
          %v4416 = vadd.f32 %v4415, %v4115
          %v4417 = vadd.f32 %v4416, %v4123
          %v4418 = vadd.f32 %v4417, %v4131
          %v4419 = vadd.f32 %v4418, %v4139
          %v4420 = vadd.f32 %v4419, %v4147
          %v4421 = vadd.f32 %v4420, %v4155
          %v4422 = vadd.f32 %v4421, %v4163
          %v4423 = vadd.f32 %v4422, %v4171
          %v4424 = vadd.f32 %v4423, %v4179
          %v4425 = vadd.f32 %v4424, %v4187
          %v4426 = vadd.f32 %v4425, %v4195
          %v4427 = vadd.f32 %v4426, %v4203
          %v4428 = vadd.f32 %v4427, %v4211
          %v4429 = vadd.f32 %v4428, %v4219
          %v4430 = vadd.f32 %v4429, %v4227
          %v4431 = vadd.f32 %v4430, %v4235
          %v4432 = vadd.f32 %v4431, %v4243
          %v4433 = vadd.f32 %v4432, %v4251
          %v4434 = vadd.f32 %v4433, %v4259
          %v4435 = vadd.f32 %v4434, %v4267
          %v4436 = vadd.f32 %v4435, %v4275
          %v4437 = vadd.f32 %v4436, %v4283
          %v4438 = vadd.f32 %v4437, %v4291
          %v4439 = vadd.f32 %v4438, %v4299
          %v4440 = vadd.f32 %v3796, %v3804
          %v4441 = vadd.f32 %v4440, %v3812
          %v4442 = vadd.f32 %v4441, %v3820
          %v4443 = vadd.f32 %v4442, %v3828
          %v4444 = vadd.f32 %v4443, %v3836
          %v4445 = vadd.f32 %v4444, %v3844
          %v4446 = vadd.f32 %v4445, %v3852
          %v4447 = vadd.f32 %v4446, %v3860
          %v4448 = vadd.f32 %v4447, %v3868
          %v4449 = vadd.f32 %v4448, %v3876
          %v4450 = vadd.f32 %v4449, %v3884
          %v4451 = vadd.f32 %v4450, %v3892
          %v4452 = vadd.f32 %v4451, %v3900
          %v4453 = vadd.f32 %v4452, %v3908
          %v4454 = vadd.f32 %v4453, %v3916
          %v4455 = vadd.f32 %v4454, %v3924
          %v4456 = vadd.f32 %v4455, %v3932
          %v4457 = vadd.f32 %v4456, %v3940
          %v4458 = vadd.f32 %v4457, %v3948
          %v4459 = vadd.f32 %v4458, %v3956
          %v4460 = vadd.f32 %v4459, %v3964
          %v4461 = vadd.f32 %v4460, %v3972
          %v4462 = vadd.f32 %v4461, %v3980
          %v4463 = vadd.f32 %v4462, %v3988
          %v4464 = vadd.f32 %v4463, %v3996
          %v4465 = vadd.f32 %v4464, %v4004
          %v4466 = vadd.f32 %v4465, %v4012
          %v4467 = vadd.f32 %v4466, %v4020
          %v4468 = vadd.f32 %v4467, %v4028
          %v4469 = vadd.f32 %v4468, %v4036
          %v4470 = vadd.f32 %v4469, %v4044
          %v4471 = vadd.f32 %v4470, %v4052
          %v4472 = vadd.f32 %v4471, %v4060
          %v4473 = vadd.f32 %v4472, %v4068
          %v4474 = vadd.f32 %v4473, %v4076
          %v4475 = vadd.f32 %v4474, %v4084
          %v4476 = vadd.f32 %v4475, %v4092
          %v4477 = vadd.f32 %v4476, %v4100
          %v4478 = vadd.f32 %v4477, %v4108
          %v4479 = vadd.f32 %v4478, %v4116
          %v4480 = vadd.f32 %v4479, %v4124
          %v4481 = vadd.f32 %v4480, %v4132
          %v4482 = vadd.f32 %v4481, %v4140
          %v4483 = vadd.f32 %v4482, %v4148
          %v4484 = vadd.f32 %v4483, %v4156
          %v4485 = vadd.f32 %v4484, %v4164
          %v4486 = vadd.f32 %v4485, %v4172
          %v4487 = vadd.f32 %v4486, %v4180
          %v4488 = vadd.f32 %v4487, %v4188
          %v4489 = vadd.f32 %v4488, %v4196
          %v4490 = vadd.f32 %v4489, %v4204
          %v4491 = vadd.f32 %v4490, %v4212
          %v4492 = vadd.f32 %v4491, %v4220
          %v4493 = vadd.f32 %v4492, %v4228
          %v4494 = vadd.f32 %v4493, %v4236
          %v4495 = vadd.f32 %v4494, %v4244
          %v4496 = vadd.f32 %v4495, %v4252
          %v4497 = vadd.f32 %v4496, %v4260
          %v4498 = vadd.f32 %v4497, %v4268
          %v4499 = vadd.f32 %v4498, %v4276
          %v4500 = vadd.f32 %v4499, %v4284
          %v4501 = vadd.f32 %v4500, %v4292
          %v4502 = vadd.f32 %v4501, %v4300
          %v4503 = vadd.f32 %v3797, %v3805
          %v4504 = vadd.f32 %v4503, %v3813
          %v4505 = vadd.f32 %v4504, %v3821
          %v4506 = vadd.f32 %v4505, %v3829
          %v4507 = vadd.f32 %v4506, %v3837
          %v4508 = vadd.f32 %v4507, %v3845
          %v4509 = vadd.f32 %v4508, %v3853
          %v4510 = vadd.f32 %v4509, %v3861
          %v4511 = vadd.f32 %v4510, %v3869
          %v4512 = vadd.f32 %v4511, %v3877
          %v4513 = vadd.f32 %v4512, %v3885
          %v4514 = vadd.f32 %v4513, %v3893
          %v4515 = vadd.f32 %v4514, %v3901
          %v4516 = vadd.f32 %v4515, %v3909
          %v4517 = vadd.f32 %v4516, %v3917
          %v4518 = vadd.f32 %v4517, %v3925
          %v4519 = vadd.f32 %v4518, %v3933
          %v4520 = vadd.f32 %v4519, %v3941
          %v4521 = vadd.f32 %v4520, %v3949
          %v4522 = vadd.f32 %v4521, %v3957
          %v4523 = vadd.f32 %v4522, %v3965
          %v4524 = vadd.f32 %v4523, %v3973
          %v4525 = vadd.f32 %v4524, %v3981
          %v4526 = vadd.f32 %v4525, %v3989
          %v4527 = vadd.f32 %v4526, %v3997
          %v4528 = vadd.f32 %v4527, %v4005
          %v4529 = vadd.f32 %v4528, %v4013
          %v4530 = vadd.f32 %v4529, %v4021
          %v4531 = vadd.f32 %v4530, %v4029
          %v4532 = vadd.f32 %v4531, %v4037
          %v4533 = vadd.f32 %v4532, %v4045
          %v4534 = vadd.f32 %v4533, %v4053
          %v4535 = vadd.f32 %v4534, %v4061
          %v4536 = vadd.f32 %v4535, %v4069
          %v4537 = vadd.f32 %v4536, %v4077
          %v4538 = vadd.f32 %v4537, %v4085
          %v4539 = vadd.f32 %v4538, %v4093
          %v4540 = vadd.f32 %v4539, %v4101
          %v4541 = vadd.f32 %v4540, %v4109
          %v4542 = vadd.f32 %v4541, %v4117
          %v4543 = vadd.f32 %v4542, %v4125
          %v4544 = vadd.f32 %v4543, %v4133
          %v4545 = vadd.f32 %v4544, %v4141
          %v4546 = vadd.f32 %v4545, %v4149
          %v4547 = vadd.f32 %v4546, %v4157
          %v4548 = vadd.f32 %v4547, %v4165
          %v4549 = vadd.f32 %v4548, %v4173
          %v4550 = vadd.f32 %v4549, %v4181
          %v4551 = vadd.f32 %v4550, %v4189
          %v4552 = vadd.f32 %v4551, %v4197
          %v4553 = vadd.f32 %v4552, %v4205
          %v4554 = vadd.f32 %v4553, %v4213
          %v4555 = vadd.f32 %v4554, %v4221
          %v4556 = vadd.f32 %v4555, %v4229
          %v4557 = vadd.f32 %v4556, %v4237
          %v4558 = vadd.f32 %v4557, %v4245
          %v4559 = vadd.f32 %v4558, %v4253
          %v4560 = vadd.f32 %v4559, %v4261
          %v4561 = vadd.f32 %v4560, %v4269
          %v4562 = vadd.f32 %v4561, %v4277
          %v4563 = vadd.f32 %v4562, %v4285
          %v4564 = vadd.f32 %v4563, %v4293
          %v4565 = vadd.f32 %v4564, %v4301
          %v4566 = vadd.f32 %v3798, %v3806
          %v4567 = vadd.f32 %v4566, %v3814
          %v4568 = vadd.f32 %v4567, %v3822
          %v4569 = vadd.f32 %v4568, %v3830
          %v4570 = vadd.f32 %v4569, %v3838
          %v4571 = vadd.f32 %v4570, %v3846
          %v4572 = vadd.f32 %v4571, %v3854
          %v4573 = vadd.f32 %v4572, %v3862
          %v4574 = vadd.f32 %v4573, %v3870
          %v4575 = vadd.f32 %v4574, %v3878
          %v4576 = vadd.f32 %v4575, %v3886
          %v4577 = vadd.f32 %v4576, %v3894
          %v4578 = vadd.f32 %v4577, %v3902
          %v4579 = vadd.f32 %v4578, %v3910
          %v4580 = vadd.f32 %v4579, %v3918
          %v4581 = vadd.f32 %v4580, %v3926
          %v4582 = vadd.f32 %v4581, %v3934
          %v4583 = vadd.f32 %v4582, %v3942
          %v4584 = vadd.f32 %v4583, %v3950
          %v4585 = vadd.f32 %v4584, %v3958
          %v4586 = vadd.f32 %v4585, %v3966
          %v4587 = vadd.f32 %v4586, %v3974
          %v4588 = vadd.f32 %v4587, %v3982
          %v4589 = vadd.f32 %v4588, %v3990
          %v4590 = vadd.f32 %v4589, %v3998
          %v4591 = vadd.f32 %v4590, %v4006
          %v4592 = vadd.f32 %v4591, %v4014
          %v4593 = vadd.f32 %v4592, %v4022
          %v4594 = vadd.f32 %v4593, %v4030
          %v4595 = vadd.f32 %v4594, %v4038
          %v4596 = vadd.f32 %v4595, %v4046
          %v4597 = vadd.f32 %v4596, %v4054
          %v4598 = vadd.f32 %v4597, %v4062
          %v4599 = vadd.f32 %v4598, %v4070
          %v4600 = vadd.f32 %v4599, %v4078
          %v4601 = vadd.f32 %v4600, %v4086
          %v4602 = vadd.f32 %v4601, %v4094
          %v4603 = vadd.f32 %v4602, %v4102
          %v4604 = vadd.f32 %v4603, %v4110
          %v4605 = vadd.f32 %v4604, %v4118
          %v4606 = vadd.f32 %v4605, %v4126
          %v4607 = vadd.f32 %v4606, %v4134
          %v4608 = vadd.f32 %v4607, %v4142
          %v4609 = vadd.f32 %v4608, %v4150
          %v4610 = vadd.f32 %v4609, %v4158
          %v4611 = vadd.f32 %v4610, %v4166
          %v4612 = vadd.f32 %v4611, %v4174
          %v4613 = vadd.f32 %v4612, %v4182
          %v4614 = vadd.f32 %v4613, %v4190
          %v4615 = vadd.f32 %v4614, %v4198
          %v4616 = vadd.f32 %v4615, %v4206
          %v4617 = vadd.f32 %v4616, %v4214
          %v4618 = vadd.f32 %v4617, %v4222
          %v4619 = vadd.f32 %v4618, %v4230
          %v4620 = vadd.f32 %v4619, %v4238
          %v4621 = vadd.f32 %v4620, %v4246
          %v4622 = vadd.f32 %v4621, %v4254
          %v4623 = vadd.f32 %v4622, %v4262
          %v4624 = vadd.f32 %v4623, %v4270
          %v4625 = vadd.f32 %v4624, %v4278
          %v4626 = vadd.f32 %v4625, %v4286
          %v4627 = vadd.f32 %v4626, %v4294
          %v4628 = vadd.f32 %v4627, %v4302
          %v4629 = vadd.f32 %v3799, %v3807
          %v4630 = vadd.f32 %v4629, %v3815
          %v4631 = vadd.f32 %v4630, %v3823
          %v4632 = vadd.f32 %v4631, %v3831
          %v4633 = vadd.f32 %v4632, %v3839
          %v4634 = vadd.f32 %v4633, %v3847
          %v4635 = vadd.f32 %v4634, %v3855
          %v4636 = vadd.f32 %v4635, %v3863
          %v4637 = vadd.f32 %v4636, %v3871
          %v4638 = vadd.f32 %v4637, %v3879
          %v4639 = vadd.f32 %v4638, %v3887
          %v4640 = vadd.f32 %v4639, %v3895
          %v4641 = vadd.f32 %v4640, %v3903
          %v4642 = vadd.f32 %v4641, %v3911
          %v4643 = vadd.f32 %v4642, %v3919
          %v4644 = vadd.f32 %v4643, %v3927
          %v4645 = vadd.f32 %v4644, %v3935
          %v4646 = vadd.f32 %v4645, %v3943
          %v4647 = vadd.f32 %v4646, %v3951
          %v4648 = vadd.f32 %v4647, %v3959
          %v4649 = vadd.f32 %v4648, %v3967
          %v4650 = vadd.f32 %v4649, %v3975
          %v4651 = vadd.f32 %v4650, %v3983
          %v4652 = vadd.f32 %v4651, %v3991
          %v4653 = vadd.f32 %v4652, %v3999
          %v4654 = vadd.f32 %v4653, %v4007
          %v4655 = vadd.f32 %v4654, %v4015
          %v4656 = vadd.f32 %v4655, %v4023
          %v4657 = vadd.f32 %v4656, %v4031
          %v4658 = vadd.f32 %v4657, %v4039
          %v4659 = vadd.f32 %v4658, %v4047
          %v4660 = vadd.f32 %v4659, %v4055
          %v4661 = vadd.f32 %v4660, %v4063
          %v4662 = vadd.f32 %v4661, %v4071
          %v4663 = vadd.f32 %v4662, %v4079
          %v4664 = vadd.f32 %v4663, %v4087
          %v4665 = vadd.f32 %v4664, %v4095
          %v4666 = vadd.f32 %v4665, %v4103
          %v4667 = vadd.f32 %v4666, %v4111
          %v4668 = vadd.f32 %v4667, %v4119
          %v4669 = vadd.f32 %v4668, %v4127
          %v4670 = vadd.f32 %v4669, %v4135
          %v4671 = vadd.f32 %v4670, %v4143
          %v4672 = vadd.f32 %v4671, %v4151
          %v4673 = vadd.f32 %v4672, %v4159
          %v4674 = vadd.f32 %v4673, %v4167
          %v4675 = vadd.f32 %v4674, %v4175
          %v4676 = vadd.f32 %v4675, %v4183
          %v4677 = vadd.f32 %v4676, %v4191
          %v4678 = vadd.f32 %v4677, %v4199
          %v4679 = vadd.f32 %v4678, %v4207
          %v4680 = vadd.f32 %v4679, %v4215
          %v4681 = vadd.f32 %v4680, %v4223
          %v4682 = vadd.f32 %v4681, %v4231
          %v4683 = vadd.f32 %v4682, %v4239
          %v4684 = vadd.f32 %v4683, %v4247
          %v4685 = vadd.f32 %v4684, %v4255
          %v4686 = vadd.f32 %v4685, %v4263
          %v4687 = vadd.f32 %v4686, %v4271
          %v4688 = vadd.f32 %v4687, %v4279
          %v4689 = vadd.f32 %v4688, %v4287
          %v4690 = vadd.f32 %v4689, %v4295
          %v4691 = vadd.f32 %v4690, %v4303
          %v4692 = vadd.f32 %v3800, %v3808
          %v4693 = vadd.f32 %v4692, %v3816
          %v4694 = vadd.f32 %v4693, %v3824
          %v4695 = vadd.f32 %v4694, %v3832
          %v4696 = vadd.f32 %v4695, %v3840
          %v4697 = vadd.f32 %v4696, %v3848
          %v4698 = vadd.f32 %v4697, %v3856
          %v4699 = vadd.f32 %v4698, %v3864
          %v4700 = vadd.f32 %v4699, %v3872
          %v4701 = vadd.f32 %v4700, %v3880
          %v4702 = vadd.f32 %v4701, %v3888
          %v4703 = vadd.f32 %v4702, %v3896
          %v4704 = vadd.f32 %v4703, %v3904
          %v4705 = vadd.f32 %v4704, %v3912
          %v4706 = vadd.f32 %v4705, %v3920
          %v4707 = vadd.f32 %v4706, %v3928
          %v4708 = vadd.f32 %v4707, %v3936
          %v4709 = vadd.f32 %v4708, %v3944
          %v4710 = vadd.f32 %v4709, %v3952
          %v4711 = vadd.f32 %v4710, %v3960
          %v4712 = vadd.f32 %v4711, %v3968
          %v4713 = vadd.f32 %v4712, %v3976
          %v4714 = vadd.f32 %v4713, %v3984
          %v4715 = vadd.f32 %v4714, %v3992
          %v4716 = vadd.f32 %v4715, %v4000
          %v4717 = vadd.f32 %v4716, %v4008
          %v4718 = vadd.f32 %v4717, %v4016
          %v4719 = vadd.f32 %v4718, %v4024
          %v4720 = vadd.f32 %v4719, %v4032
          %v4721 = vadd.f32 %v4720, %v4040
          %v4722 = vadd.f32 %v4721, %v4048
          %v4723 = vadd.f32 %v4722, %v4056
          %v4724 = vadd.f32 %v4723, %v4064
          %v4725 = vadd.f32 %v4724, %v4072
          %v4726 = vadd.f32 %v4725, %v4080
          %v4727 = vadd.f32 %v4726, %v4088
          %v4728 = vadd.f32 %v4727, %v4096
          %v4729 = vadd.f32 %v4728, %v4104
          %v4730 = vadd.f32 %v4729, %v4112
          %v4731 = vadd.f32 %v4730, %v4120
          %v4732 = vadd.f32 %v4731, %v4128
          %v4733 = vadd.f32 %v4732, %v4136
          %v4734 = vadd.f32 %v4733, %v4144
          %v4735 = vadd.f32 %v4734, %v4152
          %v4736 = vadd.f32 %v4735, %v4160
          %v4737 = vadd.f32 %v4736, %v4168
          %v4738 = vadd.f32 %v4737, %v4176
          %v4739 = vadd.f32 %v4738, %v4184
          %v4740 = vadd.f32 %v4739, %v4192
          %v4741 = vadd.f32 %v4740, %v4200
          %v4742 = vadd.f32 %v4741, %v4208
          %v4743 = vadd.f32 %v4742, %v4216
          %v4744 = vadd.f32 %v4743, %v4224
          %v4745 = vadd.f32 %v4744, %v4232
          %v4746 = vadd.f32 %v4745, %v4240
          %v4747 = vadd.f32 %v4746, %v4248
          %v4748 = vadd.f32 %v4747, %v4256
          %v4749 = vadd.f32 %v4748, %v4264
          %v4750 = vadd.f32 %v4749, %v4272
          %v4751 = vadd.f32 %v4750, %v4280
          %v4752 = vadd.f32 %v4751, %v4288
          %v4753 = vadd.f32 %v4752, %v4296
          %v4754 = vadd.f32 %v4753, %v4304
          %v4755 = vadd.f32 %v3801, %v3809
          %v4756 = vadd.f32 %v4755, %v3817
          %v4757 = vadd.f32 %v4756, %v3825
          %v4758 = vadd.f32 %v4757, %v3833
          %v4759 = vadd.f32 %v4758, %v3841
          %v4760 = vadd.f32 %v4759, %v3849
          %v4761 = vadd.f32 %v4760, %v3857
          %v4762 = vadd.f32 %v4761, %v3865
          %v4763 = vadd.f32 %v4762, %v3873
          %v4764 = vadd.f32 %v4763, %v3881
          %v4765 = vadd.f32 %v4764, %v3889
          %v4766 = vadd.f32 %v4765, %v3897
          %v4767 = vadd.f32 %v4766, %v3905
          %v4768 = vadd.f32 %v4767, %v3913
          %v4769 = vadd.f32 %v4768, %v3921
          %v4770 = vadd.f32 %v4769, %v3929
          %v4771 = vadd.f32 %v4770, %v3937
          %v4772 = vadd.f32 %v4771, %v3945
          %v4773 = vadd.f32 %v4772, %v3953
          %v4774 = vadd.f32 %v4773, %v3961
          %v4775 = vadd.f32 %v4774, %v3969
          %v4776 = vadd.f32 %v4775, %v3977
          %v4777 = vadd.f32 %v4776, %v3985
          %v4778 = vadd.f32 %v4777, %v3993
          %v4779 = vadd.f32 %v4778, %v4001
          %v4780 = vadd.f32 %v4779, %v4009
          %v4781 = vadd.f32 %v4780, %v4017
          %v4782 = vadd.f32 %v4781, %v4025
          %v4783 = vadd.f32 %v4782, %v4033
          %v4784 = vadd.f32 %v4783, %v4041
          %v4785 = vadd.f32 %v4784, %v4049
          %v4786 = vadd.f32 %v4785, %v4057
          %v4787 = vadd.f32 %v4786, %v4065
          %v4788 = vadd.f32 %v4787, %v4073
          %v4789 = vadd.f32 %v4788, %v4081
          %v4790 = vadd.f32 %v4789, %v4089
          %v4791 = vadd.f32 %v4790, %v4097
          %v4792 = vadd.f32 %v4791, %v4105
          %v4793 = vadd.f32 %v4792, %v4113
          %v4794 = vadd.f32 %v4793, %v4121
          %v4795 = vadd.f32 %v4794, %v4129
          %v4796 = vadd.f32 %v4795, %v4137
          %v4797 = vadd.f32 %v4796, %v4145
          %v4798 = vadd.f32 %v4797, %v4153
          %v4799 = vadd.f32 %v4798, %v4161
          %v4800 = vadd.f32 %v4799, %v4169
          %v4801 = vadd.f32 %v4800, %v4177
          %v4802 = vadd.f32 %v4801, %v4185
          %v4803 = vadd.f32 %v4802, %v4193
          %v4804 = vadd.f32 %v4803, %v4201
          %v4805 = vadd.f32 %v4804, %v4209
          %v4806 = vadd.f32 %v4805, %v4217
          %v4807 = vadd.f32 %v4806, %v4225
          %v4808 = vadd.f32 %v4807, %v4233
          %v4809 = vadd.f32 %v4808, %v4241
          %v4810 = vadd.f32 %v4809, %v4249
          %v4811 = vadd.f32 %v4810, %v4257
          %v4812 = vadd.f32 %v4811, %v4265
          %v4813 = vadd.f32 %v4812, %v4273
          %v4814 = vadd.f32 %v4813, %v4281
          %v4815 = vadd.f32 %v4814, %v4289
          %v4816 = vadd.f32 %v4815, %v4297
          %v4817 = vadd.f32 %v4816, %v4305
          %v4818 = vadd.f32 %v4306, %v4376
          %v4819 = vadd.f32 %v4307, %v4439
          %v4820 = vadd.f32 %v4308, %v4502
          %v4821 = vadd.f32 %v4309, %v4565
          %v4822 = vadd.f32 %v4310, %v4628
          %v4823 = vadd.f32 %v4311, %v4691
          %v4824 = vadd.f32 %v4312, %v4754
          %v4825 = vadd.f32 %v4313, %v4817
          %4826 = vst [vmem:[%s158] sm:$0xff] %v4818
          %4827 = vst [vmem:[%s158 + $0x8] sm:$0xff] %v4819
          %4828 = vst [vmem:[%s158 + $0x10] sm:$0xff] %v4820
          %4829 = vst [vmem:[%s158 + $0x18] sm:$0xff] %v4821
          %4830 = vst [vmem:[%s158 + $0x20] sm:$0xff] %v4822
          %4831 = vst [vmem:[%s158 + $0x28] sm:$0xff] %v4823
          %4832 = vst [vmem:[%s158 + $0x30] sm:$0xff] %v4824
          %4833 = vst [vmem:[%s158 + $0x38] sm:$0xff] %v4825
        $region40: #{tpu_custom_call.1} parent=23 // pred_fallthru
          _
        %s4834 = sand.u32 %s68, 1
        %s4835 = scalar_lea.sflag [#allocation4], %s4834
        %s4836 = sand.u32 %s68, 1
        %s4837 = smul.addr %s4836, 64
        %s4838 = scalar_lea.vmem [#allocation5], %s4837
        // Predicated region
        $region41: #{tpu_custom_call.1} parent=23 // pred_check
          %p4839 = pneg %p78
        $region42: #{tpu_custom_call.1} parent=23 // pred_check_branch
          %4841 = sbr.rel (%p4839) target = $region44
        $region43: #{tpu_custom_call.1} parent=23 // pred_region
          %s4842 = smul.u32 8, %s22
          %s4844 = ssub.s32 1024, 1024
          %4845 = vsyncadd %s4835, %s4844
          %s4846 = smul.addr %s4842, 128
          %s4847 = scalar_lea.hbm %s1, %s4846
          %s4848 = sshll.u32 %s4838, 4
          %s4849 = int_to_ptr.vmem [resolvable:$true] %s4848
          %4854 = dma.vmem_to_hbm [thread:$0]  %s4849, 1024, %s4847, %s4835, 128, 128, 8
        $region44: #{tpu_custom_call.1} parent=23 // pred_fallthru
          _
      $region24: #{tpu_custom_call.1} parent=5 // pred_fallthru
        _
      %p4855 = scmp.le.s32.totalorder 2, %s13
      // Predicated region
      $region45: #{tpu_custom_call.1} parent=5 // pred_check
        %p4856 = pneg %p4855
      $region46: #{tpu_custom_call.1} parent=5 // pred_check_branch
        %4858 = sbr.rel (%p4856) target = $region48
      $region47: #{tpu_custom_call.1} parent=5 // pred_region
        %s4859 = ssub.s32 %s13, 2
        // Predicated region
        $region49: #{tpu_custom_call.1} parent=47 // pred_check
          %p4860 = pneg %p84
        $region50: #{tpu_custom_call.1} parent=47 // pred_check_branch
          %4862 = sbr.rel (%p4860) target = $region52
        $region51: #{tpu_custom_call.1} parent=47 // pred_region
          %s4863 = sand.u32 %s69, 1
          %s4864 = scalar_lea.sflag [#allocation4], %s4863
          %s4865 = sand.u32 %s69, 1
          %s4866 = smul.addr %s4865, 64
          %s4867 = scalar_lea.vmem [#allocation5], %s4866
          %4868 = dma.done %s4864, 1024
        $region52: #{tpu_custom_call.1} parent=47 // pred_fallthru
          _
      $region48: #{tpu_custom_call.1} parent=5 // pred_fallthru
        _
    $region6: #{tpu_custom_call.1} parent=1 // loop_footer
      %s17 = sadd.s32 1, %s13
    $region7: #{tpu_custom_call.1} parent=1 // loop_footer_branch
      %12 = sbr.rel target = $region3
    $region8: #{tpu_custom_call.1} parent=1 // loop_exit
      _
    %4869 = vsyncpa [#allocation3], 1
    %s4870 = scalar_lea.sflag [#allocation3], 1
    %4871 = vsyncpa %s4870, 1
    %4872 = vsyncpa [#allocation4], 1
    %s4873 = scalar_lea.sflag [#allocation4], 1
    %4874 = vsyncpa %s4873, 1

</llo_original>
